<compile_context>
chip_gen: v7x
topology: tpu7x:2x2x1
jax: 0.10.0
libtpu: 0.0.40
codegen_flags: <defaults>
</compile_context>

<pallas_src>
import functools

import jax
import jax.numpy as jnp
from jax.experimental import pallas as pl
from jax.experimental.pallas import tpu as pltpu


# ----------------------------------------------------------------------------
# Per-generation budgets.
#   block_budget : what the (double-buffered) per-step blocks + f32
#                  intermediates may use.
#   vmem_limit   : passed to Mosaic as the scoped-VMEM limit (None = default).
#   min_steps    : minimum grid steps to aim for (4 on v7x: 2 steps per TC).
#   enc_dtype    : streaming dtype for encoder_out / decoder_hidden / we / wd.
# ----------------------------------------------------------------------------
_CHIP_CFG = {
    "v5e": dict(vmem_limit=96 << 20, block_budget=64 << 20, min_steps=2,
                enc_dtype=jnp.bfloat16),
    "v6e": dict(vmem_limit=100 << 20, block_budget=80 << 20, min_steps=2,
                enc_dtype=jnp.bfloat16),
    "v7x": dict(vmem_limit=48 << 20, block_budget=36 << 20, min_steps=4,
                enc_dtype=jnp.float32),
    "unknown": dict(vmem_limit=None, block_budget=24 << 20, min_steps=2,
                    enc_dtype=jnp.float32),
}


def _tpu_generation():
    try:
        kind = jax.devices()[0].device_kind.lower()
    except Exception:
        return "unknown"
    if "v5 lite" in kind or "v5e" in kind or "v5lite" in kind:
        return "v5e"
    if "v6" in kind:
        return "v6e"
    if "v7" in kind or "tpu7" in kind:
        return "v7x"
    return "unknown"


def _round_up(x, m):
    return ((x + m - 1) // m) * m


def _choose_block_batch(B, P, E, D, A, enc_bytes, cfg):
    """Largest batch tile TB that (a) fits the per-generation VMEM budget and
    (b) leaves >= cfg['min_steps'] grid steps whenever the batch is big enough
    for that to matter (tiny batches just run in one step)."""
    # Per-TB bytes: double-buffered enc/dec/ctx/alpha blocks plus the f32
    # enc_att / h / att intermediates the compiler materializes.
    per_tb = (2 * P * E * enc_bytes
              + 2 * (D + E + P) * 4
              + 3 * P * A * 4)
    fixed = 2 * 4 * (E * A + D * A + 2 * A)          # weights+biases (2x buffered)
    tb = max(1, (cfg["block_budget"] - fixed) // per_tb)
    tb = min(tb, B)
    # Keep >= min_steps grid steps unless that would drop the enc_att matmul
    # below ~256 MXU rows (TB * P).
    steps_tb = -(-B // cfg["min_steps"])             # ceil(B / min_steps)
    if steps_tb * P >= 256:
        tb = min(tb, steps_tb)
    if tb >= 8:
        tb = (tb // 8) * 8                           # keep (TB, P) sublane-dense
    return max(1, tb)


# ----------------------------------------------------------------------------
# Kernel
# ----------------------------------------------------------------------------
def attention_kernel(enc_ref, dec_ref, we_ref, wd_ref, bsum_ref, wf_ref, bf_ref,
                     ctx_ref, alpha_ref, *, p_valid, high_precision):
    # enc_ref  : (TB, P, E)  f32/bf16     dec_ref : (1, TB, D) f32/bf16
    # we_ref   : (E, A)      f32/bf16     wd_ref  : (D, A)     f32/bf16
    # bsum_ref : (1, A) f32  (= b_enc + b_dec, folded in the wrapper)
    # wf_ref   : (1, A) f32               bf_ref  : (1, 1) f32  [SMEM scalar]
    # ctx_ref  : (1, TB, E) f32           alpha_ref : (1, TB, P) f32
    TB, P, E = enc_ref.shape
    A = we_ref.shape[1]
    prec = (jax.lax.Precision.HIGHEST if high_precision
            else jax.lax.Precision.DEFAULT)

    enc = enc_ref[...]                                          # (TB, P, E)
    dec = dec_ref[0]                                            # (TB, D)

    # enc_att: one big (TB*P, E) @ (E, A) MXU matmul.  P is padded to the
    # sublane tile in the wrapper, so this reshape is a free layout merge.
    enc_att = jnp.dot(enc.reshape(TB * P, E), we_ref[...],
                      preferred_element_type=jnp.float32,
                      precision=prec)                           # (TB*P, A) f32

    # dec_att + folded (b_enc + b_dec) bias: add the bias on the small tensor.
    dec_att = jnp.dot(dec, wd_ref[...],
                      preferred_element_type=jnp.float32,
                      precision=prec) + bsum_ref[...]           # (TB, A) f32

    # relu(enc_att + dec_att.unsqueeze(1))
    h = jnp.maximum(enc_att.reshape(TB, P, A) + dec_att[:, None, :], 0.0)

    # full_att (A -> 1).
    if A >= 256:
        # Large A: MXU matvec, then one cheap relayout of TB*P scalars into
        # the lane-dense (TB, P) layout (avoids saturating the 2 XLU units).
        att = jnp.dot(h.reshape(TB * P, A), wf_ref[...].reshape(A, 1),
                      preferred_element_type=jnp.float32,
                      precision=prec).reshape(TB, P)
    else:
        # Small A: VPU multiply + lane reduce, lands directly lane-dense.
        att = jnp.sum(h * wf_ref[...], axis=-1)                 # (TB, P)
    att = att + bf_ref[0, 0]

    # Mask padded pixels (static pad amount) so they get zero softmax weight.
    if p_valid != P:
        pix = jax.lax.broadcasted_iota(jnp.int32, (TB, P), 1)
        att = jnp.where(pix < p_valid, att, -jnp.inf)

    # softmax over the pixel (lane) axis.
    m = jnp.max(att, axis=-1, keepdims=True)                    # (TB, 1)
    e = jnp.exp(att - m)                                        # (TB, P)
    s = jnp.sum(e, axis=-1, keepdims=True)                      # (TB, 1)
    alpha = e * pl.reciprocal(s, approx=not high_precision)     # (TB, P)

    # context = sum_p alpha[b, p] * enc[b, p, :]  -> batched MXU matmul.
    ctx = jnp.einsum("bqp,bpe->bqe",
                     alpha[:, None, :].astype(enc.dtype), enc,
                     preferred_element_type=jnp.float32,
                     precision=prec)[:, 0]                      # (TB, E) f32

    ctx_ref[0] = ctx
    alpha_ref[0] = alpha


# ----------------------------------------------------------------------------
# Wrapper
# ----------------------------------------------------------------------------
def attention_forward(encoder_out, decoder_hidden, params, *,
                      block_batch=None, enc_dtype=None):
    """encoder_out: [B, P, E] f32, decoder_hidden: [B, D] f32.
    Returns (context [B, E] f32, alpha [B, P] f32)."""
    B, P, E = encoder_out.shape
    D = decoder_hidden.shape[1]
    we, wd, wf, bf = params["we"], params["wd"], params["wf"], params["bf"]
    bsum = (params["be"] + params["bd"]).astype(jnp.float32)    # fold the biases
    A = we.shape[1]

    cfg = _CHIP_CFG.get(_tpu_generation(), _CHIP_CFG["unknown"])
    if enc_dtype is None:
        enc_dtype = cfg["enc_dtype"]
    enc_dtype = jnp.dtype(enc_dtype)
    enc_bytes = enc_dtype.itemsize
    high_precision = enc_dtype == jnp.dtype(jnp.float32)

    # Pad the pixel axis to the sublane tile (8 for f32, 16 for bf16) so the
    # (TB,P,E)->(TB*P,E) merge inside the kernel is free; padded pixels are
    # masked to -inf before the softmax.
    P_pad = _round_up(P, 16 if enc_bytes == 2 else 8)

    TB = block_batch or _choose_block_batch(B, P_pad, E, D, A, enc_bytes, cfg)
    G = -(-B // TB)                                  # ceil
    B_pad = G * TB

    enc = encoder_out.astype(enc_dtype)
    dec = decoder_hidden.astype(enc_dtype)
    if B_pad != B or P_pad != P:
        enc = jnp.pad(enc, ((0, B_pad - B), (0, P_pad - P), (0, 0)))
    if B_pad != B:
        dec = jnp.pad(dec, ((0, B_pad - B), (0, 0)))
    # Group the batch for the narrow tensors so every BlockSpec's trailing two
    # dims equal the full array dims (valid for any TB).
    dec3 = dec.reshape(G, TB, D)

    we_c = we.astype(enc_dtype)
    wd_c = wd.astype(enc_dtype)

    kernel = functools.partial(attention_kernel, p_valid=P,
                               high_precision=high_precision)

    ctx3, alpha3 = pl.pallas_call(
        kernel,
        out_shape=(jax.ShapeDtypeStruct((G, TB, E), jnp.float32),
                   jax.ShapeDtypeStruct((G, TB, P_pad), jnp.float32)),
        grid=(G,),
        in_specs=[
            pl.BlockSpec((TB, P_pad, E), lambda b: (b, 0, 0)),   # encoder_out
            pl.BlockSpec((1, TB, D), lambda b: (b, 0, 0)),       # decoder_hidden
            pl.BlockSpec((E, A), lambda b: (0, 0)),              # W_enc (in,out)
            pl.BlockSpec((D, A), lambda b: (0, 0)),              # W_dec (in,out)
            pl.BlockSpec((1, A), lambda b: (0, 0)),              # b_enc + b_dec
            pl.BlockSpec((1, A), lambda b: (0, 0)),              # w_full (row)
            pl.BlockSpec(memory_space=pltpu.MemorySpace.SMEM),   # b_full scalar
        ],
        out_specs=(pl.BlockSpec((1, TB, E), lambda b: (b, 0, 0)),
                   pl.BlockSpec((1, TB, P_pad), lambda b: (b, 0, 0))),
        compiler_params=pltpu.CompilerParams(
            dimension_semantics=("parallel",),
            vmem_limit_bytes=cfg["vmem_limit"]),
    )(enc, dec3, we_c, wd_c, bsum, wf, bf)

    ctx = ctx3.reshape(B_pad, E)[:B]
    alpha = alpha3.reshape(B_pad, P_pad)[:B, :P]
    return ctx, alpha


# ----------------------------------------------------------------------------
# Params / reference
# ----------------------------------------------------------------------------
def init_params(key, encoder_dim, decoder_dim, attention_dim):
    """Deterministic init mimicking nn.Linear's U(-1/sqrt(fan_in), 1/sqrt(fan_in))."""
    ks = jax.random.split(key, 6)

    def lin(kw, kb, fan_in, fan_out):
        bound = 1.0 / jnp.sqrt(fan_in)
        w = jax.random.uniform(kw, (fan_in, fan_out), jnp.float32, -bound, bound)
        b = jax.random.uniform(kb, (1, fan_out), jnp.float32, -bound, bound)
        return w, b

    we, be = lin(ks[0], ks[1], encoder_dim, attention_dim)
    wd, bd = lin(ks[2], ks[3], decoder_dim, attention_dim)
    wf_col, bf = lin(ks[4], ks[5], attention_dim, 1)
    wf = wf_col.reshape(1, attention_dim)   # store full_att weight as a (1, A) row
    return {"we": we, "be": be, "wd": wd, "bd": bd, "wf": wf, "bf": bf}


def attention_ref(encoder_out, decoder_hidden, p):
    """Pure-JAX reference matching the PyTorch forward (true-f32 matmuls)."""
    prec = jax.lax.Precision.HIGHEST
    enc_att = jnp.einsum("bpe,ea->bpa", encoder_out, p["we"],
                         precision=prec) + p["be"][0]            # [B, P, A]
    dec_att = jnp.einsum("bd,da->ba", decoder_hidden, p["wd"],
                         precision=prec) + p["bd"][0]            # [B, A]
    h = jnp.maximum(enc_att + dec_att[:, None, :], 0.0)          # [B, P, A]
    att = jnp.einsum("bpa,a->bp", h, p["wf"][0],
                     precision=prec) + p["bf"][0, 0]             # [B, P]
    alpha = jax.nn.softmax(att, axis=1)                          # [B, P]
    ctx = jnp.einsum("bp,bpe->be", alpha, encoder_out, precision=prec)
    return ctx, alpha


# ----------------------------------------------------------------------------
# Self-test
# ----------------------------------------------------------------------------
if __name__ == "__main__":
    B, P = 4, 14            # batch, num_pixels (P deliberately not a mult. of 8)
    E, D, A = 32, 32, 32    # encoder_dim, decoder_dim, attention_dim

    key = jax.random.PRNGKey(0)
    k_enc, k_dec, k_par = jax.random.split(key, 3)

    encoder_out = jax.random.normal(k_enc, (B, P, E), jnp.float32)
    decoder_hidden = jax.random.normal(k_dec, (B, D), jnp.float32)
    params = init_params(k_par, E, D, A)

    ctx_r, alpha_r = attention_ref(encoder_out, decoder_hidden, params)

    # 1) true-f32 path (Precision.HIGHEST matmuls) -- tight tolerance.
    ctx, alpha = attention_forward(encoder_out, decoder_hidden, params,
                                   enc_dtype=jnp.float32)
    jax.block_until_ready((ctx, alpha))
    assert ctx.shape == (B, E) and alpha.shape == (B, P)
    assert jnp.allclose(jnp.sum(alpha, axis=1), 1.0, atol=1e-5)
    assert jnp.allclose(ctx, ctx_r, rtol=3e-5, atol=3e-5)
    assert jnp.allclose(alpha, alpha_r, rtol=3e-5, atol=3e-5)

    # 2) exercise batch padding (block_batch that does not divide B).
    ctx_p, alpha_p = attention_forward(encoder_out, decoder_hidden, params,
                                       block_batch=3, enc_dtype=jnp.float32)
    jax.block_until_ready((ctx_p, alpha_p))
    assert jnp.allclose(ctx_p, ctx_r, rtol=3e-5, atol=3e-5)
    assert jnp.allclose(alpha_p, alpha_r, rtol=3e-5, atol=3e-5)

    # 3) chip-default path (bf16 streaming on v5e/v6e) -- bf16-level tolerance.
    ctx_d, alpha_d = attention_forward(encoder_out, decoder_hidden, params)
    jax.block_until_ready((ctx_d, alpha_d))
    assert jnp.allclose(ctx_d, ctx_r, rtol=3e-2, atol=3e-2)
    assert jnp.allclose(alpha_d, alpha_r, rtol=3e-2, atol=3e-2)

    print("KERNEL_OK")
</pallas_src>

<mosaic_0001>
module attributes {stable_mosaic.version = 11 : i64} {
  func.func @attention_kernel(%arg0: i32, %arg1: memref<4x16x32xf32, #tpu.memory_space<vmem>>, %arg2: memref<1x4x32xf32, #tpu.memory_space<vmem>>, %arg3: memref<32x32xf32, #tpu.memory_space<vmem>>, %arg4: memref<32x32xf32, #tpu.memory_space<vmem>>, %arg5: memref<1x32xf32, #tpu.memory_space<vmem>>, %arg6: memref<1x32xf32, #tpu.memory_space<vmem>>, %arg7: memref<1x1xf32, #tpu.memory_space<smem>>, %arg8: memref<1x4x32xf32, #tpu.memory_space<vmem>>, %arg9: memref<1x4x16xf32, #tpu.memory_space<vmem>>) attributes {dimension_semantics = [#tpu.dimension_semantics<parallel>], iteration_bounds = array<i64: 1>, scalar_prefetch = 0 : i64, scratch_operands = 0 : i64, tpu.core_type = #tpu.core_type<tc>, window_params = [{transform_indices = @transform_0, window_bounds = array<i64: 4, 16, 32>}, {transform_indices = @transform_1, window_bounds = array<i64: 1, 4, 32>}, {pipeline_mode = #tpu.pipeline_mode<synchronous>, transform_indices = @transform_2, window_bounds = array<i64: 32, 32>}, {pipeline_mode = #tpu.pipeline_mode<synchronous>, transform_indices = @transform_3, window_bounds = array<i64: 32, 32>}, {pipeline_mode = #tpu.pipeline_mode<synchronous>, transform_indices = @transform_4, window_bounds = array<i64: 1, 32>}, {pipeline_mode = #tpu.pipeline_mode<synchronous>, transform_indices = @transform_5, window_bounds = array<i64: 1, 32>}, {transform_indices = @transform_6, window_bounds = array<i64: 1, 1>}, {transform_indices = @transform_7, window_bounds = array<i64: 1, 4, 32>}, {transform_indices = @transform_8, window_bounds = array<i64: 1, 4, 16>}]} {
    %c0 = arith.constant 0 : index
    %c0_0 = arith.constant 0 : index
    %c0_1 = arith.constant 0 : index
    %0 = vector.load %arg1[%c0, %c0_0, %c0_1] : memref<4x16x32xf32, #tpu.memory_space<vmem>>, vector<4x16x32xf32>
    %c0_2 = arith.constant 0 : index
    %c0_3 = arith.constant 0 : index
    %c0_4 = arith.constant 0 : index
    %1 = vector.load %arg2[%c0_2, %c0_3, %c0_4] : memref<1x4x32xf32, #tpu.memory_space<vmem>>, vector<1x4x32xf32>
    %2 = vector.shape_cast %1 : vector<1x4x32xf32> to vector<4x32xf32>
    %3 = vector.shape_cast %0 : vector<4x16x32xf32> to vector<64x32xf32>
    %c0_5 = arith.constant 0 : index
    %c0_6 = arith.constant 0 : index
    %4 = vector.load %arg3[%c0_5, %c0_6] : memref<32x32xf32, #tpu.memory_space<vmem>>, vector<32x32xf32>
    %cst = arith.constant dense<0.000000e+00> : vector<64x32xf32>
    %5 = tpu.matmul %3, %4, %cst {dimension_numbers = #tpu.dot_dimension_numbers<[1], [0], [0], [1], [0, 0, 1, 1], [], []>, precision = #tpu.contract_precision<fp32>} : vector<64x32xf32>, vector<32x32xf32>, vector<64x32xf32> -> vector<64x32xf32>
    %c0_7 = arith.constant 0 : index
    %c0_8 = arith.constant 0 : index
    %6 = vector.load %arg4[%c0_7, %c0_8] : memref<32x32xf32, #tpu.memory_space<vmem>>, vector<32x32xf32>
    %cst_9 = arith.constant dense<0.000000e+00> : vector<4x32xf32>
    %7 = tpu.matmul %2, %6, %cst_9 {dimension_numbers = #tpu.dot_dimension_numbers<[1], [0], [0], [1], [0, 0, 1, 1], [], []>, precision = #tpu.contract_precision<fp32>} : vector<4x32xf32>, vector<32x32xf32>, vector<4x32xf32> -> vector<4x32xf32>
    %c0_10 = arith.constant 0 : index
    %c0_11 = arith.constant 0 : index
    %8 = vector.load %arg5[%c0_10, %c0_11] : memref<1x32xf32, #tpu.memory_space<vmem>>, vector<1x32xf32>
    %9 = vector.broadcast %8 : vector<1x32xf32> to vector<4x32xf32>
    %10 = arith.addf %7, %9 : vector<4x32xf32>
    %11 = vector.shape_cast %5 : vector<64x32xf32> to vector<4x16x32xf32>
    %12 = vector.shape_cast %10 : vector<4x32xf32> to vector<4x1x32xf32>
    %13 = vector.broadcast %12 : vector<4x1x32xf32> to vector<4x16x32xf32>
    %14 = arith.addf %11, %13 : vector<4x16x32xf32>
    %cst_12 = arith.constant 0.000000e+00 : f32
    %15 = vector.broadcast %cst_12 : f32 to vector<4x16x32xf32>
    %16 = arith.maximumf %14, %15 : vector<4x16x32xf32>
    %c0_13 = arith.constant 0 : index
    %c0_14 = arith.constant 0 : index
    %17 = vector.load %arg6[%c0_13, %c0_14] : memref<1x32xf32, #tpu.memory_space<vmem>>, vector<1x32xf32>
    %18 = vector.shape_cast %17 : vector<1x32xf32> to vector<1x1x32xf32>
    %19 = vector.broadcast %18 : vector<1x1x32xf32> to vector<4x16x32xf32>
    %20 = arith.mulf %16, %19 : vector<4x16x32xf32>
    %cst_15 = arith.constant dense<0.000000e+00> : vector<4x16xf32>
    %21 = vector.multi_reduction <add>, %20, %cst_15 [2] : vector<4x16x32xf32> to vector<4x16xf32>
    %c0_16 = arith.constant 0 : index
    %c0_17 = arith.constant 0 : index
    %22 = memref.load %arg7[%c0_16, %c0_17] : memref<1x1xf32, #tpu.memory_space<smem>>
    %23 = vector.broadcast %22 : f32 to vector<4x16xf32>
    %24 = arith.addf %21, %23 : vector<4x16xf32>
    %25 = tpu.iota {dimensions = array<i32: 1>} : vector<4x16xi32>
    %c14_i32 = arith.constant 14 : i32
    %26 = vector.broadcast %c14_i32 : i32 to vector<4x16xi32>
    %27 = arith.cmpi slt, %25, %26 : vector<4x16xi32>
    %cst_18 = arith.constant 0xFF800000 : f32
    %28 = vector.broadcast %cst_18 : f32 to vector<4x16xf32>
    %29 = arith.select %27, %24, %28 : vector<4x16xi1>, vector<4x16xf32>
    %cst_19 = arith.constant dense<0xFF800000> : vector<4xf32>
    %30 = vector.multi_reduction <maximumf>, %29, %cst_19 [1] : vector<4x16xf32> to vector<4xf32>
    %31 = vector.shape_cast %30 : vector<4xf32> to vector<4x1xf32>
    %32 = vector.broadcast %31 : vector<4x1xf32> to vector<4x16xf32>
    %33 = arith.subf %29, %32 : vector<4x16xf32>
    %34 = math.exp %33 : vector<4x16xf32>
    %cst_20 = arith.constant dense<0.000000e+00> : vector<4xf32>
    %35 = vector.multi_reduction <add>, %34, %cst_20 [1] : vector<4x16xf32> to vector<4xf32>
    %36 = vector.shape_cast %35 : vector<4xf32> to vector<4x1xf32>
    %37 = tpu.reciprocal %36 : vector<4x1xf32> -> vector<4x1xf32>
    %38 = vector.broadcast %37 : vector<4x1xf32> to vector<4x16xf32>
    %39 = arith.mulf %34, %38 : vector<4x16xf32>
    %40 = vector.shape_cast %39 : vector<4x16xf32> to vector<4x1x16xf32>
    "tpu.trace_start"() <{level = 10 : i32, message = "bqp,bpe->bqe"}> : () -> ()
    %cst_21 = arith.constant dense<0.000000e+00> : vector<4x1x32xf32>
    %41 = tpu.matmul %40, %0, %cst_21 {dimension_numbers = #tpu.dot_dimension_numbers<[2], [1], [1], [2], [0, 0, 0, 1, 1, 2], [0], [0]>, precision = #tpu.contract_precision<fp32>} : vector<4x1x16xf32>, vector<4x16x32xf32>, vector<4x1x32xf32> -> vector<4x1x32xf32>
    "tpu.trace_stop"() : () -> ()
    %42 = vector.shape_cast %41 : vector<4x1x32xf32> to vector<4x32xf32>
    %c0_22 = arith.constant 0 : index
    %c0_23 = arith.constant 0 : index
    %c0_24 = arith.constant 0 : index
    %43 = vector.load %arg8[%c0_22, %c0_23, %c0_24] : memref<1x4x32xf32, #tpu.memory_space<vmem>>, vector<1x4x32xf32>
    %44 = vector.shape_cast %43 : vector<1x4x32xf32> to vector<4x32xf32>
    %45 = vector.shape_cast %42 : vector<4x32xf32> to vector<1x4x32xf32>
    tpu.vector_store %arg8[%c0_22, %c0_23, %c0_24], %45 {strides = array<i32>} : memref<1x4x32xf32, #tpu.memory_space<vmem>>, vector<1x4x32xf32>,
    %c0_25 = arith.constant 0 : index
    %c0_26 = arith.constant 0 : index
    %c0_27 = arith.constant 0 : index
    %46 = vector.load %arg9[%c0_25, %c0_26, %c0_27] : memref<1x4x16xf32, #tpu.memory_space<vmem>>, vector<1x4x16xf32>
    %47 = vector.shape_cast %46 : vector<1x4x16xf32> to vector<4x16xf32>
    %48 = vector.shape_cast %39 : vector<4x16xf32> to vector<1x4x16xf32>
    tpu.vector_store %arg9[%c0_25, %c0_26, %c0_27], %48 {strides = array<i32>} : memref<1x4x16xf32, #tpu.memory_space<vmem>>, vector<1x4x16xf32>,
    return
  }
  func.func @transform_0(%arg0: i32) -> (i32, i32, i32) {
    %c0_i32 = arith.constant 0 : i32
    %c0_i32_0 = arith.constant 0 : i32
    %c0_i32_1 = arith.constant 0 : i32
    return %arg0, %c0_i32, %c0_i32_0 : i32, i32, i32
  }
  func.func @transform_1(%arg0: i32) -> (i32, i32, i32) {
    %c0_i32 = arith.constant 0 : i32
    %c0_i32_0 = arith.constant 0 : i32
    %c0_i32_1 = arith.constant 0 : i32
    return %arg0, %c0_i32, %c0_i32_0 : i32, i32, i32
  }
  func.func @transform_2(%arg0: i32) -> (i32, i32) {
    %c0_i32 = arith.constant 0 : i32
    %c0_i32_0 = arith.constant 0 : i32
    %c0_i32_1 = arith.constant 0 : i32
    return %c0_i32, %c0_i32_0 : i32, i32
  }
  func.func @transform_3(%arg0: i32) -> (i32, i32) {
    %c0_i32 = arith.constant 0 : i32
    %c0_i32_0 = arith.constant 0 : i32
    %c0_i32_1 = arith.constant 0 : i32
    return %c0_i32, %c0_i32_0 : i32, i32
  }
  func.func @transform_4(%arg0: i32) -> (i32, i32) {
    %c0_i32 = arith.constant 0 : i32
    %c0_i32_0 = arith.constant 0 : i32
    %c0_i32_1 = arith.constant 0 : i32
    return %c0_i32, %c0_i32_0 : i32, i32
  }
  func.func @transform_5(%arg0: i32) -> (i32, i32) {
    %c0_i32 = arith.constant 0 : i32
    %c0_i32_0 = arith.constant 0 : i32
    %c0_i32_1 = arith.constant 0 : i32
    return %c0_i32, %c0_i32_0 : i32, i32
  }
  func.func @transform_6(%arg0: i32) -> (i32, i32) {
    %c0_i32 = arith.constant 0 : i32
    %c0_i32_0 = arith.constant 0 : i32
    %c0_i32_1 = arith.constant 0 : i32
    return %c0_i32, %c0_i32_0 : i32, i32
  }
  func.func @transform_7(%arg0: i32) -> (i32, i32, i32) {
    %c0_i32 = arith.constant 0 : i32
    %c0_i32_0 = arith.constant 0 : i32
    %c0_i32_1 = arith.constant 0 : i32
    return %arg0, %c0_i32, %c0_i32_0 : i32, i32, i32
  }
  func.func @transform_8(%arg0: i32) -> (i32, i32, i32) {
    %c0_i32 = arith.constant 0 : i32
    %c0_i32_0 = arith.constant 0 : i32
    %c0_i32_1 = arith.constant 0 : i32
    return %arg0, %c0_i32, %c0_i32_0 : i32, i32, i32
  }
}

</mosaic_0001>

<llo_original>
// kernel: tpu_custom_call.1
$region0: #{tpu_custom_call.1}
  #allocation0 [shape = 'u32[]', space=smem, size = 0x4, offset = 0x4, fixed_abs, tag = 'smem constant byte address 0x4 - core index']
  #allocation1 [shape = 'u32[144,128]{1,0:T(1,128)}', space=vmem, size = 0x12000, scoped, tag = 'internal scratch']
  #allocation2 [shape = 'f32[1,1]{1,0:T(1,128)S(6)}', space=smem, size = 0x200, scoped, tag = 'scoped memory for tpu_custom_call.1']
  %s0 = inlined_call_operand.hbm [shape: f32[4,16,32], index: 0, kind: input, shape index: {}]
  %s1 = inlined_call_operand.vmem [shape: f32[1,4,32], index: 1, kind: input, shape index: {}]
  %s2 = inlined_call_operand.hbm [shape: f32[32,32], index: 2, kind: input, shape index: {}]
  %s3 = inlined_call_operand.hbm [shape: f32[32,32], index: 3, kind: input, shape index: {}]
  %s4 = inlined_call_operand.vmem [shape: f32[1,32], index: 4, kind: input, shape index: {}]
  %s5 = inlined_call_operand.vmem [shape: f32[1,32], index: 5, kind: input, shape index: {}]
  %s6 = inlined_call_operand.<no memory space> [shape: f32[1,1], index: 6, kind: input, shape index: {}]
  %s7 = inlined_call_operand.hbm [shape: f32[1,4,32], index: 7, kind: output, shape index: {0}]
  %s8 = inlined_call_operand.hbm [shape: f32[1,4,16], index: 8, kind: output, shape index: {1}]
  %9 = xla_tuple %s7, %s8
  %s10 = sld [smem:[#allocation0]]
  $region58: #{tpu_custom_call.1} parent=0
    _
  %s12 = ssub.s32 1, %s10
  %s13 = scalar_select 0, %s12, %s10
  %14 = sst [smem:[#allocation2]] %s6
  $region1: #{tpu_custom_call.1} parent=0
    #allocation3 [shape = 'u8[32768]{0}', space=vmem, size = 0x8000, scoped, tag = 'input window, operand 0, single buffered']
    #allocation4 [shape = 's32[1]{0}', space=sflag, size = 0x4, scoped, tag = 'scoped memory for tpu_custom_call.1']
    #allocation5 [shape = 's32[1]{0}', space=sflag, size = 0x4, scoped, tag = 'scoped memory for tpu_custom_call.1']
    #allocation6 [shape = 'u8[16384]{0}', space=vmem, size = 0x4000, scoped, tag = 'input window, operand 2, single buffered']
    #allocation7 [shape = 's32[1]{0}', space=sflag, size = 0x4, scoped, tag = 'scoped memory for tpu_custom_call.1']
    #allocation8 [shape = 'u8[16384]{0}', space=vmem, size = 0x4000, scoped, tag = 'input window, operand 3, single buffered']
    #allocation9 [shape = 'u8[2048]{0}', space=vmem, size = 0x800, scoped, tag = 'output window, operand 0, single buffered']
    #allocation10 [shape = 'u8[2048]{0}', space=vmem, size = 0x800, scoped, tag = 'output window, operand 1, single buffered']
    #allocation11 [shape = 's32[1]{0}', space=sflag, size = 0x4, scoped, tag = 'scoped memory for tpu_custom_call.1']
    %15 = vsyncpa [#allocation4], 0
    %16 = vsyncpa [#allocation7], 0
    %17 = vsyncpa [#allocation5], 0
    %18 = vsyncpa [#allocation11], 0
    // Predicated region
    $region2: #{tpu_custom_call.1} parent=1 // pred_check
      _
    $region3: #{tpu_custom_call.1} parent=1 // pred_check_branch
      %20 = sbr.rel (0) target = $region5
    $region4: #{tpu_custom_call.1} parent=1 // pred_region
      %s22 = ssub.s32 1024, 1024
      %23 = vsyncadd [#allocation4], %s22
      %s24 = sshll.u32 [#allocation3], 4
      %s25 = int_to_ptr.vmem [resolvable:$true] %s24
      %30 = dma.hbm_to_vmem [thread:$0]  %s0, 1024, %s25, [#allocation4], 128, 128, 8
    $region5: #{tpu_custom_call.1} parent=1 // pred_fallthru
      _
    // Predicated region
    $region6: #{tpu_custom_call.1} parent=1 // pred_check
      _
    $region7: #{tpu_custom_call.1} parent=1 // pred_check_branch
      %32 = sbr.rel (0) target = $region9
    $region8: #{tpu_custom_call.1} parent=1 // pred_region
      _
    $region9: #{tpu_custom_call.1} parent=1 // pred_fallthru
      _
    // Predicated region
    $region10: #{tpu_custom_call.1} parent=1 // pred_check
      _
    $region11: #{tpu_custom_call.1} parent=1 // pred_check_branch
      %34 = sbr.rel (0) target = $region13
    $region12: #{tpu_custom_call.1} parent=1 // pred_region
      %s36 = ssub.s32 512, 512
      %37 = vsyncadd [#allocation7], %s36
      %s38 = sshll.u32 [#allocation6], 4
      %s39 = int_to_ptr.vmem [resolvable:$true] %s38
      %44 = dma.hbm_to_vmem [thread:$0]  %s2, 512, %s39, [#allocation7], 128, 128, 8
    $region13: #{tpu_custom_call.1} parent=1 // pred_fallthru
      _
    // Predicated region
    $region14: #{tpu_custom_call.1} parent=1 // pred_check
      _
    $region15: #{tpu_custom_call.1} parent=1 // pred_check_branch
      %46 = sbr.rel (0) target = $region17
    $region16: #{tpu_custom_call.1} parent=1 // pred_region
      %s48 = ssub.s32 512, 512
      %49 = vsyncadd [#allocation7], %s48
      %s50 = sshll.u32 [#allocation8], 4
      %s51 = int_to_ptr.vmem [resolvable:$true] %s50
      %56 = dma.hbm_to_vmem [thread:$0]  %s3, 512, %s51, [#allocation7], 128, 128, 8
    $region17: #{tpu_custom_call.1} parent=1 // pred_fallthru
      _
    // Predicated region
    $region18: #{tpu_custom_call.1} parent=1 // pred_check
      _
    $region19: #{tpu_custom_call.1} parent=1 // pred_check_branch
      %58 = sbr.rel (0) target = $region21
    $region20: #{tpu_custom_call.1} parent=1 // pred_region
      _
    $region21: #{tpu_custom_call.1} parent=1 // pred_fallthru
      _
    // Predicated region
    $region22: #{tpu_custom_call.1} parent=1 // pred_check
      _
    $region23: #{tpu_custom_call.1} parent=1 // pred_check_branch
      %60 = sbr.rel (0) target = $region25
    $region24: #{tpu_custom_call.1} parent=1 // pred_region
      _
    $region25: #{tpu_custom_call.1} parent=1 // pred_fallthru
      _
    // Predicated region
    $region26: #{tpu_custom_call.1} parent=1 // pred_check
      _
    $region27: #{tpu_custom_call.1} parent=1 // pred_check_branch
      %62 = sbr.rel (0) target = $region29
    $region28: #{tpu_custom_call.1} parent=1 // pred_region
      _
    $region29: #{tpu_custom_call.1} parent=1 // pred_fallthru
      _
    // Predicated region
    $region30: #{tpu_custom_call.1} parent=1 // pred_check
      _
    $region31: #{tpu_custom_call.1} parent=1 // pred_check_branch
      %64 = sbr.rel (0) target = $region33
    $region32: #{tpu_custom_call.1} parent=1 // pred_region
      %65 = dma.done [#allocation4], 1024
    $region33: #{tpu_custom_call.1} parent=1 // pred_fallthru
      _
    // Predicated region
    $region34: #{tpu_custom_call.1} parent=1 // pred_check
      _
    $region35: #{tpu_custom_call.1} parent=1 // pred_check_branch
      %67 = sbr.rel (0) target = $region37
    $region36: #{tpu_custom_call.1} parent=1 // pred_region
      %68 = dma.done [#allocation7], 512
    $region37: #{tpu_custom_call.1} parent=1 // pred_fallthru
      _
    // Predicated region
    $region38: #{tpu_custom_call.1} parent=1 // pred_check
      _
    $region39: #{tpu_custom_call.1} parent=1 // pred_check_branch
      %70 = sbr.rel (0) target = $region41
    $region40: #{tpu_custom_call.1} parent=1 // pred_region
      %71 = dma.done [#allocation7], 512
    $region41: #{tpu_custom_call.1} parent=1 // pred_fallthru
      _
    %v72 = vld [vmem:[#allocation3] sm:$0xff]
    %v73 = vld [vmem:[#allocation3 + $0x8] sm:$0xff]
    %v74 = vld [vmem:[#allocation3 + $0x10] sm:$0xff]
    %v75 = vld [vmem:[#allocation3 + $0x18] sm:$0xff]
    %v76 = vld [vmem:[#allocation3 + $0x20] sm:$0xff]
    %v77 = vld [vmem:[#allocation3 + $0x28] sm:$0xff]
    %v78 = vld [vmem:[#allocation3 + $0x30] sm:$0xff]
    %v79 = vld [vmem:[#allocation3 + $0x38] sm:$0xff]
    %v80 = vld [vmem:[%s1] sm:$0xf]
    %v81 = vld [vmem:[#allocation6] sm:$0xff]
    %v82 = vld [vmem:[#allocation6 + $0x8] sm:$0xff]
    %v83 = vld [vmem:[#allocation6 + $0x10] sm:$0xff]
    %v84 = vld [vmem:[#allocation6 + $0x18] sm:$0xff]
    %vm85 = vcmask 261120
    %v87 = vsel %vm85, %v72, 0
    %v90 = vsel %vm85, %v73, 0
    %v93 = vsel %vm85, %v74, 0
    %v96 = vsel %vm85, %v75, 0
    %v99 = vsel %vm85, %v76, 0
    %v102 = vsel %vm85, %v77, 0
    %v105 = vsel %vm85, %v78, 0
    %v108 = vsel %vm85, %v79, 0
    %110 = vmatprep.subr.mxu0 0.0
    %v111 = vand.u32 %v81, 4294901760
    %112 = vmatpush1.msra.mxu0 %v111
    %113 = vmatprep.subr.mxu0 0.0
    %v114 = vand.u32 %v82, 4294901760
    %115 = vmatpush1.msra.mxu0 %v114
    %116 = vmatprep.subr.mxu0 0.0
    %v117 = vand.u32 %v83, 4294901760
    %118 = vmatpush1.msra.mxu0 %v117
    %119 = vmatprep.subr.mxu0 0.0
    %v120 = vand.u32 %v84, 4294901760
    %121 = vmatpush1.msra.mxu0 %v120
    %122 = vmatprep.subr.mxu0 0.0
    %123 = vmatpush1.msra.mxu0 0.0
    %124 = vmatprep.subr.mxu0 0.0
    %125 = vmatpush1.msra.mxu0 0.0
    %126 = vmatprep.subr.mxu0 0.0
    %127 = vmatpush1.msra.mxu0 0.0
    %128 = vmatprep.subr.mxu0 0.0
    %129 = vmatpush1.msra.mxu0 0.0
    %130 = vmatprep.subr.mxu0 0.0
    %131 = vmatpush1.msra.mxu0 0.0
    %132 = vmatprep.subr.mxu0 0.0
    %133 = vmatpush1.msra.mxu0 0.0
    %134 = vmatprep.subr.mxu0 0.0
    %135 = vmatpush1.msra.mxu0 0.0
    %136 = vmatprep.subr.mxu0 0.0
    %137 = vmatpush1.msra.mxu0 0.0
    %138 = vmatprep.subr.mxu0 0.0
    %139 = vmatpush1.msra.mxu0 0.0
    %140 = vmatprep.subr.mxu0 0.0
    %141 = vmatpush1.msra.mxu0 0.0
    %142 = vmatprep.subr.mxu0 0.0
    %143 = vmatpush1.msra.mxu0 0.0
    %144 = vmatprep.subr.mxu0 0.0
    %145 = vmatpush1.msra.mxu0 0.0
    %146 = vmatprep.subr.mxu0 0.0
    %147 = vmatpush1.msra.mxu0 0.0
    %148 = vmatprep.subr.mxu0 0.0
    %149 = vmatpush1.msra.mxu0 0.0
    %150 = vmatprep.subr.mxu0 0.0
    %151 = vmatpush1.msra.mxu0 0.0
    %152 = vmatprep.subr.mxu0 0.0
    %153 = vmatpush1.msra.mxu0 0.0
    %154 = vmatprep.subr.mxu0 0.0
    %155 = vmatpush1.msra.mxu0 0.0
    %156 = vmatprep.subr.mxu0 0.0
    %157 = vmatpush1.msra.mxu0 0.0
    %158 = vmatprep.subr.mxu0 0.0
    %159 = vmatpush1.msra.mxu0 0.0
    %160 = vmatprep.subr.mxu0 0.0
    %161 = vmatpush1.msra.mxu0 0.0
    %162 = vmatprep.subr.mxu0 0.0
    %163 = vmatpush1.msra.mxu0 0.0
    %164 = vmatprep.subr.mxu0 0.0
    %165 = vmatpush1.msra.mxu0 0.0
    %166 = vmatprep.subr.mxu0 0.0
    %167 = vmatpush1.msra.mxu0 0.0
    %168 = vmatprep.subr.mxu0 0.0
    %169 = vmatpush1.msra.mxu0 0.0
    %170 = vmatprep.subr.mxu0 0.0
    %171 = vmatpush1.msra.mxu0 0.0
    %172 = vmatprep.subr.mxu0 0.0
    %173 = vmatpush1.msra.mxu0 0.0
    %174 = vmatprep.subr.mxu0 0.0
    %175 = vmatpush1.msra.mxu0 0.0
    %176 = vmatprep.subr.mxu0 0.0
    %177 = vmatpush1.msra.mxu0 0.0
    %178 = vmatprep.mubr.f32.mxu0 0.0
    %v179 = vand.u32 %v87, 4294901760
    %v180 = vsub.f32 %v87, %v179
    %v181 = vand.u32 %v180, 4294901760
    %v182 = vsub.f32 %v180, %v181
    %v183 = vand.u32 %v182, 4294901760
    %184 = vmatmul.mubr.f32.gmra.mrb[0].mxu0 %v183
    %v185 = vpop.f32.mrb[0].mxu0
    %v186 = vadd.f32 0.0, %v185
    %v187 = vpop.f32.mrb[0].mxu0
    %188 = vmatprep.mubr.f32.mxu0 0.0
    %v189 = vand.u32 %v90, 4294901760
    %v190 = vsub.f32 %v90, %v189
    %v191 = vand.u32 %v190, 4294901760
    %v192 = vsub.f32 %v190, %v191
    %v193 = vand.u32 %v192, 4294901760
    %194 = vmatmul.mubr.f32.gmra.mrb[0].mxu0 %v193
    %v195 = vpop.f32.mrb[0].mxu0
    %v196 = vadd.f32 0.0, %v195
    %v197 = vpop.f32.mrb[0].mxu0
    %198 = vmatprep.mubr.f32.mxu0 0.0
    %v199 = vand.u32 %v93, 4294901760
    %v200 = vsub.f32 %v93, %v199
    %v201 = vand.u32 %v200, 4294901760
    %v202 = vsub.f32 %v200, %v201
    %v203 = vand.u32 %v202, 4294901760
    %204 = vmatmul.mubr.f32.gmra.mrb[0].mxu0 %v203
    %v205 = vpop.f32.mrb[0].mxu0
    %v206 = vadd.f32 0.0, %v205
    %v207 = vpop.f32.mrb[0].mxu0
    %208 = vmatprep.mubr.f32.mxu0 0.0
    %v209 = vand.u32 %v96, 4294901760
    %v210 = vsub.f32 %v96, %v209
    %v211 = vand.u32 %v210, 4294901760
    %v212 = vsub.f32 %v210, %v211
    %v213 = vand.u32 %v212, 4294901760
    %214 = vmatmul.mubr.f32.gmra.mrb[0].mxu0 %v213
    %v215 = vpop.f32.mrb[0].mxu0
    %v216 = vadd.f32 0.0, %v215
    %v217 = vpop.f32.mrb[0].mxu0
    %218 = vmatprep.mubr.f32.mxu0 0.0
    %v219 = vand.u32 %v99, 4294901760
    %v220 = vsub.f32 %v99, %v219
    %v221 = vand.u32 %v220, 4294901760
    %v222 = vsub.f32 %v220, %v221
    %v223 = vand.u32 %v222, 4294901760
    %224 = vmatmul.mubr.f32.gmra.mrb[0].mxu0 %v223
    %v225 = vpop.f32.mrb[0].mxu0
    %v226 = vadd.f32 0.0, %v225
    %v227 = vpop.f32.mrb[0].mxu0
    %228 = vmatprep.mubr.f32.mxu0 0.0
    %v229 = vand.u32 %v102, 4294901760
    %v230 = vsub.f32 %v102, %v229
    %v231 = vand.u32 %v230, 4294901760
    %v232 = vsub.f32 %v230, %v231
    %v233 = vand.u32 %v232, 4294901760
    %234 = vmatmul.mubr.f32.gmra.mrb[0].mxu0 %v233
    %v235 = vpop.f32.mrb[0].mxu0
    %v236 = vadd.f32 0.0, %v235
    %v237 = vpop.f32.mrb[0].mxu0
    %238 = vmatprep.mubr.f32.mxu0 0.0
    %v239 = vand.u32 %v105, 4294901760
    %v240 = vsub.f32 %v105, %v239
    %v241 = vand.u32 %v240, 4294901760
    %v242 = vsub.f32 %v240, %v241
    %v243 = vand.u32 %v242, 4294901760
    %244 = vmatmul.mubr.f32.gmra.mrb[0].mxu0 %v243
    %v245 = vpop.f32.mrb[0].mxu0
    %v246 = vadd.f32 0.0, %v245
    %v247 = vpop.f32.mrb[0].mxu0
    %248 = vmatprep.mubr.f32.mxu0 0.0
    %v249 = vand.u32 %v108, 4294901760
    %v250 = vsub.f32 %v108, %v249
    %v251 = vand.u32 %v250, 4294901760
    %v252 = vsub.f32 %v250, %v251
    %v253 = vand.u32 %v252, 4294901760
    %254 = vmatmul.mubr.f32.gmra.mrb[0].mxu0 %v253
    %v255 = vpop.f32.mrb[0].mxu0
    %v256 = vadd.f32 0.0, %v255
    %v257 = vpop.f32.mrb[0].mxu0
    %258 = vdwg.mxu0
    %259 = vmatprep.subr.mxu0 0.0
    %v260 = vand.u32 %v81, 4294901760
    %v261 = vsub.f32 %v81, %v260
    %v262 = vand.u32 %v261, 4294901760
    %v263 = vsub.f32 %v261, %v262
    %v264 = vand.u32 %v263, 4294901760
    %265 = vmatpush1.msra.mxu0 %v264
    %266 = vmatprep.subr.mxu0 0.0
    %v267 = vand.u32 %v82, 4294901760
    %v268 = vsub.f32 %v82, %v267
    %v269 = vand.u32 %v268, 4294901760
    %v270 = vsub.f32 %v268, %v269
    %v271 = vand.u32 %v270, 4294901760
    %272 = vmatpush1.msra.mxu0 %v271
    %273 = vmatprep.subr.mxu0 0.0
    %v274 = vand.u32 %v83, 4294901760
    %v275 = vsub.f32 %v83, %v274
    %v276 = vand.u32 %v275, 4294901760
    %v277 = vsub.f32 %v275, %v276
    %v278 = vand.u32 %v277, 4294901760
    %279 = vmatpush1.msra.mxu0 %v278
    %280 = vmatprep.subr.mxu0 0.0
    %v281 = vand.u32 %v84, 4294901760
    %v282 = vsub.f32 %v84, %v281
    %v283 = vand.u32 %v282, 4294901760
    %v284 = vsub.f32 %v282, %v283
    %v285 = vand.u32 %v284, 4294901760
    %286 = vmatpush1.msra.mxu0 %v285
    %287 = vmatprep.subr.mxu0 0.0
    %288 = vmatpush1.msra.mxu0 0.0
    %289 = vmatprep.subr.mxu0 0.0
    %290 = vmatpush1.msra.mxu0 0.0
    %291 = vmatprep.subr.mxu0 0.0
    %292 = vmatpush1.msra.mxu0 0.0
    %293 = vmatprep.subr.mxu0 0.0
    %294 = vmatpush1.msra.mxu0 0.0
    %295 = vmatprep.subr.mxu0 0.0
    %296 = vmatpush1.msra.mxu0 0.0
    %297 = vmatprep.subr.mxu0 0.0
    %298 = vmatpush1.msra.mxu0 0.0
    %299 = vmatprep.subr.mxu0 0.0
    %300 = vmatpush1.msra.mxu0 0.0
    %301 = vmatprep.subr.mxu0 0.0
    %302 = vmatpush1.msra.mxu0 0.0
    %303 = vmatprep.subr.mxu0 0.0
    %304 = vmatpush1.msra.mxu0 0.0
    %305 = vmatprep.subr.mxu0 0.0
    %306 = vmatpush1.msra.mxu0 0.0
    %307 = vmatprep.subr.mxu0 0.0
    %308 = vmatpush1.msra.mxu0 0.0
    %309 = vmatprep.subr.mxu0 0.0
    %310 = vmatpush1.msra.mxu0 0.0
    %311 = vmatprep.subr.mxu0 0.0
    %312 = vmatpush1.msra.mxu0 0.0
    %313 = vmatprep.subr.mxu0 0.0
    %314 = vmatpush1.msra.mxu0 0.0
    %315 = vmatprep.subr.mxu0 0.0
    %316 = vmatpush1.msra.mxu0 0.0
    %317 = vmatprep.subr.mxu0 0.0
    %318 = vmatpush1.msra.mxu0 0.0
    %319 = vmatprep.subr.mxu0 0.0
    %320 = vmatpush1.msra.mxu0 0.0
    %321 = vmatprep.subr.mxu0 0.0
    %322 = vmatpush1.msra.mxu0 0.0
    %323 = vmatprep.subr.mxu0 0.0
    %324 = vmatpush1.msra.mxu0 0.0
    %325 = vmatprep.subr.mxu0 0.0
    %326 = vmatpush1.msra.mxu0 0.0
    %327 = vmatprep.subr.mxu0 0.0
    %328 = vmatpush1.msra.mxu0 0.0
    %329 = vmatprep.subr.mxu0 0.0
    %330 = vmatpush1.msra.mxu0 0.0
    %331 = vmatprep.subr.mxu0 0.0
    %332 = vmatpush1.msra.mxu0 0.0
    %333 = vmatprep.subr.mxu0 0.0
    %334 = vmatpush1.msra.mxu0 0.0
    %335 = vmatprep.subr.mxu0 0.0
    %336 = vmatpush1.msra.mxu0 0.0
    %337 = vmatprep.subr.mxu0 0.0
    %338 = vmatpush1.msra.mxu0 0.0
    %339 = vmatprep.subr.mxu0 0.0
    %340 = vmatpush1.msra.mxu0 0.0
    %341 = vmatprep.subr.mxu0 0.0
    %342 = vmatpush1.msra.mxu0 0.0
    %343 = vmatprep.mubr.f32.mxu0 0.0
    %v344 = vand.u32 %v87, 4294901760
    %345 = vmatmul.mubr.f32.gmra.mrb[0].mxu0 %v344
    %v346 = vpop.f32.mrb[0].mxu0
    %v347 = vadd.f32 %v186, %v346
    %v348 = vpop.f32.mrb[0].mxu0
    %349 = vmatprep.mubr.f32.mxu0 0.0
    %v350 = vand.u32 %v90, 4294901760
    %351 = vmatmul.mubr.f32.gmra.mrb[0].mxu0 %v350
    %v352 = vpop.f32.mrb[0].mxu0
    %v353 = vadd.f32 %v196, %v352
    %v354 = vpop.f32.mrb[0].mxu0
    %355 = vmatprep.mubr.f32.mxu0 0.0
    %v356 = vand.u32 %v93, 4294901760
    %357 = vmatmul.mubr.f32.gmra.mrb[0].mxu0 %v356
    %v358 = vpop.f32.mrb[0].mxu0
    %v359 = vadd.f32 %v206, %v358
    %v360 = vpop.f32.mrb[0].mxu0
    %361 = vmatprep.mubr.f32.mxu0 0.0
    %v362 = vand.u32 %v96, 4294901760
    %363 = vmatmul.mubr.f32.gmra.mrb[0].mxu0 %v362
    %v364 = vpop.f32.mrb[0].mxu0
    %v365 = vadd.f32 %v216, %v364
    %v366 = vpop.f32.mrb[0].mxu0
    %367 = vmatprep.mubr.f32.mxu0 0.0
    %v368 = vand.u32 %v99, 4294901760
    %369 = vmatmul.mubr.f32.gmra.mrb[0].mxu0 %v368
    %v370 = vpop.f32.mrb[0].mxu0
    %v371 = vadd.f32 %v226, %v370
    %v372 = vpop.f32.mrb[0].mxu0
    %373 = vmatprep.mubr.f32.mxu0 0.0
    %v374 = vand.u32 %v102, 4294901760
    %375 = vmatmul.mubr.f32.gmra.mrb[0].mxu0 %v374
    %v376 = vpop.f32.mrb[0].mxu0
    %v377 = vadd.f32 %v236, %v376
    %v378 = vpop.f32.mrb[0].mxu0
    %379 = vmatprep.mubr.f32.mxu0 0.0
    %v380 = vand.u32 %v105, 4294901760
    %381 = vmatmul.mubr.f32.gmra.mrb[0].mxu0 %v380
    %v382 = vpop.f32.mrb[0].mxu0
    %v383 = vadd.f32 %v246, %v382
    %v384 = vpop.f32.mrb[0].mxu0
    %385 = vmatprep.mubr.f32.mxu0 0.0
    %v386 = vand.u32 %v108, 4294901760
    %387 = vmatmul.mubr.f32.gmra.mrb[0].mxu0 %v386
    %v388 = vpop.f32.mrb[0].mxu0
    %v389 = vadd.f32 %v256, %v388
    %v390 = vpop.f32.mrb[0].mxu0
    %391 = vdwg.mxu0
    %392 = vmatprep.subr.mxu0 0.0
    %v393 = vand.u32 %v81, 4294901760
    %v394 = vsub.f32 %v81, %v393
    %395 = vmatpush1.msra.mxu0 %v394
    %396 = vmatprep.subr.mxu0 0.0
    %v397 = vand.u32 %v82, 4294901760
    %v398 = vsub.f32 %v82, %v397
    %399 = vmatpush1.msra.mxu0 %v398
    %400 = vmatprep.subr.mxu0 0.0
    %v401 = vand.u32 %v83, 4294901760
    %v402 = vsub.f32 %v83, %v401
    %403 = vmatpush1.msra.mxu0 %v402
    %404 = vmatprep.subr.mxu0 0.0
    %v405 = vand.u32 %v84, 4294901760
    %v406 = vsub.f32 %v84, %v405
    %407 = vmatpush1.msra.mxu0 %v406
    %408 = vmatprep.subr.mxu0 0.0
    %409 = vmatpush1.msra.mxu0 0.0
    %410 = vmatprep.subr.mxu0 0.0
    %411 = vmatpush1.msra.mxu0 0.0
    %412 = vmatprep.subr.mxu0 0.0
    %413 = vmatpush1.msra.mxu0 0.0
    %414 = vmatprep.subr.mxu0 0.0
    %415 = vmatpush1.msra.mxu0 0.0
    %416 = vmatprep.subr.mxu0 0.0
    %417 = vmatpush1.msra.mxu0 0.0
    %418 = vmatprep.subr.mxu0 0.0
    %419 = vmatpush1.msra.mxu0 0.0
    %420 = vmatprep.subr.mxu0 0.0
    %421 = vmatpush1.msra.mxu0 0.0
    %422 = vmatprep.subr.mxu0 0.0
    %423 = vmatpush1.msra.mxu0 0.0
    %424 = vmatprep.subr.mxu0 0.0
    %425 = vmatpush1.msra.mxu0 0.0
    %426 = vmatprep.subr.mxu0 0.0
    %427 = vmatpush1.msra.mxu0 0.0
    %428 = vmatprep.subr.mxu0 0.0
    %429 = vmatpush1.msra.mxu0 0.0
    %430 = vmatprep.subr.mxu0 0.0
    %431 = vmatpush1.msra.mxu0 0.0
    %432 = vmatprep.subr.mxu0 0.0
    %433 = vmatpush1.msra.mxu0 0.0
    %434 = vmatprep.subr.mxu0 0.0
    %435 = vmatpush1.msra.mxu0 0.0
    %436 = vmatprep.subr.mxu0 0.0
    %437 = vmatpush1.msra.mxu0 0.0
    %438 = vmatprep.subr.mxu0 0.0
    %439 = vmatpush1.msra.mxu0 0.0
    %440 = vmatprep.subr.mxu0 0.0
    %441 = vmatpush1.msra.mxu0 0.0
    %442 = vmatprep.subr.mxu0 0.0
    %443 = vmatpush1.msra.mxu0 0.0
    %444 = vmatprep.subr.mxu0 0.0
    %445 = vmatpush1.msra.mxu0 0.0
    %446 = vmatprep.subr.mxu0 0.0
    %447 = vmatpush1.msra.mxu0 0.0
    %448 = vmatprep.subr.mxu0 0.0
    %449 = vmatpush1.msra.mxu0 0.0
    %450 = vmatprep.subr.mxu0 0.0
    %451 = vmatpush1.msra.mxu0 0.0
    %452 = vmatprep.subr.mxu0 0.0
    %453 = vmatpush1.msra.mxu0 0.0
    %454 = vmatprep.subr.mxu0 0.0
    %455 = vmatpush1.msra.mxu0 0.0
    %456 = vmatprep.subr.mxu0 0.0
    %457 = vmatpush1.msra.mxu0 0.0
    %458 = vmatprep.subr.mxu0 0.0
    %459 = vmatpush1.msra.mxu0 0.0
    %460 = vmatprep.subr.mxu0 0.0
    %461 = vmatpush1.msra.mxu0 0.0
    %462 = vmatprep.subr.mxu0 0.0
    %463 = vmatpush1.msra.mxu0 0.0
    %464 = vmatprep.mubr.f32.mxu0 0.0
    %v465 = vand.u32 %v87, 4294901760
    %v466 = vsub.f32 %v87, %v465
    %467 = vmatmul.mubr.f32.gmra.mrb[0].mxu0 %v466
    %v468 = vpop.f32.mrb[0].mxu0
    %v469 = vadd.f32 %v347, %v468
    %v470 = vpop.f32.mrb[0].mxu0
    %471 = vmatprep.mubr.f32.mxu0 0.0
    %v472 = vand.u32 %v90, 4294901760
    %v473 = vsub.f32 %v90, %v472
    %474 = vmatmul.mubr.f32.gmra.mrb[0].mxu0 %v473
    %v475 = vpop.f32.mrb[0].mxu0
    %v476 = vadd.f32 %v353, %v475
    %v477 = vpop.f32.mrb[0].mxu0
    %478 = vmatprep.mubr.f32.mxu0 0.0
    %v479 = vand.u32 %v93, 4294901760
    %v480 = vsub.f32 %v93, %v479
    %481 = vmatmul.mubr.f32.gmra.mrb[0].mxu0 %v480
    %v482 = vpop.f32.mrb[0].mxu0
    %v483 = vadd.f32 %v359, %v482
    %v484 = vpop.f32.mrb[0].mxu0
    %485 = vmatprep.mubr.f32.mxu0 0.0
    %v486 = vand.u32 %v96, 4294901760
    %v487 = vsub.f32 %v96, %v486
    %488 = vmatmul.mubr.f32.gmra.mrb[0].mxu0 %v487
    %v489 = vpop.f32.mrb[0].mxu0
    %v490 = vadd.f32 %v365, %v489
    %v491 = vpop.f32.mrb[0].mxu0
    %492 = vmatprep.mubr.f32.mxu0 0.0
    %v493 = vand.u32 %v99, 4294901760
    %v494 = vsub.f32 %v99, %v493
    %495 = vmatmul.mubr.f32.gmra.mrb[0].mxu0 %v494
    %v496 = vpop.f32.mrb[0].mxu0
    %v497 = vadd.f32 %v371, %v496
    %v498 = vpop.f32.mrb[0].mxu0
    %499 = vmatprep.mubr.f32.mxu0 0.0
    %v500 = vand.u32 %v102, 4294901760
    %v501 = vsub.f32 %v102, %v500
    %502 = vmatmul.mubr.f32.gmra.mrb[0].mxu0 %v501
    %v503 = vpop.f32.mrb[0].mxu0
    %v504 = vadd.f32 %v377, %v503
    %v505 = vpop.f32.mrb[0].mxu0
    %506 = vmatprep.mubr.f32.mxu0 0.0
    %v507 = vand.u32 %v105, 4294901760
    %v508 = vsub.f32 %v105, %v507
    %509 = vmatmul.mubr.f32.gmra.mrb[0].mxu0 %v508
    %v510 = vpop.f32.mrb[0].mxu0
    %v511 = vadd.f32 %v383, %v510
    %v512 = vpop.f32.mrb[0].mxu0
    %513 = vmatprep.mubr.f32.mxu0 0.0
    %v514 = vand.u32 %v108, 4294901760
    %v515 = vsub.f32 %v108, %v514
    %516 = vmatmul.mubr.f32.gmra.mrb[0].mxu0 %v515
    %v517 = vpop.f32.mrb[0].mxu0
    %v518 = vadd.f32 %v389, %v517
    %v519 = vpop.f32.mrb[0].mxu0
    %520 = vdwg.mxu0
    %521 = vmatprep.subr.mxu0 0.0
    %v522 = vand.u32 %v81, 4294901760
    %523 = vmatpush1.msra.mxu0 %v522
    %524 = vmatprep.subr.mxu0 0.0
    %v525 = vand.u32 %v82, 4294901760
    %526 = vmatpush1.msra.mxu0 %v525
    %527 = vmatprep.subr.mxu0 0.0
    %v528 = vand.u32 %v83, 4294901760
    %529 = vmatpush1.msra.mxu0 %v528
    %530 = vmatprep.subr.mxu0 0.0
    %v531 = vand.u32 %v84, 4294901760
    %532 = vmatpush1.msra.mxu0 %v531
    %533 = vmatprep.subr.mxu0 0.0
    %534 = vmatpush1.msra.mxu0 0.0
    %535 = vmatprep.subr.mxu0 0.0
    %536 = vmatpush1.msra.mxu0 0.0
    %537 = vmatprep.subr.mxu0 0.0
    %538 = vmatpush1.msra.mxu0 0.0
    %539 = vmatprep.subr.mxu0 0.0
    %540 = vmatpush1.msra.mxu0 0.0
    %541 = vmatprep.subr.mxu0 0.0
    %542 = vmatpush1.msra.mxu0 0.0
    %543 = vmatprep.subr.mxu0 0.0
    %544 = vmatpush1.msra.mxu0 0.0
    %545 = vmatprep.subr.mxu0 0.0
    %546 = vmatpush1.msra.mxu0 0.0
    %547 = vmatprep.subr.mxu0 0.0
    %548 = vmatpush1.msra.mxu0 0.0
    %549 = vmatprep.subr.mxu0 0.0
    %550 = vmatpush1.msra.mxu0 0.0
    %551 = vmatprep.subr.mxu0 0.0
    %552 = vmatpush1.msra.mxu0 0.0
    %553 = vmatprep.subr.mxu0 0.0
    %554 = vmatpush1.msra.mxu0 0.0
    %555 = vmatprep.subr.mxu0 0.0
    %556 = vmatpush1.msra.mxu0 0.0
    %557 = vmatprep.subr.mxu0 0.0
    %558 = vmatpush1.msra.mxu0 0.0
    %559 = vmatprep.subr.mxu0 0.0
    %560 = vmatpush1.msra.mxu0 0.0
    %561 = vmatprep.subr.mxu0 0.0
    %562 = vmatpush1.msra.mxu0 0.0
    %563 = vmatprep.subr.mxu0 0.0
    %564 = vmatpush1.msra.mxu0 0.0
    %565 = vmatprep.subr.mxu0 0.0
    %566 = vmatpush1.msra.mxu0 0.0
    %567 = vmatprep.subr.mxu0 0.0
    %568 = vmatpush1.msra.mxu0 0.0
    %569 = vmatprep.subr.mxu0 0.0
    %570 = vmatpush1.msra.mxu0 0.0
    %571 = vmatprep.subr.mxu0 0.0
    %572 = vmatpush1.msra.mxu0 0.0
    %573 = vmatprep.subr.mxu0 0.0
    %574 = vmatpush1.msra.mxu0 0.0
    %575 = vmatprep.subr.mxu0 0.0
    %576 = vmatpush1.msra.mxu0 0.0
    %577 = vmatprep.subr.mxu0 0.0
    %578 = vmatpush1.msra.mxu0 0.0
    %579 = vmatprep.subr.mxu0 0.0
    %580 = vmatpush1.msra.mxu0 0.0
    %581 = vmatprep.subr.mxu0 0.0
    %582 = vmatpush1.msra.mxu0 0.0
    %583 = vmatprep.subr.mxu0 0.0
    %584 = vmatpush1.msra.mxu0 0.0
    %585 = vmatprep.subr.mxu0 0.0
    %586 = vmatpush1.msra.mxu0 0.0
    %587 = vmatprep.subr.mxu0 0.0
    %588 = vmatpush1.msra.mxu0 0.0
    %589 = vmatprep.mubr.f32.mxu0 0.0
    %v590 = vand.u32 %v87, 4294901760
    %v591 = vsub.f32 %v87, %v590
    %v592 = vand.u32 %v591, 4294901760
    %593 = vmatmul.mubr.f32.gmra.mrb[0].mxu0 %v592
    %v594 = vpop.f32.mrb[0].mxu0
    %v595 = vadd.f32 %v469, %v594
    %v596 = vpop.f32.mrb[0].mxu0
    %597 = vmatprep.mubr.f32.mxu0 0.0
    %v598 = vand.u32 %v90, 4294901760
    %v599 = vsub.f32 %v90, %v598
    %v600 = vand.u32 %v599, 4294901760
    %601 = vmatmul.mubr.f32.gmra.mrb[0].mxu0 %v600
    %v602 = vpop.f32.mrb[0].mxu0
    %v603 = vadd.f32 %v476, %v602
    %v604 = vpop.f32.mrb[0].mxu0
    %605 = vmatprep.mubr.f32.mxu0 0.0
    %v606 = vand.u32 %v93, 4294901760
    %v607 = vsub.f32 %v93, %v606
    %v608 = vand.u32 %v607, 4294901760
    %609 = vmatmul.mubr.f32.gmra.mrb[0].mxu0 %v608
    %v610 = vpop.f32.mrb[0].mxu0
    %v611 = vadd.f32 %v483, %v610
    %v612 = vpop.f32.mrb[0].mxu0
    %613 = vmatprep.mubr.f32.mxu0 0.0
    %v614 = vand.u32 %v96, 4294901760
    %v615 = vsub.f32 %v96, %v614
    %v616 = vand.u32 %v615, 4294901760
    %617 = vmatmul.mubr.f32.gmra.mrb[0].mxu0 %v616
    %v618 = vpop.f32.mrb[0].mxu0
    %v619 = vadd.f32 %v490, %v618
    %v620 = vpop.f32.mrb[0].mxu0
    %621 = vmatprep.mubr.f32.mxu0 0.0
    %v622 = vand.u32 %v99, 4294901760
    %v623 = vsub.f32 %v99, %v622
    %v624 = vand.u32 %v623, 4294901760
    %625 = vmatmul.mubr.f32.gmra.mrb[0].mxu0 %v624
    %v626 = vpop.f32.mrb[0].mxu0
    %v627 = vadd.f32 %v497, %v626
    %v628 = vpop.f32.mrb[0].mxu0
    %629 = vmatprep.mubr.f32.mxu0 0.0
    %v630 = vand.u32 %v102, 4294901760
    %v631 = vsub.f32 %v102, %v630
    %v632 = vand.u32 %v631, 4294901760
    %633 = vmatmul.mubr.f32.gmra.mrb[0].mxu0 %v632
    %v634 = vpop.f32.mrb[0].mxu0
    %v635 = vadd.f32 %v504, %v634
    %v636 = vpop.f32.mrb[0].mxu0
    %637 = vmatprep.mubr.f32.mxu0 0.0
    %v638 = vand.u32 %v105, 4294901760
    %v639 = vsub.f32 %v105, %v638
    %v640 = vand.u32 %v639, 4294901760
    %641 = vmatmul.mubr.f32.gmra.mrb[0].mxu0 %v640
    %v642 = vpop.f32.mrb[0].mxu0
    %v643 = vadd.f32 %v511, %v642
    %v644 = vpop.f32.mrb[0].mxu0
    %645 = vmatprep.mubr.f32.mxu0 0.0
    %v646 = vand.u32 %v108, 4294901760
    %v647 = vsub.f32 %v108, %v646
    %v648 = vand.u32 %v647, 4294901760
    %649 = vmatmul.mubr.f32.gmra.mrb[0].mxu0 %v648
    %v650 = vpop.f32.mrb[0].mxu0
    %v651 = vadd.f32 %v518, %v650
    %v652 = vpop.f32.mrb[0].mxu0
    %653 = vdwg.mxu0
    %654 = vmatprep.subr.mxu0 0.0
    %v655 = vand.u32 %v81, 4294901760
    %v656 = vsub.f32 %v81, %v655
    %v657 = vand.u32 %v656, 4294901760
    %658 = vmatpush1.msra.mxu0 %v657
    %659 = vmatprep.subr.mxu0 0.0
    %v660 = vand.u32 %v82, 4294901760
    %v661 = vsub.f32 %v82, %v660
    %v662 = vand.u32 %v661, 4294901760
    %663 = vmatpush1.msra.mxu0 %v662
    %664 = vmatprep.subr.mxu0 0.0
    %v665 = vand.u32 %v83, 4294901760
    %v666 = vsub.f32 %v83, %v665
    %v667 = vand.u32 %v666, 4294901760
    %668 = vmatpush1.msra.mxu0 %v667
    %669 = vmatprep.subr.mxu0 0.0
    %v670 = vand.u32 %v84, 4294901760
    %v671 = vsub.f32 %v84, %v670
    %v672 = vand.u32 %v671, 4294901760
    %673 = vmatpush1.msra.mxu0 %v672
    %674 = vmatprep.subr.mxu0 0.0
    %675 = vmatpush1.msra.mxu0 0.0
    %676 = vmatprep.subr.mxu0 0.0
    %677 = vmatpush1.msra.mxu0 0.0
    %678 = vmatprep.subr.mxu0 0.0
    %679 = vmatpush1.msra.mxu0 0.0
    %680 = vmatprep.subr.mxu0 0.0
    %681 = vmatpush1.msra.mxu0 0.0
    %682 = vmatprep.subr.mxu0 0.0
    %683 = vmatpush1.msra.mxu0 0.0
    %684 = vmatprep.subr.mxu0 0.0
    %685 = vmatpush1.msra.mxu0 0.0
    %686 = vmatprep.subr.mxu0 0.0
    %687 = vmatpush1.msra.mxu0 0.0
    %688 = vmatprep.subr.mxu0 0.0
    %689 = vmatpush1.msra.mxu0 0.0
    %690 = vmatprep.subr.mxu0 0.0
    %691 = vmatpush1.msra.mxu0 0.0
    %692 = vmatprep.subr.mxu0 0.0
    %693 = vmatpush1.msra.mxu0 0.0
    %694 = vmatprep.subr.mxu0 0.0
    %695 = vmatpush1.msra.mxu0 0.0
    %696 = vmatprep.subr.mxu0 0.0
    %697 = vmatpush1.msra.mxu0 0.0
    %698 = vmatprep.subr.mxu0 0.0
    %699 = vmatpush1.msra.mxu0 0.0
    %700 = vmatprep.subr.mxu0 0.0
    %701 = vmatpush1.msra.mxu0 0.0
    %702 = vmatprep.subr.mxu0 0.0
    %703 = vmatpush1.msra.mxu0 0.0
    %704 = vmatprep.subr.mxu0 0.0
    %705 = vmatpush1.msra.mxu0 0.0
    %706 = vmatprep.subr.mxu0 0.0
    %707 = vmatpush1.msra.mxu0 0.0
    %708 = vmatprep.subr.mxu0 0.0
    %709 = vmatpush1.msra.mxu0 0.0
    %710 = vmatprep.subr.mxu0 0.0
    %711 = vmatpush1.msra.mxu0 0.0
    %712 = vmatprep.subr.mxu0 0.0
    %713 = vmatpush1.msra.mxu0 0.0
    %714 = vmatprep.subr.mxu0 0.0
    %715 = vmatpush1.msra.mxu0 0.0
    %716 = vmatprep.subr.mxu0 0.0
    %717 = vmatpush1.msra.mxu0 0.0
    %718 = vmatprep.subr.mxu0 0.0
    %719 = vmatpush1.msra.mxu0 0.0
    %720 = vmatprep.subr.mxu0 0.0
    %721 = vmatpush1.msra.mxu0 0.0
    %722 = vmatprep.subr.mxu0 0.0
    %723 = vmatpush1.msra.mxu0 0.0
    %724 = vmatprep.subr.mxu0 0.0
    %725 = vmatpush1.msra.mxu0 0.0
    %726 = vmatprep.subr.mxu0 0.0
    %727 = vmatpush1.msra.mxu0 0.0
    %728 = vmatprep.subr.mxu0 0.0
    %729 = vmatpush1.msra.mxu0 0.0
    %730 = vmatprep.mubr.f32.mxu0 0.0
    %v731 = vand.u32 %v87, 4294901760
    %732 = vmatmul.mubr.f32.gmra.mrb[0].mxu0 %v731
    %v733 = vpop.f32.mrb[0].mxu0
    %v734 = vadd.f32 %v595, %v733
    %v735 = vpop.f32.mrb[0].mxu0
    %736 = vmatprep.mubr.f32.mxu0 0.0
    %v737 = vand.u32 %v90, 4294901760
    %738 = vmatmul.mubr.f32.gmra.mrb[0].mxu0 %v737
    %v739 = vpop.f32.mrb[0].mxu0
    %v740 = vadd.f32 %v603, %v739
    %v741 = vpop.f32.mrb[0].mxu0
    %742 = vmatprep.mubr.f32.mxu0 0.0
    %v743 = vand.u32 %v93, 4294901760
    %744 = vmatmul.mubr.f32.gmra.mrb[0].mxu0 %v743
    %v745 = vpop.f32.mrb[0].mxu0
    %v746 = vadd.f32 %v611, %v745
    %v747 = vpop.f32.mrb[0].mxu0
    %748 = vmatprep.mubr.f32.mxu0 0.0
    %v749 = vand.u32 %v96, 4294901760
    %750 = vmatmul.mubr.f32.gmra.mrb[0].mxu0 %v749
    %v751 = vpop.f32.mrb[0].mxu0
    %v752 = vadd.f32 %v619, %v751
    %v753 = vpop.f32.mrb[0].mxu0
    %754 = vmatprep.mubr.f32.mxu0 0.0
    %v755 = vand.u32 %v99, 4294901760
    %756 = vmatmul.mubr.f32.gmra.mrb[0].mxu0 %v755
    %v757 = vpop.f32.mrb[0].mxu0
    %v758 = vadd.f32 %v627, %v757
    %v759 = vpop.f32.mrb[0].mxu0
    %760 = vmatprep.mubr.f32.mxu0 0.0
    %v761 = vand.u32 %v102, 4294901760
    %762 = vmatmul.mubr.f32.gmra.mrb[0].mxu0 %v761
    %v763 = vpop.f32.mrb[0].mxu0
    %v764 = vadd.f32 %v635, %v763
    %v765 = vpop.f32.mrb[0].mxu0
    %766 = vmatprep.mubr.f32.mxu0 0.0
    %v767 = vand.u32 %v105, 4294901760
    %768 = vmatmul.mubr.f32.gmra.mrb[0].mxu0 %v767
    %v769 = vpop.f32.mrb[0].mxu0
    %v770 = vadd.f32 %v643, %v769
    %v771 = vpop.f32.mrb[0].mxu0
    %772 = vmatprep.mubr.f32.mxu0 0.0
    %v773 = vand.u32 %v108, 4294901760
    %774 = vmatmul.mubr.f32.gmra.mrb[0].mxu0 %v773
    %v775 = vpop.f32.mrb[0].mxu0
    %v776 = vadd.f32 %v651, %v775
    %v777 = vpop.f32.mrb[0].mxu0
    %778 = vdwg.mxu0
    %779 = vmatprep.subr.mxu0 0.0
    %v780 = vand.u32 %v81, 4294901760
    %781 = vmatpush1.msra.mxu0 %v780
    %782 = vmatprep.subr.mxu0 0.0
    %v783 = vand.u32 %v82, 4294901760
    %784 = vmatpush1.msra.mxu0 %v783
    %785 = vmatprep.subr.mxu0 0.0
    %v786 = vand.u32 %v83, 4294901760
    %787 = vmatpush1.msra.mxu0 %v786
    %788 = vmatprep.subr.mxu0 0.0
    %v789 = vand.u32 %v84, 4294901760
    %790 = vmatpush1.msra.mxu0 %v789
    %791 = vmatprep.subr.mxu0 0.0
    %792 = vmatpush1.msra.mxu0 0.0
    %793 = vmatprep.subr.mxu0 0.0
    %794 = vmatpush1.msra.mxu0 0.0
    %795 = vmatprep.subr.mxu0 0.0
    %796 = vmatpush1.msra.mxu0 0.0
    %797 = vmatprep.subr.mxu0 0.0
    %798 = vmatpush1.msra.mxu0 0.0
    %799 = vmatprep.subr.mxu0 0.0
    %800 = vmatpush1.msra.mxu0 0.0
    %801 = vmatprep.subr.mxu0 0.0
    %802 = vmatpush1.msra.mxu0 0.0
    %803 = vmatprep.subr.mxu0 0.0
    %804 = vmatpush1.msra.mxu0 0.0
    %805 = vmatprep.subr.mxu0 0.0
    %806 = vmatpush1.msra.mxu0 0.0
    %807 = vmatprep.subr.mxu0 0.0
    %808 = vmatpush1.msra.mxu0 0.0
    %809 = vmatprep.subr.mxu0 0.0
    %810 = vmatpush1.msra.mxu0 0.0
    %811 = vmatprep.subr.mxu0 0.0
    %812 = vmatpush1.msra.mxu0 0.0
    %813 = vmatprep.subr.mxu0 0.0
    %814 = vmatpush1.msra.mxu0 0.0
    %815 = vmatprep.subr.mxu0 0.0
    %816 = vmatpush1.msra.mxu0 0.0
    %817 = vmatprep.subr.mxu0 0.0
    %818 = vmatpush1.msra.mxu0 0.0
    %819 = vmatprep.subr.mxu0 0.0
    %820 = vmatpush1.msra.mxu0 0.0
    %821 = vmatprep.subr.mxu0 0.0
    %822 = vmatpush1.msra.mxu0 0.0
    %823 = vmatprep.subr.mxu0 0.0
    %824 = vmatpush1.msra.mxu0 0.0
    %825 = vmatprep.subr.mxu0 0.0
    %826 = vmatpush1.msra.mxu0 0.0
    %827 = vmatprep.subr.mxu0 0.0
    %828 = vmatpush1.msra.mxu0 0.0
    %829 = vmatprep.subr.mxu0 0.0
    %830 = vmatpush1.msra.mxu0 0.0
    %831 = vmatprep.subr.mxu0 0.0
    %832 = vmatpush1.msra.mxu0 0.0
    %833 = vmatprep.subr.mxu0 0.0
    %834 = vmatpush1.msra.mxu0 0.0
    %835 = vmatprep.subr.mxu0 0.0
    %836 = vmatpush1.msra.mxu0 0.0
    %837 = vmatprep.subr.mxu0 0.0
    %838 = vmatpush1.msra.mxu0 0.0
    %839 = vmatprep.subr.mxu0 0.0
    %840 = vmatpush1.msra.mxu0 0.0
    %841 = vmatprep.subr.mxu0 0.0
    %842 = vmatpush1.msra.mxu0 0.0
    %843 = vmatprep.subr.mxu0 0.0
    %844 = vmatpush1.msra.mxu0 0.0
    %845 = vmatprep.subr.mxu0 0.0
    %846 = vmatpush1.msra.mxu0 0.0
    %847 = vmatprep.mubr.f32.mxu0 0.0
    %v848 = vand.u32 %v87, 4294901760
    %849 = vmatmul.mubr.f32.gmra.mrb[0].mxu0 %v848
    %v850 = vpop.f32.mrb[0].mxu0
    %v851 = vadd.f32 %v734, %v850
    %v852 = vpop.f32.mrb[0].mxu0
    %853 = vmatprep.mubr.f32.mxu0 0.0
    %v854 = vand.u32 %v90, 4294901760
    %855 = vmatmul.mubr.f32.gmra.mrb[0].mxu0 %v854
    %v856 = vpop.f32.mrb[0].mxu0
    %v857 = vadd.f32 %v740, %v856
    %v858 = vpop.f32.mrb[0].mxu0
    %859 = vmatprep.mubr.f32.mxu0 0.0
    %v860 = vand.u32 %v93, 4294901760
    %861 = vmatmul.mubr.f32.gmra.mrb[0].mxu0 %v860
    %v862 = vpop.f32.mrb[0].mxu0
    %v863 = vadd.f32 %v746, %v862
    %v864 = vpop.f32.mrb[0].mxu0
    %865 = vmatprep.mubr.f32.mxu0 0.0
    %v866 = vand.u32 %v96, 4294901760
    %867 = vmatmul.mubr.f32.gmra.mrb[0].mxu0 %v866
    %v868 = vpop.f32.mrb[0].mxu0
    %v869 = vadd.f32 %v752, %v868
    %v870 = vpop.f32.mrb[0].mxu0
    %871 = vmatprep.mubr.f32.mxu0 0.0
    %v872 = vand.u32 %v99, 4294901760
    %873 = vmatmul.mubr.f32.gmra.mrb[0].mxu0 %v872
    %v874 = vpop.f32.mrb[0].mxu0
    %v875 = vadd.f32 %v758, %v874
    %v876 = vpop.f32.mrb[0].mxu0
    %877 = vmatprep.mubr.f32.mxu0 0.0
    %v878 = vand.u32 %v102, 4294901760
    %879 = vmatmul.mubr.f32.gmra.mrb[0].mxu0 %v878
    %v880 = vpop.f32.mrb[0].mxu0
    %v881 = vadd.f32 %v764, %v880
    %v882 = vpop.f32.mrb[0].mxu0
    %883 = vmatprep.mubr.f32.mxu0 0.0
    %v884 = vand.u32 %v105, 4294901760
    %885 = vmatmul.mubr.f32.gmra.mrb[0].mxu0 %v884
    %v886 = vpop.f32.mrb[0].mxu0
    %v887 = vadd.f32 %v770, %v886
    %v888 = vpop.f32.mrb[0].mxu0
    %889 = vmatprep.mubr.f32.mxu0 0.0
    %v890 = vand.u32 %v108, 4294901760
    %891 = vmatmul.mubr.f32.gmra.mrb[0].mxu0 %v890
    %v892 = vpop.f32.mrb[0].mxu0
    %v893 = vadd.f32 %v776, %v892
    %v894 = vpop.f32.mrb[0].mxu0
    %895 = vdwg.mxu0
    %v896 = vld [vmem:[#allocation8] sm:$0xff]
    %v897 = vld [vmem:[#allocation8 + $0x8] sm:$0xff]
    %v898 = vld [vmem:[#allocation8 + $0x10] sm:$0xff]
    %v899 = vld [vmem:[#allocation8 + $0x18] sm:$0xff]
    %v900 = vld [vmem:[%s4] sm:$0x1]
    %v902 = vlaneseq
    %v903 = vshrl.u32 %v902, 7
    %v904 = vsub.s32 0, %v903
    %v905 = vrot.slane %v900, %v904
    %v908 = vsel %vm85, %v80, 0
    %910 = vmatprep.subr.mxu0 0.0
    %v911 = vand.u32 %v896, 4294901760
    %912 = vmatpush1.msra.mxu0 %v911
    %913 = vmatprep.subr.mxu0 0.0
    %v914 = vand.u32 %v897, 4294901760
    %915 = vmatpush1.msra.mxu0 %v914
    %916 = vmatprep.subr.mxu0 0.0
    %v917 = vand.u32 %v898, 4294901760
    %918 = vmatpush1.msra.mxu0 %v917
    %919 = vmatprep.subr.mxu0 0.0
    %v920 = vand.u32 %v899, 4294901760
    %921 = vmatpush1.msra.mxu0 %v920
    %922 = vmatprep.subr.mxu0 0.0
    %923 = vmatpush1.msra.mxu0 0.0
    %924 = vmatprep.subr.mxu0 0.0
    %925 = vmatpush1.msra.mxu0 0.0
    %926 = vmatprep.subr.mxu0 0.0
    %927 = vmatpush1.msra.mxu0 0.0
    %928 = vmatprep.subr.mxu0 0.0
    %929 = vmatpush1.msra.mxu0 0.0
    %930 = vmatprep.subr.mxu0 0.0
    %931 = vmatpush1.msra.mxu0 0.0
    %932 = vmatprep.subr.mxu0 0.0
    %933 = vmatpush1.msra.mxu0 0.0
    %934 = vmatprep.subr.mxu0 0.0
    %935 = vmatpush1.msra.mxu0 0.0
    %936 = vmatprep.subr.mxu0 0.0
    %937 = vmatpush1.msra.mxu0 0.0
    %938 = vmatprep.subr.mxu0 0.0
    %939 = vmatpush1.msra.mxu0 0.0
    %940 = vmatprep.subr.mxu0 0.0
    %941 = vmatpush1.msra.mxu0 0.0
    %942 = vmatprep.subr.mxu0 0.0
    %943 = vmatpush1.msra.mxu0 0.0
    %944 = vmatprep.subr.mxu0 0.0
    %945 = vmatpush1.msra.mxu0 0.0
    %946 = vmatprep.subr.mxu0 0.0
    %947 = vmatpush1.msra.mxu0 0.0
    %948 = vmatprep.subr.mxu0 0.0
    %949 = vmatpush1.msra.mxu0 0.0
    %950 = vmatprep.subr.mxu0 0.0
    %951 = vmatpush1.msra.mxu0 0.0
    %952 = vmatprep.subr.mxu0 0.0
    %953 = vmatpush1.msra.mxu0 0.0
    %954 = vmatprep.subr.mxu0 0.0
    %955 = vmatpush1.msra.mxu0 0.0
    %956 = vmatprep.subr.mxu0 0.0
    %957 = vmatpush1.msra.mxu0 0.0
    %958 = vmatprep.subr.mxu0 0.0
    %959 = vmatpush1.msra.mxu0 0.0
    %960 = vmatprep.subr.mxu0 0.0
    %961 = vmatpush1.msra.mxu0 0.0
    %962 = vmatprep.subr.mxu0 0.0
    %963 = vmatpush1.msra.mxu0 0.0
    %964 = vmatprep.subr.mxu0 0.0
    %965 = vmatpush1.msra.mxu0 0.0
    %966 = vmatprep.subr.mxu0 0.0
    %967 = vmatpush1.msra.mxu0 0.0
    %968 = vmatprep.subr.mxu0 0.0
    %969 = vmatpush1.msra.mxu0 0.0
    %970 = vmatprep.subr.mxu0 0.0
    %971 = vmatpush1.msra.mxu0 0.0
    %972 = vmatprep.subr.mxu0 0.0
    %973 = vmatpush1.msra.mxu0 0.0
    %974 = vmatprep.subr.mxu0 0.0
    %975 = vmatpush1.msra.mxu0 0.0
    %976 = vmatprep.subr.mxu0 0.0
    %977 = vmatpush1.msra.mxu0 0.0
    %978 = vmatprep.mubr.f32.mxu0 0.0
    %v979 = vand.u32 %v908, 4294901760
    %v980 = vsub.f32 %v908, %v979
    %v981 = vand.u32 %v980, 4294901760
    %v982 = vsub.f32 %v980, %v981
    %v983 = vand.u32 %v982, 4294901760
    %984 = vmatmul.mubr.f32.gmra.mrb[0].mxu0 %v983
    %v985 = vpop.f32.mrb[0].mxu0
    %v986 = vadd.f32 %v905, %v985
    %v987 = vpop.f32.mrb[0].mxu0
    %988 = vdwg.mxu0
    %989 = vmatprep.subr.mxu0 0.0
    %v990 = vand.u32 %v896, 4294901760
    %v991 = vsub.f32 %v896, %v990
    %v992 = vand.u32 %v991, 4294901760
    %v993 = vsub.f32 %v991, %v992
    %v994 = vand.u32 %v993, 4294901760
    %995 = vmatpush1.msra.mxu0 %v994
    %996 = vmatprep.subr.mxu0 0.0
    %v997 = vand.u32 %v897, 4294901760
    %v998 = vsub.f32 %v897, %v997
    %v999 = vand.u32 %v998, 4294901760
    %v1000 = vsub.f32 %v998, %v999
    %v1001 = vand.u32 %v1000, 4294901760
    %1002 = vmatpush1.msra.mxu0 %v1001
    %1003 = vmatprep.subr.mxu0 0.0
    %v1004 = vand.u32 %v898, 4294901760
    %v1005 = vsub.f32 %v898, %v1004
    %v1006 = vand.u32 %v1005, 4294901760
    %v1007 = vsub.f32 %v1005, %v1006
    %v1008 = vand.u32 %v1007, 4294901760
    %1009 = vmatpush1.msra.mxu0 %v1008
    %1010 = vmatprep.subr.mxu0 0.0
    %v1011 = vand.u32 %v899, 4294901760
    %v1012 = vsub.f32 %v899, %v1011
    %v1013 = vand.u32 %v1012, 4294901760
    %v1014 = vsub.f32 %v1012, %v1013
    %v1015 = vand.u32 %v1014, 4294901760
    %1016 = vmatpush1.msra.mxu0 %v1015
    %1017 = vmatprep.subr.mxu0 0.0
    %1018 = vmatpush1.msra.mxu0 0.0
    %1019 = vmatprep.subr.mxu0 0.0
    %1020 = vmatpush1.msra.mxu0 0.0
    %1021 = vmatprep.subr.mxu0 0.0
    %1022 = vmatpush1.msra.mxu0 0.0
    %1023 = vmatprep.subr.mxu0 0.0
    %1024 = vmatpush1.msra.mxu0 0.0
    %1025 = vmatprep.subr.mxu0 0.0
    %1026 = vmatpush1.msra.mxu0 0.0
    %1027 = vmatprep.subr.mxu0 0.0
    %1028 = vmatpush1.msra.mxu0 0.0
    %1029 = vmatprep.subr.mxu0 0.0
    %1030 = vmatpush1.msra.mxu0 0.0
    %1031 = vmatprep.subr.mxu0 0.0
    %1032 = vmatpush1.msra.mxu0 0.0
    %1033 = vmatprep.subr.mxu0 0.0
    %1034 = vmatpush1.msra.mxu0 0.0
    %1035 = vmatprep.subr.mxu0 0.0
    %1036 = vmatpush1.msra.mxu0 0.0
    %1037 = vmatprep.subr.mxu0 0.0
    %1038 = vmatpush1.msra.mxu0 0.0
    %1039 = vmatprep.subr.mxu0 0.0
    %1040 = vmatpush1.msra.mxu0 0.0
    %1041 = vmatprep.subr.mxu0 0.0
    %1042 = vmatpush1.msra.mxu0 0.0
    %1043 = vmatprep.subr.mxu0 0.0
    %1044 = vmatpush1.msra.mxu0 0.0
    %1045 = vmatprep.subr.mxu0 0.0
    %1046 = vmatpush1.msra.mxu0 0.0
    %1047 = vmatprep.subr.mxu0 0.0
    %1048 = vmatpush1.msra.mxu0 0.0
    %1049 = vmatprep.subr.mxu0 0.0
    %1050 = vmatpush1.msra.mxu0 0.0
    %1051 = vmatprep.subr.mxu0 0.0
    %1052 = vmatpush1.msra.mxu0 0.0
    %1053 = vmatprep.subr.mxu0 0.0
    %1054 = vmatpush1.msra.mxu0 0.0
    %1055 = vmatprep.subr.mxu0 0.0
    %1056 = vmatpush1.msra.mxu0 0.0
    %1057 = vmatprep.subr.mxu0 0.0
    %1058 = vmatpush1.msra.mxu0 0.0
    %1059 = vmatprep.subr.mxu0 0.0
    %1060 = vmatpush1.msra.mxu0 0.0
    %1061 = vmatprep.subr.mxu0 0.0
    %1062 = vmatpush1.msra.mxu0 0.0
    %1063 = vmatprep.subr.mxu0 0.0
    %1064 = vmatpush1.msra.mxu0 0.0
    %1065 = vmatprep.subr.mxu0 0.0
    %1066 = vmatpush1.msra.mxu0 0.0
    %1067 = vmatprep.subr.mxu0 0.0
    %1068 = vmatpush1.msra.mxu0 0.0
    %1069 = vmatprep.subr.mxu0 0.0
    %1070 = vmatpush1.msra.mxu0 0.0
    %1071 = vmatprep.subr.mxu0 0.0
    %1072 = vmatpush1.msra.mxu0 0.0
    %1073 = vmatprep.mubr.f32.mxu0 0.0
    %v1074 = vand.u32 %v908, 4294901760
    %1075 = vmatmul.mubr.f32.gmra.mrb[0].mxu0 %v1074
    %v1076 = vpop.f32.mrb[0].mxu0
    %v1077 = vadd.f32 %v986, %v1076
    %v1078 = vpop.f32.mrb[0].mxu0
    %1079 = vdwg.mxu0
    %1080 = vmatprep.subr.mxu0 0.0
    %v1081 = vand.u32 %v896, 4294901760
    %v1082 = vsub.f32 %v896, %v1081
    %1083 = vmatpush1.msra.mxu0 %v1082
    %1084 = vmatprep.subr.mxu0 0.0
    %v1085 = vand.u32 %v897, 4294901760
    %v1086 = vsub.f32 %v897, %v1085
    %1087 = vmatpush1.msra.mxu0 %v1086
    %1088 = vmatprep.subr.mxu0 0.0
    %v1089 = vand.u32 %v898, 4294901760
    %v1090 = vsub.f32 %v898, %v1089
    %1091 = vmatpush1.msra.mxu0 %v1090
    %1092 = vmatprep.subr.mxu0 0.0
    %v1093 = vand.u32 %v899, 4294901760
    %v1094 = vsub.f32 %v899, %v1093
    %1095 = vmatpush1.msra.mxu0 %v1094
    %1096 = vmatprep.subr.mxu0 0.0
    %1097 = vmatpush1.msra.mxu0 0.0
    %1098 = vmatprep.subr.mxu0 0.0
    %1099 = vmatpush1.msra.mxu0 0.0
    %1100 = vmatprep.subr.mxu0 0.0
    %1101 = vmatpush1.msra.mxu0 0.0
    %1102 = vmatprep.subr.mxu0 0.0
    %1103 = vmatpush1.msra.mxu0 0.0
    %1104 = vmatprep.subr.mxu0 0.0
    %1105 = vmatpush1.msra.mxu0 0.0
    %1106 = vmatprep.subr.mxu0 0.0
    %1107 = vmatpush1.msra.mxu0 0.0
    %1108 = vmatprep.subr.mxu0 0.0
    %1109 = vmatpush1.msra.mxu0 0.0
    %1110 = vmatprep.subr.mxu0 0.0
    %1111 = vmatpush1.msra.mxu0 0.0
    %1112 = vmatprep.subr.mxu0 0.0
    %1113 = vmatpush1.msra.mxu0 0.0
    %1114 = vmatprep.subr.mxu0 0.0
    %1115 = vmatpush1.msra.mxu0 0.0
    %1116 = vmatprep.subr.mxu0 0.0
    %1117 = vmatpush1.msra.mxu0 0.0
    %1118 = vmatprep.subr.mxu0 0.0
    %1119 = vmatpush1.msra.mxu0 0.0
    %1120 = vmatprep.subr.mxu0 0.0
    %1121 = vmatpush1.msra.mxu0 0.0
    %1122 = vmatprep.subr.mxu0 0.0
    %1123 = vmatpush1.msra.mxu0 0.0
    %1124 = vmatprep.subr.mxu0 0.0
    %1125 = vmatpush1.msra.mxu0 0.0
    %1126 = vmatprep.subr.mxu0 0.0
    %1127 = vmatpush1.msra.mxu0 0.0
    %1128 = vmatprep.subr.mxu0 0.0
    %1129 = vmatpush1.msra.mxu0 0.0
    %1130 = vmatprep.subr.mxu0 0.0
    %1131 = vmatpush1.msra.mxu0 0.0
    %1132 = vmatprep.subr.mxu0 0.0
    %1133 = vmatpush1.msra.mxu0 0.0
    %1134 = vmatprep.subr.mxu0 0.0
    %1135 = vmatpush1.msra.mxu0 0.0
    %1136 = vmatprep.subr.mxu0 0.0
    %1137 = vmatpush1.msra.mxu0 0.0
    %1138 = vmatprep.subr.mxu0 0.0
    %1139 = vmatpush1.msra.mxu0 0.0
    %1140 = vmatprep.subr.mxu0 0.0
    %1141 = vmatpush1.msra.mxu0 0.0
    %1142 = vmatprep.subr.mxu0 0.0
    %1143 = vmatpush1.msra.mxu0 0.0
    %1144 = vmatprep.subr.mxu0 0.0
    %1145 = vmatpush1.msra.mxu0 0.0
    %1146 = vmatprep.subr.mxu0 0.0
    %1147 = vmatpush1.msra.mxu0 0.0
    %1148 = vmatprep.subr.mxu0 0.0
    %1149 = vmatpush1.msra.mxu0 0.0
    %1150 = vmatprep.subr.mxu0 0.0
    %1151 = vmatpush1.msra.mxu0 0.0
    %1152 = vmatprep.mubr.f32.mxu0 0.0
    %v1153 = vand.u32 %v908, 4294901760
    %v1154 = vsub.f32 %v908, %v1153
    %1155 = vmatmul.mubr.f32.gmra.mrb[0].mxu0 %v1154
    %v1156 = vpop.f32.mrb[0].mxu0
    %v1157 = vadd.f32 %v1077, %v1156
    %v1158 = vpop.f32.mrb[0].mxu0
    %1159 = vdwg.mxu0
    %1160 = vmatprep.subr.mxu0 0.0
    %v1161 = vand.u32 %v896, 4294901760
    %1162 = vmatpush1.msra.mxu0 %v1161
    %1163 = vmatprep.subr.mxu0 0.0
    %v1164 = vand.u32 %v897, 4294901760
    %1165 = vmatpush1.msra.mxu0 %v1164
    %1166 = vmatprep.subr.mxu0 0.0
    %v1167 = vand.u32 %v898, 4294901760
    %1168 = vmatpush1.msra.mxu0 %v1167
    %1169 = vmatprep.subr.mxu0 0.0
    %v1170 = vand.u32 %v899, 4294901760
    %1171 = vmatpush1.msra.mxu0 %v1170
    %1172 = vmatprep.subr.mxu0 0.0
    %1173 = vmatpush1.msra.mxu0 0.0
    %1174 = vmatprep.subr.mxu0 0.0
    %1175 = vmatpush1.msra.mxu0 0.0
    %1176 = vmatprep.subr.mxu0 0.0
    %1177 = vmatpush1.msra.mxu0 0.0
    %1178 = vmatprep.subr.mxu0 0.0
    %1179 = vmatpush1.msra.mxu0 0.0
    %1180 = vmatprep.subr.mxu0 0.0
    %1181 = vmatpush1.msra.mxu0 0.0
    %1182 = vmatprep.subr.mxu0 0.0
    %1183 = vmatpush1.msra.mxu0 0.0
    %1184 = vmatprep.subr.mxu0 0.0
    %1185 = vmatpush1.msra.mxu0 0.0
    %1186 = vmatprep.subr.mxu0 0.0
    %1187 = vmatpush1.msra.mxu0 0.0
    %1188 = vmatprep.subr.mxu0 0.0
    %1189 = vmatpush1.msra.mxu0 0.0
    %1190 = vmatprep.subr.mxu0 0.0
    %1191 = vmatpush1.msra.mxu0 0.0
    %1192 = vmatprep.subr.mxu0 0.0
    %1193 = vmatpush1.msra.mxu0 0.0
    %1194 = vmatprep.subr.mxu0 0.0
    %1195 = vmatpush1.msra.mxu0 0.0
    %1196 = vmatprep.subr.mxu0 0.0
    %1197 = vmatpush1.msra.mxu0 0.0
    %1198 = vmatprep.subr.mxu0 0.0
    %1199 = vmatpush1.msra.mxu0 0.0
    %1200 = vmatprep.subr.mxu0 0.0
    %1201 = vmatpush1.msra.mxu0 0.0
    %1202 = vmatprep.subr.mxu0 0.0
    %1203 = vmatpush1.msra.mxu0 0.0
    %1204 = vmatprep.subr.mxu0 0.0
    %1205 = vmatpush1.msra.mxu0 0.0
    %1206 = vmatprep.subr.mxu0 0.0
    %1207 = vmatpush1.msra.mxu0 0.0
    %1208 = vmatprep.subr.mxu0 0.0
    %1209 = vmatpush1.msra.mxu0 0.0
    %1210 = vmatprep.subr.mxu0 0.0
    %1211 = vmatpush1.msra.mxu0 0.0
    %1212 = vmatprep.subr.mxu0 0.0
    %1213 = vmatpush1.msra.mxu0 0.0
    %1214 = vmatprep.subr.mxu0 0.0
    %1215 = vmatpush1.msra.mxu0 0.0
    %1216 = vmatprep.subr.mxu0 0.0
    %1217 = vmatpush1.msra.mxu0 0.0
    %1218 = vmatprep.subr.mxu0 0.0
    %1219 = vmatpush1.msra.mxu0 0.0
    %1220 = vmatprep.subr.mxu0 0.0
    %1221 = vmatpush1.msra.mxu0 0.0
    %1222 = vmatprep.subr.mxu0 0.0
    %1223 = vmatpush1.msra.mxu0 0.0
    %1224 = vmatprep.subr.mxu0 0.0
    %1225 = vmatpush1.msra.mxu0 0.0
    %1226 = vmatprep.subr.mxu0 0.0
    %1227 = vmatpush1.msra.mxu0 0.0
    %1228 = vmatprep.mubr.f32.mxu0 0.0
    %v1229 = vand.u32 %v908, 4294901760
    %v1230 = vsub.f32 %v908, %v1229
    %v1231 = vand.u32 %v1230, 4294901760
    %1232 = vmatmul.mubr.f32.gmra.mrb[0].mxu0 %v1231
    %v1233 = vpop.f32.mrb[0].mxu0
    %v1234 = vadd.f32 %v1157, %v1233
    %v1235 = vpop.f32.mrb[0].mxu0
    %1236 = vdwg.mxu0
    %1237 = vmatprep.subr.mxu0 0.0
    %v1238 = vand.u32 %v896, 4294901760
    %v1239 = vsub.f32 %v896, %v1238
    %v1240 = vand.u32 %v1239, 4294901760
    %1241 = vmatpush1.msra.mxu0 %v1240
    %1242 = vmatprep.subr.mxu0 0.0
    %v1243 = vand.u32 %v897, 4294901760
    %v1244 = vsub.f32 %v897, %v1243
    %v1245 = vand.u32 %v1244, 4294901760
    %1246 = vmatpush1.msra.mxu0 %v1245
    %1247 = vmatprep.subr.mxu0 0.0
    %v1248 = vand.u32 %v898, 4294901760
    %v1249 = vsub.f32 %v898, %v1248
    %v1250 = vand.u32 %v1249, 4294901760
    %1251 = vmatpush1.msra.mxu0 %v1250
    %1252 = vmatprep.subr.mxu0 0.0
    %v1253 = vand.u32 %v899, 4294901760
    %v1254 = vsub.f32 %v899, %v1253
    %v1255 = vand.u32 %v1254, 4294901760
    %1256 = vmatpush1.msra.mxu0 %v1255
    %1257 = vmatprep.subr.mxu0 0.0
    %1258 = vmatpush1.msra.mxu0 0.0
    %1259 = vmatprep.subr.mxu0 0.0
    %1260 = vmatpush1.msra.mxu0 0.0
    %1261 = vmatprep.subr.mxu0 0.0
    %1262 = vmatpush1.msra.mxu0 0.0
    %1263 = vmatprep.subr.mxu0 0.0
    %1264 = vmatpush1.msra.mxu0 0.0
    %1265 = vmatprep.subr.mxu0 0.0
    %1266 = vmatpush1.msra.mxu0 0.0
    %1267 = vmatprep.subr.mxu0 0.0
    %1268 = vmatpush1.msra.mxu0 0.0
    %1269 = vmatprep.subr.mxu0 0.0
    %1270 = vmatpush1.msra.mxu0 0.0
    %1271 = vmatprep.subr.mxu0 0.0
    %1272 = vmatpush1.msra.mxu0 0.0
    %1273 = vmatprep.subr.mxu0 0.0
    %1274 = vmatpush1.msra.mxu0 0.0
    %1275 = vmatprep.subr.mxu0 0.0
    %1276 = vmatpush1.msra.mxu0 0.0
    %1277 = vmatprep.subr.mxu0 0.0
    %1278 = vmatpush1.msra.mxu0 0.0
    %1279 = vmatprep.subr.mxu0 0.0
    %1280 = vmatpush1.msra.mxu0 0.0
    %1281 = vmatprep.subr.mxu0 0.0
    %1282 = vmatpush1.msra.mxu0 0.0
    %1283 = vmatprep.subr.mxu0 0.0
    %1284 = vmatpush1.msra.mxu0 0.0
    %1285 = vmatprep.subr.mxu0 0.0
    %1286 = vmatpush1.msra.mxu0 0.0
    %1287 = vmatprep.subr.mxu0 0.0
    %1288 = vmatpush1.msra.mxu0 0.0
    %1289 = vmatprep.subr.mxu0 0.0
    %1290 = vmatpush1.msra.mxu0 0.0
    %1291 = vmatprep.subr.mxu0 0.0
    %1292 = vmatpush1.msra.mxu0 0.0
    %1293 = vmatprep.subr.mxu0 0.0
    %1294 = vmatpush1.msra.mxu0 0.0
    %1295 = vmatprep.subr.mxu0 0.0
    %1296 = vmatpush1.msra.mxu0 0.0
    %1297 = vmatprep.subr.mxu0 0.0
    %1298 = vmatpush1.msra.mxu0 0.0
    %1299 = vmatprep.subr.mxu0 0.0
    %1300 = vmatpush1.msra.mxu0 0.0
    %1301 = vmatprep.subr.mxu0 0.0
    %1302 = vmatpush1.msra.mxu0 0.0
    %1303 = vmatprep.subr.mxu0 0.0
    %1304 = vmatpush1.msra.mxu0 0.0
    %1305 = vmatprep.subr.mxu0 0.0
    %1306 = vmatpush1.msra.mxu0 0.0
    %1307 = vmatprep.subr.mxu0 0.0
    %1308 = vmatpush1.msra.mxu0 0.0
    %1309 = vmatprep.subr.mxu0 0.0
    %1310 = vmatpush1.msra.mxu0 0.0
    %1311 = vmatprep.subr.mxu0 0.0
    %1312 = vmatpush1.msra.mxu0 0.0
    %1313 = vmatprep.mubr.f32.mxu0 0.0
    %v1314 = vand.u32 %v908, 4294901760
    %1315 = vmatmul.mubr.f32.gmra.mrb[0].mxu0 %v1314
    %v1316 = vpop.f32.mrb[0].mxu0
    %v1317 = vadd.f32 %v1234, %v1316
    %v1318 = vpop.f32.mrb[0].mxu0
    %1319 = vdwg.mxu0
    %1320 = vmatprep.subr.mxu0 0.0
    %v1321 = vand.u32 %v896, 4294901760
    %1322 = vmatpush1.msra.mxu0 %v1321
    %1323 = vmatprep.subr.mxu0 0.0
    %v1324 = vand.u32 %v897, 4294901760
    %1325 = vmatpush1.msra.mxu0 %v1324
    %1326 = vmatprep.subr.mxu0 0.0
    %v1327 = vand.u32 %v898, 4294901760
    %1328 = vmatpush1.msra.mxu0 %v1327
    %1329 = vmatprep.subr.mxu0 0.0
    %v1330 = vand.u32 %v899, 4294901760
    %1331 = vmatpush1.msra.mxu0 %v1330
    %1332 = vmatprep.subr.mxu0 0.0
    %1333 = vmatpush1.msra.mxu0 0.0
    %1334 = vmatprep.subr.mxu0 0.0
    %1335 = vmatpush1.msra.mxu0 0.0
    %1336 = vmatprep.subr.mxu0 0.0
    %1337 = vmatpush1.msra.mxu0 0.0
    %1338 = vmatprep.subr.mxu0 0.0
    %1339 = vmatpush1.msra.mxu0 0.0
    %1340 = vmatprep.subr.mxu0 0.0
    %1341 = vmatpush1.msra.mxu0 0.0
    %1342 = vmatprep.subr.mxu0 0.0
    %1343 = vmatpush1.msra.mxu0 0.0
    %1344 = vmatprep.subr.mxu0 0.0
    %1345 = vmatpush1.msra.mxu0 0.0
    %1346 = vmatprep.subr.mxu0 0.0
    %1347 = vmatpush1.msra.mxu0 0.0
    %1348 = vmatprep.subr.mxu0 0.0
    %1349 = vmatpush1.msra.mxu0 0.0
    %1350 = vmatprep.subr.mxu0 0.0
    %1351 = vmatpush1.msra.mxu0 0.0
    %1352 = vmatprep.subr.mxu0 0.0
    %1353 = vmatpush1.msra.mxu0 0.0
    %1354 = vmatprep.subr.mxu0 0.0
    %1355 = vmatpush1.msra.mxu0 0.0
    %1356 = vmatprep.subr.mxu0 0.0
    %1357 = vmatpush1.msra.mxu0 0.0
    %1358 = vmatprep.subr.mxu0 0.0
    %1359 = vmatpush1.msra.mxu0 0.0
    %1360 = vmatprep.subr.mxu0 0.0
    %1361 = vmatpush1.msra.mxu0 0.0
    %1362 = vmatprep.subr.mxu0 0.0
    %1363 = vmatpush1.msra.mxu0 0.0
    %1364 = vmatprep.subr.mxu0 0.0
    %1365 = vmatpush1.msra.mxu0 0.0
    %1366 = vmatprep.subr.mxu0 0.0
    %1367 = vmatpush1.msra.mxu0 0.0
    %1368 = vmatprep.subr.mxu0 0.0
    %1369 = vmatpush1.msra.mxu0 0.0
    %1370 = vmatprep.subr.mxu0 0.0
    %1371 = vmatpush1.msra.mxu0 0.0
    %1372 = vmatprep.subr.mxu0 0.0
    %1373 = vmatpush1.msra.mxu0 0.0
    %1374 = vmatprep.subr.mxu0 0.0
    %1375 = vmatpush1.msra.mxu0 0.0
    %1376 = vmatprep.subr.mxu0 0.0
    %1377 = vmatpush1.msra.mxu0 0.0
    %1378 = vmatprep.subr.mxu0 0.0
    %1379 = vmatpush1.msra.mxu0 0.0
    %1380 = vmatprep.subr.mxu0 0.0
    %1381 = vmatpush1.msra.mxu0 0.0
    %1382 = vmatprep.subr.mxu0 0.0
    %1383 = vmatpush1.msra.mxu0 0.0
    %1384 = vmatprep.subr.mxu0 0.0
    %1385 = vmatpush1.msra.mxu0 0.0
    %1386 = vmatprep.subr.mxu0 0.0
    %1387 = vmatpush1.msra.mxu0 0.0
    %1388 = vmatprep.mubr.f32.mxu0 0.0
    %v1389 = vand.u32 %v908, 4294901760
    %1390 = vmatmul.mubr.f32.gmra.mrb[0].mxu0 %v1389
    %v1391 = vpop.f32.mrb[0].mxu0
    %v1392 = vadd.f32 %v1317, %v1391
    %v1393 = vpop.f32.mrb[0].mxu0
    %1394 = vdwg.mxu0
    %v1397 = vunpack.c.l.s4 1966171168
    %v1398 = vunpack.c.0.s8 %v1397
    %v1399 = vlaneseq
    %v1400 = vshrl.u32 %v1399, 7
    %v1401 = vsub.s32 %v1398, %v1400
    %v1402 = vrot.slane %v1392, %v1401
    %v1403 = vcombine.high %v1402, %v1402
    %v1405 = vunpack.c.l.s4 1966171168
    %v1406 = vunpack.c.0.s8 %v1405
    %v1407 = vlaneseq
    %v1408 = vshrl.u32 %v1407, 7
    %v1409 = vsub.s32 %v1406, %v1408
    %v1410 = vrot.slane %v1402, %v1409
    %v1412 = vunpack.c.l.s4 1966171168
    %v1413 = vunpack.c.0.s8 %v1412
    %v1414 = vlaneseq
    %v1415 = vshrl.u32 %v1414, 7
    %v1416 = vsub.s32 %v1413, %v1415
    %v1417 = vrot.slane %v1403, %v1416
    %v1418 = vcombine.high %v1410, %v1410
    %v1419 = vcombine.high %v1417, %v1417
    %v1420 = vlaneseq
    %v1421 = vshrl.u32 %v1420, 7
    %v1422 = vsub.s32 0, %v1421
    %v1423 = vrot.slane %v1410, %v1422
    %v1424 = vlaneseq
    %v1425 = vshrl.u32 %v1424, 7
    %v1426 = vsub.s32 0, %v1425
    %v1427 = vrot.slane %v1417, %v1426
    %v1428 = vlaneseq
    %v1429 = vshrl.u32 %v1428, 7
    %v1430 = vsub.s32 0, %v1429
    %v1431 = vrot.slane %v1418, %v1430
    %v1432 = vlaneseq
    %v1433 = vshrl.u32 %v1432, 7
    %v1434 = vsub.s32 0, %v1433
    %v1435 = vrot.slane %v1419, %v1434
    %v1440 = vadd.f32 %v851, %v1423
    %v1441 = vadd.f32 %v857, %v1423
    %v1442 = vadd.f32 %v863, %v1427
    %v1443 = vadd.f32 %v869, %v1427
    %v1444 = vadd.f32 %v875, %v1431
    %v1445 = vadd.f32 %v881, %v1431
    %v1446 = vadd.f32 %v887, %v1435
    %v1447 = vadd.f32 %v893, %v1435
    %v1448 = vmax.f32 %v1440, 0.0
    %v1449 = vmax.f32 %v1441, 0.0
    %v1450 = vmax.f32 %v1442, 0.0
    %v1451 = vmax.f32 %v1443, 0.0
    %v1452 = vmax.f32 %v1444, 0.0
    %v1453 = vmax.f32 %v1445, 0.0
    %v1454 = vmax.f32 %v1446, 0.0
    %v1455 = vmax.f32 %v1447, 0.0
    %v1456 = vld [vmem:[%s5] sm:$0x1]
    %v1458 = vlaneseq
    %v1459 = vshrl.u32 %v1458, 7
    %v1460 = vsub.s32 0, %v1459
    %v1461 = vrot.slane %v1456, %v1460
    %v1463 = vmul.f32 %v1448, %v1461
    %v1464 = vmul.f32 %v1449, %v1461
    %v1465 = vmul.f32 %v1450, %v1461
    %v1466 = vmul.f32 %v1451, %v1461
    %v1467 = vmul.f32 %v1452, %v1461
    %v1468 = vmul.f32 %v1453, %v1461
    %v1469 = vmul.f32 %v1454, %v1461
    %v1470 = vmul.f32 %v1455, %v1461
    %v1471 = vsel %vm85, %v1463, 0.0
    %1472 = vadd.xlane.f32.xlu0 %v1471
    %v1473 = vpop.xlane.xlu0 %1472
    %v1474 = vsel %vm85, %v1464, 0.0
    %1475 = vadd.xlane.f32.xlu0 %v1474
    %v1476 = vpop.xlane.xlu0 %1475
    %v1477 = vsel %vm85, %v1465, 0.0
    %1478 = vadd.xlane.f32.xlu0 %v1477
    %v1479 = vpop.xlane.xlu0 %1478
    %v1480 = vsel %vm85, %v1466, 0.0
    %1481 = vadd.xlane.f32.xlu0 %v1480
    %v1482 = vpop.xlane.xlu0 %1481
    %v1483 = vsel %vm85, %v1467, 0.0
    %1484 = vadd.xlane.f32.xlu0 %v1483
    %v1485 = vpop.xlane.xlu0 %1484
    %v1486 = vsel %vm85, %v1468, 0.0
    %1487 = vadd.xlane.f32.xlu0 %v1486
    %v1488 = vpop.xlane.xlu0 %1487
    %v1489 = vsel %vm85, %v1469, 0.0
    %1490 = vadd.xlane.f32.xlu0 %v1489
    %v1491 = vpop.xlane.xlu0 %1490
    %v1492 = vsel %vm85, %v1470, 0.0
    %1493 = vadd.xlane.f32.xlu0 %v1492
    %v1494 = vpop.xlane.xlu0 %1493
    %s1495 = sld [smem:[#allocation2]]
    %v1496 = vstv %s1495
    %v1497 = vadd.f32 %v1473, %v1496
    %v1498 = vadd.f32 %v1476, %v1496
    %v1499 = vadd.f32 %v1479, %v1496
    %v1500 = vadd.f32 %v1482, %v1496
    %v1501 = vadd.f32 %v1485, %v1496
    %v1502 = vadd.f32 %v1488, %v1496
    %v1503 = vadd.f32 %v1491, %v1496
    %v1504 = vadd.f32 %v1494, %v1496
    %v1505 = vlaneseq
    %v1506 = vand.u32 %v1505, 127
    %vm1507 = vcmp.lt.s32.totalorder %v1506, 14
    %v1516 = vlaneseq
    %v1517 = vshrl.u32 %v1516, 7
    %v1518 = vsub.s32 %v1506, %v1517
    %v1519 = vrot.slane %v1497, %v1518
    %v1520 = vadd.s32 %v1506, 4294967288
    %v1521 = vlaneseq
    %v1522 = vshrl.u32 %v1521, 7
    %v1523 = vsub.s32 %v1520, %v1522
    %v1524 = vrot.slane %v1498, %v1523
    %vm1525 = vcmask 130112
    %v1526 = vsel %vm1525, %v1524, %v1519
    %v1527 = vlaneseq
    %v1528 = vshrl.u32 %v1527, 7
    %v1529 = vsub.s32 %v1506, %v1528
    %v1530 = vrot.slane %v1499, %v1529
    %v1531 = vlaneseq
    %v1532 = vshrl.u32 %v1531, 7
    %v1533 = vsub.s32 %v1520, %v1532
    %v1534 = vrot.slane %v1500, %v1533
    %v1535 = vsel %vm1525, %v1534, %v1530
    %v1536 = vlaneseq
    %v1537 = vshrl.u32 %v1536, 7
    %v1538 = vsub.s32 %v1506, %v1537
    %v1539 = vrot.slane %v1501, %v1538
    %v1540 = vlaneseq
    %v1541 = vshrl.u32 %v1540, 7
    %v1542 = vsub.s32 %v1520, %v1541
    %v1543 = vrot.slane %v1502, %v1542
    %v1544 = vsel %vm1525, %v1543, %v1539
    %v1545 = vlaneseq
    %v1546 = vshrl.u32 %v1545, 7
    %v1547 = vsub.s32 %v1506, %v1546
    %v1548 = vrot.slane %v1503, %v1547
    %v1549 = vlaneseq
    %v1550 = vshrl.u32 %v1549, 7
    %v1551 = vsub.s32 %v1520, %v1550
    %v1552 = vrot.slane %v1504, %v1551
    %v1553 = vsel %vm1525, %v1552, %v1548
    %vm1554 = vcmask 1041409
    %v1555 = vsel %vm1554, %v1535, %v1526
    %vm1556 = vcmask 1042434
    %v1557 = vsel %vm1556, %v1544, %v1555
    %vm1558 = vcmask 1043459
    %v1559 = vsel %vm1558, %v1553, %v1557
    %v1561 = vsel %vm1507, %v1559, -inf
    %vm1562 = vcmask 125952
    %v1563 = vsel %vm1562, %v1561, -inf
    %1564 = vmax.xlane.f32.xlu0 %v1563
    %v1565 = vpop.xlane.xlu0 %1564
    %v1566 = vsub.f32 %v1561, %v1565
    %v1567 = vmul.f32 %v1566, 1.442695
    %v1568 = vpow.pop %v1567
    %v1569 = vsel %vm1562, %v1568, 0.0
    %1570 = vadd.xlane.f32.xlu0 %v1569
    %v1571 = vpop.xlane.xlu0 %1570
    %v1572 = vrcp.pop %v1571
    %v1573 = vmul.f32 %v1568, %v1572
    %v1576 = vunpack.c.l.s4 1966171168
    %v1577 = vunpack.c.0.s8 %v1576
    %v1578 = vlaneseq
    %v1579 = vshrl.u32 %v1578, 7
    %v1580 = vsub.s32 %v1577, %v1579
    %v1581 = vrot.slane %v1573, %v1580
    %v1582 = vcombine.high %v1581, %v1581
    %v1584 = vunpack.c.l.s4 1966171168
    %v1585 = vunpack.c.0.s8 %v1584
    %v1586 = vlaneseq
    %v1587 = vshrl.u32 %v1586, 7
    %v1588 = vsub.s32 %v1585, %v1587
    %v1589 = vrot.slane %v1581, %v1588
    %v1591 = vunpack.c.l.s4 1966171168
    %v1592 = vunpack.c.0.s8 %v1591
    %v1593 = vlaneseq
    %v1594 = vshrl.u32 %v1593, 7
    %v1595 = vsub.s32 %v1592, %v1594
    %v1596 = vrot.slane %v1582, %v1595
    %v1597 = vcombine.high %v1589, %v1589
    %v1598 = vcombine.high %v1596, %v1596
    %vm1599 = vcmask 130048
    %v1600 = vsel %vm1599, %v1589, 0
    %1602 = vmatprep.subr.mxu0 0.0
    %v1603 = vand.u32 %v72, 4294901760
    %1604 = vmatpush1.msra.mxu0 %v1603
    %1605 = vmatprep.subr.mxu0 0.0
    %v1606 = vand.u32 %v73, 4294901760
    %1607 = vmatpush1.msra.mxu0 %v1606
    %1608 = vmatprep.subr.mxu0 0.0
    %1609 = vmatpush1.msra.mxu0 0.0
    %1610 = vmatprep.subr.mxu0 0.0
    %1611 = vmatpush1.msra.mxu0 0.0
    %1612 = vmatprep.subr.mxu0 0.0
    %1613 = vmatpush1.msra.mxu0 0.0
    %1614 = vmatprep.subr.mxu0 0.0
    %1615 = vmatpush1.msra.mxu0 0.0
    %1616 = vmatprep.subr.mxu0 0.0
    %1617 = vmatpush1.msra.mxu0 0.0
    %1618 = vmatprep.subr.mxu0 0.0
    %1619 = vmatpush1.msra.mxu0 0.0
    %1620 = vmatprep.subr.mxu0 0.0
    %1621 = vmatpush1.msra.mxu0 0.0
    %1622 = vmatprep.subr.mxu0 0.0
    %1623 = vmatpush1.msra.mxu0 0.0
    %1624 = vmatprep.subr.mxu0 0.0
    %1625 = vmatpush1.msra.mxu0 0.0
    %1626 = vmatprep.subr.mxu0 0.0
    %1627 = vmatpush1.msra.mxu0 0.0
    %1628 = vmatprep.subr.mxu0 0.0
    %1629 = vmatpush1.msra.mxu0 0.0
    %1630 = vmatprep.subr.mxu0 0.0
    %1631 = vmatpush1.msra.mxu0 0.0
    %1632 = vmatprep.subr.mxu0 0.0
    %1633 = vmatpush1.msra.mxu0 0.0
    %1634 = vmatprep.subr.mxu0 0.0
    %1635 = vmatpush1.msra.mxu0 0.0
    %1636 = vmatprep.subr.mxu0 0.0
    %1637 = vmatpush1.msra.mxu0 0.0
    %1638 = vmatprep.subr.mxu0 0.0
    %1639 = vmatpush1.msra.mxu0 0.0
    %1640 = vmatprep.subr.mxu0 0.0
    %1641 = vmatpush1.msra.mxu0 0.0
    %1642 = vmatprep.subr.mxu0 0.0
    %1643 = vmatpush1.msra.mxu0 0.0
    %1644 = vmatprep.subr.mxu0 0.0
    %1645 = vmatpush1.msra.mxu0 0.0
    %1646 = vmatprep.subr.mxu0 0.0
    %1647 = vmatpush1.msra.mxu0 0.0
    %1648 = vmatprep.subr.mxu0 0.0
    %1649 = vmatpush1.msra.mxu0 0.0
    %1650 = vmatprep.subr.mxu0 0.0
    %1651 = vmatpush1.msra.mxu0 0.0
    %1652 = vmatprep.subr.mxu0 0.0
    %1653 = vmatpush1.msra.mxu0 0.0
    %1654 = vmatprep.subr.mxu0 0.0
    %1655 = vmatpush1.msra.mxu0 0.0
    %1656 = vmatprep.subr.mxu0 0.0
    %1657 = vmatpush1.msra.mxu0 0.0
    %1658 = vmatprep.subr.mxu0 0.0
    %1659 = vmatpush1.msra.mxu0 0.0
    %1660 = vmatprep.subr.mxu0 0.0
    %1661 = vmatpush1.msra.mxu0 0.0
    %1662 = vmatprep.subr.mxu0 0.0
    %1663 = vmatpush1.msra.mxu0 0.0
    %1664 = vmatprep.subr.mxu0 0.0
    %1665 = vmatpush1.msra.mxu0 0.0
    %1666 = vmatprep.subr.mxu0 0.0
    %1667 = vmatpush1.msra.mxu0 0.0
    %1668 = vmatprep.mubr.f32.mxu0 0.0
    %v1669 = vand.u32 %v1600, 4294901760
    %v1670 = vsub.f32 %v1600, %v1669
    %v1671 = vand.u32 %v1670, 4294901760
    %v1672 = vsub.f32 %v1670, %v1671
    %v1673 = vand.u32 %v1672, 4294901760
    %1674 = vmatmul.mubr.f32.gmra.mrb[0].mxu0 %v1673
    %v1675 = vpop.f32.mrb[0].mxu0
    %v1676 = vadd.f32 0.0, %v1675
    %v1677 = vpop.f32.mrb[0].mxu0
    %1678 = vdwg.mxu0
    %1679 = vmatprep.subr.mxu0 0.0
    %v1680 = vand.u32 %v72, 4294901760
    %v1681 = vsub.f32 %v72, %v1680
    %v1682 = vand.u32 %v1681, 4294901760
    %v1683 = vsub.f32 %v1681, %v1682
    %v1684 = vand.u32 %v1683, 4294901760
    %1685 = vmatpush1.msra.mxu0 %v1684
    %1686 = vmatprep.subr.mxu0 0.0
    %v1687 = vand.u32 %v73, 4294901760
    %v1688 = vsub.f32 %v73, %v1687
    %v1689 = vand.u32 %v1688, 4294901760
    %v1690 = vsub.f32 %v1688, %v1689
    %v1691 = vand.u32 %v1690, 4294901760
    %1692 = vmatpush1.msra.mxu0 %v1691
    %1693 = vmatprep.subr.mxu0 0.0
    %1694 = vmatpush1.msra.mxu0 0.0
    %1695 = vmatprep.subr.mxu0 0.0
    %1696 = vmatpush1.msra.mxu0 0.0
    %1697 = vmatprep.subr.mxu0 0.0
    %1698 = vmatpush1.msra.mxu0 0.0
    %1699 = vmatprep.subr.mxu0 0.0
    %1700 = vmatpush1.msra.mxu0 0.0
    %1701 = vmatprep.subr.mxu0 0.0
    %1702 = vmatpush1.msra.mxu0 0.0
    %1703 = vmatprep.subr.mxu0 0.0
    %1704 = vmatpush1.msra.mxu0 0.0
    %1705 = vmatprep.subr.mxu0 0.0
    %1706 = vmatpush1.msra.mxu0 0.0
    %1707 = vmatprep.subr.mxu0 0.0
    %1708 = vmatpush1.msra.mxu0 0.0
    %1709 = vmatprep.subr.mxu0 0.0
    %1710 = vmatpush1.msra.mxu0 0.0
    %1711 = vmatprep.subr.mxu0 0.0
    %1712 = vmatpush1.msra.mxu0 0.0
    %1713 = vmatprep.subr.mxu0 0.0
    %1714 = vmatpush1.msra.mxu0 0.0
    %1715 = vmatprep.subr.mxu0 0.0
    %1716 = vmatpush1.msra.mxu0 0.0
    %1717 = vmatprep.subr.mxu0 0.0
    %1718 = vmatpush1.msra.mxu0 0.0
    %1719 = vmatprep.subr.mxu0 0.0
    %1720 = vmatpush1.msra.mxu0 0.0
    %1721 = vmatprep.subr.mxu0 0.0
    %1722 = vmatpush1.msra.mxu0 0.0
    %1723 = vmatprep.subr.mxu0 0.0
    %1724 = vmatpush1.msra.mxu0 0.0
    %1725 = vmatprep.subr.mxu0 0.0
    %1726 = vmatpush1.msra.mxu0 0.0
    %1727 = vmatprep.subr.mxu0 0.0
    %1728 = vmatpush1.msra.mxu0 0.0
    %1729 = vmatprep.subr.mxu0 0.0
    %1730 = vmatpush1.msra.mxu0 0.0
    %1731 = vmatprep.subr.mxu0 0.0
    %1732 = vmatpush1.msra.mxu0 0.0
    %1733 = vmatprep.subr.mxu0 0.0
    %1734 = vmatpush1.msra.mxu0 0.0
    %1735 = vmatprep.subr.mxu0 0.0
    %1736 = vmatpush1.msra.mxu0 0.0
    %1737 = vmatprep.subr.mxu0 0.0
    %1738 = vmatpush1.msra.mxu0 0.0
    %1739 = vmatprep.subr.mxu0 0.0
    %1740 = vmatpush1.msra.mxu0 0.0
    %1741 = vmatprep.subr.mxu0 0.0
    %1742 = vmatpush1.msra.mxu0 0.0
    %1743 = vmatprep.subr.mxu0 0.0
    %1744 = vmatpush1.msra.mxu0 0.0
    %1745 = vmatprep.subr.mxu0 0.0
    %1746 = vmatpush1.msra.mxu0 0.0
    %1747 = vmatprep.subr.mxu0 0.0
    %1748 = vmatpush1.msra.mxu0 0.0
    %1749 = vmatprep.subr.mxu0 0.0
    %1750 = vmatpush1.msra.mxu0 0.0
    %1751 = vmatprep.subr.mxu0 0.0
    %1752 = vmatpush1.msra.mxu0 0.0
    %1753 = vmatprep.mubr.f32.mxu0 0.0
    %v1754 = vand.u32 %v1600, 4294901760
    %1755 = vmatmul.mubr.f32.gmra.mrb[0].mxu0 %v1754
    %v1756 = vpop.f32.mrb[0].mxu0
    %v1757 = vadd.f32 %v1676, %v1756
    %v1758 = vpop.f32.mrb[0].mxu0
    %1759 = vdwg.mxu0
    %1760 = vmatprep.subr.mxu0 0.0
    %v1761 = vand.u32 %v72, 4294901760
    %v1762 = vsub.f32 %v72, %v1761
    %1763 = vmatpush1.msra.mxu0 %v1762
    %1764 = vmatprep.subr.mxu0 0.0
    %v1765 = vand.u32 %v73, 4294901760
    %v1766 = vsub.f32 %v73, %v1765
    %1767 = vmatpush1.msra.mxu0 %v1766
    %1768 = vmatprep.subr.mxu0 0.0
    %1769 = vmatpush1.msra.mxu0 0.0
    %1770 = vmatprep.subr.mxu0 0.0
    %1771 = vmatpush1.msra.mxu0 0.0
    %1772 = vmatprep.subr.mxu0 0.0
    %1773 = vmatpush1.msra.mxu0 0.0
    %1774 = vmatprep.subr.mxu0 0.0
    %1775 = vmatpush1.msra.mxu0 0.0
    %1776 = vmatprep.subr.mxu0 0.0
    %1777 = vmatpush1.msra.mxu0 0.0
    %1778 = vmatprep.subr.mxu0 0.0
    %1779 = vmatpush1.msra.mxu0 0.0
    %1780 = vmatprep.subr.mxu0 0.0
    %1781 = vmatpush1.msra.mxu0 0.0
    %1782 = vmatprep.subr.mxu0 0.0
    %1783 = vmatpush1.msra.mxu0 0.0
    %1784 = vmatprep.subr.mxu0 0.0
    %1785 = vmatpush1.msra.mxu0 0.0
    %1786 = vmatprep.subr.mxu0 0.0
    %1787 = vmatpush1.msra.mxu0 0.0
    %1788 = vmatprep.subr.mxu0 0.0
    %1789 = vmatpush1.msra.mxu0 0.0
    %1790 = vmatprep.subr.mxu0 0.0
    %1791 = vmatpush1.msra.mxu0 0.0
    %1792 = vmatprep.subr.mxu0 0.0
    %1793 = vmatpush1.msra.mxu0 0.0
    %1794 = vmatprep.subr.mxu0 0.0
    %1795 = vmatpush1.msra.mxu0 0.0
    %1796 = vmatprep.subr.mxu0 0.0
    %1797 = vmatpush1.msra.mxu0 0.0
    %1798 = vmatprep.subr.mxu0 0.0
    %1799 = vmatpush1.msra.mxu0 0.0
    %1800 = vmatprep.subr.mxu0 0.0
    %1801 = vmatpush1.msra.mxu0 0.0
    %1802 = vmatprep.subr.mxu0 0.0
    %1803 = vmatpush1.msra.mxu0 0.0
    %1804 = vmatprep.subr.mxu0 0.0
    %1805 = vmatpush1.msra.mxu0 0.0
    %1806 = vmatprep.subr.mxu0 0.0
    %1807 = vmatpush1.msra.mxu0 0.0
    %1808 = vmatprep.subr.mxu0 0.0
    %1809 = vmatpush1.msra.mxu0 0.0
    %1810 = vmatprep.subr.mxu0 0.0
    %1811 = vmatpush1.msra.mxu0 0.0
    %1812 = vmatprep.subr.mxu0 0.0
    %1813 = vmatpush1.msra.mxu0 0.0
    %1814 = vmatprep.subr.mxu0 0.0
    %1815 = vmatpush1.msra.mxu0 0.0
    %1816 = vmatprep.subr.mxu0 0.0
    %1817 = vmatpush1.msra.mxu0 0.0
    %1818 = vmatprep.subr.mxu0 0.0
    %1819 = vmatpush1.msra.mxu0 0.0
    %1820 = vmatprep.subr.mxu0 0.0
    %1821 = vmatpush1.msra.mxu0 0.0
    %1822 = vmatprep.subr.mxu0 0.0
    %1823 = vmatpush1.msra.mxu0 0.0
    %1824 = vmatprep.subr.mxu0 0.0
    %1825 = vmatpush1.msra.mxu0 0.0
    %1826 = vmatprep.subr.mxu0 0.0
    %1827 = vmatpush1.msra.mxu0 0.0
    %1828 = vmatprep.mubr.f32.mxu0 0.0
    %v1829 = vand.u32 %v1600, 4294901760
    %v1830 = vsub.f32 %v1600, %v1829
    %1831 = vmatmul.mubr.f32.gmra.mrb[0].mxu0 %v1830
    %v1832 = vpop.f32.mrb[0].mxu0
    %v1833 = vadd.f32 %v1757, %v1832
    %v1834 = vpop.f32.mrb[0].mxu0
    %1835 = vdwg.mxu0
    %1836 = vmatprep.subr.mxu0 0.0
    %v1837 = vand.u32 %v72, 4294901760
    %1838 = vmatpush1.msra.mxu0 %v1837
    %1839 = vmatprep.subr.mxu0 0.0
    %v1840 = vand.u32 %v73, 4294901760
    %1841 = vmatpush1.msra.mxu0 %v1840
    %1842 = vmatprep.subr.mxu0 0.0
    %1843 = vmatpush1.msra.mxu0 0.0
    %1844 = vmatprep.subr.mxu0 0.0
    %1845 = vmatpush1.msra.mxu0 0.0
    %1846 = vmatprep.subr.mxu0 0.0
    %1847 = vmatpush1.msra.mxu0 0.0
    %1848 = vmatprep.subr.mxu0 0.0
    %1849 = vmatpush1.msra.mxu0 0.0
    %1850 = vmatprep.subr.mxu0 0.0
    %1851 = vmatpush1.msra.mxu0 0.0
    %1852 = vmatprep.subr.mxu0 0.0
    %1853 = vmatpush1.msra.mxu0 0.0
    %1854 = vmatprep.subr.mxu0 0.0
    %1855 = vmatpush1.msra.mxu0 0.0
    %1856 = vmatprep.subr.mxu0 0.0
    %1857 = vmatpush1.msra.mxu0 0.0
    %1858 = vmatprep.subr.mxu0 0.0
    %1859 = vmatpush1.msra.mxu0 0.0
    %1860 = vmatprep.subr.mxu0 0.0
    %1861 = vmatpush1.msra.mxu0 0.0
    %1862 = vmatprep.subr.mxu0 0.0
    %1863 = vmatpush1.msra.mxu0 0.0
    %1864 = vmatprep.subr.mxu0 0.0
    %1865 = vmatpush1.msra.mxu0 0.0
    %1866 = vmatprep.subr.mxu0 0.0
    %1867 = vmatpush1.msra.mxu0 0.0
    %1868 = vmatprep.subr.mxu0 0.0
    %1869 = vmatpush1.msra.mxu0 0.0
    %1870 = vmatprep.subr.mxu0 0.0
    %1871 = vmatpush1.msra.mxu0 0.0
    %1872 = vmatprep.subr.mxu0 0.0
    %1873 = vmatpush1.msra.mxu0 0.0
    %1874 = vmatprep.subr.mxu0 0.0
    %1875 = vmatpush1.msra.mxu0 0.0
    %1876 = vmatprep.subr.mxu0 0.0
    %1877 = vmatpush1.msra.mxu0 0.0
    %1878 = vmatprep.subr.mxu0 0.0
    %1879 = vmatpush1.msra.mxu0 0.0
    %1880 = vmatprep.subr.mxu0 0.0
    %1881 = vmatpush1.msra.mxu0 0.0
    %1882 = vmatprep.subr.mxu0 0.0
    %1883 = vmatpush1.msra.mxu0 0.0
    %1884 = vmatprep.subr.mxu0 0.0
    %1885 = vmatpush1.msra.mxu0 0.0
    %1886 = vmatprep.subr.mxu0 0.0
    %1887 = vmatpush1.msra.mxu0 0.0
    %1888 = vmatprep.subr.mxu0 0.0
    %1889 = vmatpush1.msra.mxu0 0.0
    %1890 = vmatprep.subr.mxu0 0.0
    %1891 = vmatpush1.msra.mxu0 0.0
    %1892 = vmatprep.subr.mxu0 0.0
    %1893 = vmatpush1.msra.mxu0 0.0
    %1894 = vmatprep.subr.mxu0 0.0
    %1895 = vmatpush1.msra.mxu0 0.0
    %1896 = vmatprep.subr.mxu0 0.0
    %1897 = vmatpush1.msra.mxu0 0.0
    %1898 = vmatprep.subr.mxu0 0.0
    %1899 = vmatpush1.msra.mxu0 0.0
    %1900 = vmatprep.subr.mxu0 0.0
    %1901 = vmatpush1.msra.mxu0 0.0
    %1902 = vmatprep.mubr.f32.mxu0 0.0
    %v1903 = vand.u32 %v1600, 4294901760
    %v1904 = vsub.f32 %v1600, %v1903
    %v1905 = vand.u32 %v1904, 4294901760
    %1906 = vmatmul.mubr.f32.gmra.mrb[0].mxu0 %v1905
    %v1907 = vpop.f32.mrb[0].mxu0
    %v1908 = vadd.f32 %v1833, %v1907
    %v1909 = vpop.f32.mrb[0].mxu0
    %1910 = vdwg.mxu0
    %1911 = vmatprep.subr.mxu0 0.0
    %v1912 = vand.u32 %v72, 4294901760
    %v1913 = vsub.f32 %v72, %v1912
    %v1914 = vand.u32 %v1913, 4294901760
    %1915 = vmatpush1.msra.mxu0 %v1914
    %1916 = vmatprep.subr.mxu0 0.0
    %v1917 = vand.u32 %v73, 4294901760
    %v1918 = vsub.f32 %v73, %v1917
    %v1919 = vand.u32 %v1918, 4294901760
    %1920 = vmatpush1.msra.mxu0 %v1919
    %1921 = vmatprep.subr.mxu0 0.0
    %1922 = vmatpush1.msra.mxu0 0.0
    %1923 = vmatprep.subr.mxu0 0.0
    %1924 = vmatpush1.msra.mxu0 0.0
    %1925 = vmatprep.subr.mxu0 0.0
    %1926 = vmatpush1.msra.mxu0 0.0
    %1927 = vmatprep.subr.mxu0 0.0
    %1928 = vmatpush1.msra.mxu0 0.0
    %1929 = vmatprep.subr.mxu0 0.0
    %1930 = vmatpush1.msra.mxu0 0.0
    %1931 = vmatprep.subr.mxu0 0.0
    %1932 = vmatpush1.msra.mxu0 0.0
    %1933 = vmatprep.subr.mxu0 0.0
    %1934 = vmatpush1.msra.mxu0 0.0
    %1935 = vmatprep.subr.mxu0 0.0
    %1936 = vmatpush1.msra.mxu0 0.0
    %1937 = vmatprep.subr.mxu0 0.0
    %1938 = vmatpush1.msra.mxu0 0.0
    %1939 = vmatprep.subr.mxu0 0.0
    %1940 = vmatpush1.msra.mxu0 0.0
    %1941 = vmatprep.subr.mxu0 0.0
    %1942 = vmatpush1.msra.mxu0 0.0
    %1943 = vmatprep.subr.mxu0 0.0
    %1944 = vmatpush1.msra.mxu0 0.0
    %1945 = vmatprep.subr.mxu0 0.0
    %1946 = vmatpush1.msra.mxu0 0.0
    %1947 = vmatprep.subr.mxu0 0.0
    %1948 = vmatpush1.msra.mxu0 0.0
    %1949 = vmatprep.subr.mxu0 0.0
    %1950 = vmatpush1.msra.mxu0 0.0
    %1951 = vmatprep.subr.mxu0 0.0
    %1952 = vmatpush1.msra.mxu0 0.0
    %1953 = vmatprep.subr.mxu0 0.0
    %1954 = vmatpush1.msra.mxu0 0.0
    %1955 = vmatprep.subr.mxu0 0.0
    %1956 = vmatpush1.msra.mxu0 0.0
    %1957 = vmatprep.subr.mxu0 0.0
    %1958 = vmatpush1.msra.mxu0 0.0
    %1959 = vmatprep.subr.mxu0 0.0
    %1960 = vmatpush1.msra.mxu0 0.0
    %1961 = vmatprep.subr.mxu0 0.0
    %1962 = vmatpush1.msra.mxu0 0.0
    %1963 = vmatprep.subr.mxu0 0.0
    %1964 = vmatpush1.msra.mxu0 0.0
    %1965 = vmatprep.subr.mxu0 0.0
    %1966 = vmatpush1.msra.mxu0 0.0
    %1967 = vmatprep.subr.mxu0 0.0
    %1968 = vmatpush1.msra.mxu0 0.0
    %1969 = vmatprep.subr.mxu0 0.0
    %1970 = vmatpush1.msra.mxu0 0.0
    %1971 = vmatprep.subr.mxu0 0.0
    %1972 = vmatpush1.msra.mxu0 0.0
    %1973 = vmatprep.subr.mxu0 0.0
    %1974 = vmatpush1.msra.mxu0 0.0
    %1975 = vmatprep.subr.mxu0 0.0
    %1976 = vmatpush1.msra.mxu0 0.0
    %1977 = vmatprep.subr.mxu0 0.0
    %1978 = vmatpush1.msra.mxu0 0.0
    %1979 = vmatprep.subr.mxu0 0.0
    %1980 = vmatpush1.msra.mxu0 0.0
    %1981 = vmatprep.mubr.f32.mxu0 0.0
    %v1982 = vand.u32 %v1600, 4294901760
    %1983 = vmatmul.mubr.f32.gmra.mrb[0].mxu0 %v1982
    %v1984 = vpop.f32.mrb[0].mxu0
    %v1985 = vadd.f32 %v1908, %v1984
    %v1986 = vpop.f32.mrb[0].mxu0
    %1987 = vdwg.mxu0
    %1988 = vmatprep.subr.mxu0 0.0
    %v1989 = vand.u32 %v72, 4294901760
    %1990 = vmatpush1.msra.mxu0 %v1989
    %1991 = vmatprep.subr.mxu0 0.0
    %v1992 = vand.u32 %v73, 4294901760
    %1993 = vmatpush1.msra.mxu0 %v1992
    %1994 = vmatprep.subr.mxu0 0.0
    %1995 = vmatpush1.msra.mxu0 0.0
    %1996 = vmatprep.subr.mxu0 0.0
    %1997 = vmatpush1.msra.mxu0 0.0
    %1998 = vmatprep.subr.mxu0 0.0
    %1999 = vmatpush1.msra.mxu0 0.0
    %2000 = vmatprep.subr.mxu0 0.0
    %2001 = vmatpush1.msra.mxu0 0.0
    %2002 = vmatprep.subr.mxu0 0.0
    %2003 = vmatpush1.msra.mxu0 0.0
    %2004 = vmatprep.subr.mxu0 0.0
    %2005 = vmatpush1.msra.mxu0 0.0
    %2006 = vmatprep.subr.mxu0 0.0
    %2007 = vmatpush1.msra.mxu0 0.0
    %2008 = vmatprep.subr.mxu0 0.0
    %2009 = vmatpush1.msra.mxu0 0.0
    %2010 = vmatprep.subr.mxu0 0.0
    %2011 = vmatpush1.msra.mxu0 0.0
    %2012 = vmatprep.subr.mxu0 0.0
    %2013 = vmatpush1.msra.mxu0 0.0
    %2014 = vmatprep.subr.mxu0 0.0
    %2015 = vmatpush1.msra.mxu0 0.0
    %2016 = vmatprep.subr.mxu0 0.0
    %2017 = vmatpush1.msra.mxu0 0.0
    %2018 = vmatprep.subr.mxu0 0.0
    %2019 = vmatpush1.msra.mxu0 0.0
    %2020 = vmatprep.subr.mxu0 0.0
    %2021 = vmatpush1.msra.mxu0 0.0
    %2022 = vmatprep.subr.mxu0 0.0
    %2023 = vmatpush1.msra.mxu0 0.0
    %2024 = vmatprep.subr.mxu0 0.0
    %2025 = vmatpush1.msra.mxu0 0.0
    %2026 = vmatprep.subr.mxu0 0.0
    %2027 = vmatpush1.msra.mxu0 0.0
    %2028 = vmatprep.subr.mxu0 0.0
    %2029 = vmatpush1.msra.mxu0 0.0
    %2030 = vmatprep.subr.mxu0 0.0
    %2031 = vmatpush1.msra.mxu0 0.0
    %2032 = vmatprep.subr.mxu0 0.0
    %2033 = vmatpush1.msra.mxu0 0.0
    %2034 = vmatprep.subr.mxu0 0.0
    %2035 = vmatpush1.msra.mxu0 0.0
    %2036 = vmatprep.subr.mxu0 0.0
    %2037 = vmatpush1.msra.mxu0 0.0
    %2038 = vmatprep.subr.mxu0 0.0
    %2039 = vmatpush1.msra.mxu0 0.0
    %2040 = vmatprep.subr.mxu0 0.0
    %2041 = vmatpush1.msra.mxu0 0.0
    %2042 = vmatprep.subr.mxu0 0.0
    %2043 = vmatpush1.msra.mxu0 0.0
    %2044 = vmatprep.subr.mxu0 0.0
    %2045 = vmatpush1.msra.mxu0 0.0
    %2046 = vmatprep.subr.mxu0 0.0
    %2047 = vmatpush1.msra.mxu0 0.0
    %2048 = vmatprep.subr.mxu0 0.0
    %2049 = vmatpush1.msra.mxu0 0.0
    %2050 = vmatprep.subr.mxu0 0.0
    %2051 = vmatpush1.msra.mxu0 0.0
    %2052 = vmatprep.subr.mxu0 0.0
    %2053 = vmatpush1.msra.mxu0 0.0
    %2054 = vmatprep.mubr.f32.mxu0 0.0
    %v2055 = vand.u32 %v1600, 4294901760
    %2056 = vmatmul.mubr.f32.gmra.mrb[0].mxu0 %v2055
    %v2057 = vpop.f32.mrb[0].mxu0
    %v2058 = vadd.f32 %v1985, %v2057
    %v2059 = vpop.f32.mrb[0].mxu0
    %2060 = vdwg.mxu0
    %v2061 = vsel %vm1599, %v1596, 0
    %2063 = vmatprep.subr.mxu0 0.0
    %v2064 = vand.u32 %v74, 4294901760
    %2065 = vmatpush1.msra.mxu0 %v2064
    %2066 = vmatprep.subr.mxu0 0.0
    %v2067 = vand.u32 %v75, 4294901760
    %2068 = vmatpush1.msra.mxu0 %v2067
    %2069 = vmatprep.subr.mxu0 0.0
    %2070 = vmatpush1.msra.mxu0 0.0
    %2071 = vmatprep.subr.mxu0 0.0
    %2072 = vmatpush1.msra.mxu0 0.0
    %2073 = vmatprep.subr.mxu0 0.0
    %2074 = vmatpush1.msra.mxu0 0.0
    %2075 = vmatprep.subr.mxu0 0.0
    %2076 = vmatpush1.msra.mxu0 0.0
    %2077 = vmatprep.subr.mxu0 0.0
    %2078 = vmatpush1.msra.mxu0 0.0
    %2079 = vmatprep.subr.mxu0 0.0
    %2080 = vmatpush1.msra.mxu0 0.0
    %2081 = vmatprep.subr.mxu0 0.0
    %2082 = vmatpush1.msra.mxu0 0.0
    %2083 = vmatprep.subr.mxu0 0.0
    %2084 = vmatpush1.msra.mxu0 0.0
    %2085 = vmatprep.subr.mxu0 0.0
    %2086 = vmatpush1.msra.mxu0 0.0
    %2087 = vmatprep.subr.mxu0 0.0
    %2088 = vmatpush1.msra.mxu0 0.0
    %2089 = vmatprep.subr.mxu0 0.0
    %2090 = vmatpush1.msra.mxu0 0.0
    %2091 = vmatprep.subr.mxu0 0.0
    %2092 = vmatpush1.msra.mxu0 0.0
    %2093 = vmatprep.subr.mxu0 0.0
    %2094 = vmatpush1.msra.mxu0 0.0
    %2095 = vmatprep.subr.mxu0 0.0
    %2096 = vmatpush1.msra.mxu0 0.0
    %2097 = vmatprep.subr.mxu0 0.0
    %2098 = vmatpush1.msra.mxu0 0.0
    %2099 = vmatprep.subr.mxu0 0.0
    %2100 = vmatpush1.msra.mxu0 0.0
    %2101 = vmatprep.subr.mxu0 0.0
    %2102 = vmatpush1.msra.mxu0 0.0
    %2103 = vmatprep.subr.mxu0 0.0
    %2104 = vmatpush1.msra.mxu0 0.0
    %2105 = vmatprep.subr.mxu0 0.0
    %2106 = vmatpush1.msra.mxu0 0.0
    %2107 = vmatprep.subr.mxu0 0.0
    %2108 = vmatpush1.msra.mxu0 0.0
    %2109 = vmatprep.subr.mxu0 0.0
    %2110 = vmatpush1.msra.mxu0 0.0
    %2111 = vmatprep.subr.mxu0 0.0
    %2112 = vmatpush1.msra.mxu0 0.0
    %2113 = vmatprep.subr.mxu0 0.0
    %2114 = vmatpush1.msra.mxu0 0.0
    %2115 = vmatprep.subr.mxu0 0.0
    %2116 = vmatpush1.msra.mxu0 0.0
    %2117 = vmatprep.subr.mxu0 0.0
    %2118 = vmatpush1.msra.mxu0 0.0
    %2119 = vmatprep.subr.mxu0 0.0
    %2120 = vmatpush1.msra.mxu0 0.0
    %2121 = vmatprep.subr.mxu0 0.0
    %2122 = vmatpush1.msra.mxu0 0.0
    %2123 = vmatprep.subr.mxu0 0.0
    %2124 = vmatpush1.msra.mxu0 0.0
    %2125 = vmatprep.subr.mxu0 0.0
    %2126 = vmatpush1.msra.mxu0 0.0
    %2127 = vmatprep.subr.mxu0 0.0
    %2128 = vmatpush1.msra.mxu0 0.0
    %2129 = vmatprep.mubr.f32.mxu0 0.0
    %v2130 = vand.u32 %v2061, 4294901760
    %v2131 = vsub.f32 %v2061, %v2130
    %v2132 = vand.u32 %v2131, 4294901760
    %v2133 = vsub.f32 %v2131, %v2132
    %v2134 = vand.u32 %v2133, 4294901760
    %2135 = vmatmul.mubr.f32.gmra.mrb[0].mxu0 %v2134
    %v2136 = vpop.f32.mrb[0].mxu0
    %v2137 = vadd.f32 0.0, %v2136
    %v2138 = vpop.f32.mrb[0].mxu0
    %2139 = vdwg.mxu0
    %2140 = vmatprep.subr.mxu0 0.0
    %v2141 = vand.u32 %v74, 4294901760
    %v2142 = vsub.f32 %v74, %v2141
    %v2143 = vand.u32 %v2142, 4294901760
    %v2144 = vsub.f32 %v2142, %v2143
    %v2145 = vand.u32 %v2144, 4294901760
    %2146 = vmatpush1.msra.mxu0 %v2145
    %2147 = vmatprep.subr.mxu0 0.0
    %v2148 = vand.u32 %v75, 4294901760
    %v2149 = vsub.f32 %v75, %v2148
    %v2150 = vand.u32 %v2149, 4294901760
    %v2151 = vsub.f32 %v2149, %v2150
    %v2152 = vand.u32 %v2151, 4294901760
    %2153 = vmatpush1.msra.mxu0 %v2152
    %2154 = vmatprep.subr.mxu0 0.0
    %2155 = vmatpush1.msra.mxu0 0.0
    %2156 = vmatprep.subr.mxu0 0.0
    %2157 = vmatpush1.msra.mxu0 0.0
    %2158 = vmatprep.subr.mxu0 0.0
    %2159 = vmatpush1.msra.mxu0 0.0
    %2160 = vmatprep.subr.mxu0 0.0
    %2161 = vmatpush1.msra.mxu0 0.0
    %2162 = vmatprep.subr.mxu0 0.0
    %2163 = vmatpush1.msra.mxu0 0.0
    %2164 = vmatprep.subr.mxu0 0.0
    %2165 = vmatpush1.msra.mxu0 0.0
    %2166 = vmatprep.subr.mxu0 0.0
    %2167 = vmatpush1.msra.mxu0 0.0
    %2168 = vmatprep.subr.mxu0 0.0
    %2169 = vmatpush1.msra.mxu0 0.0
    %2170 = vmatprep.subr.mxu0 0.0
    %2171 = vmatpush1.msra.mxu0 0.0
    %2172 = vmatprep.subr.mxu0 0.0
    %2173 = vmatpush1.msra.mxu0 0.0
    %2174 = vmatprep.subr.mxu0 0.0
    %2175 = vmatpush1.msra.mxu0 0.0
    %2176 = vmatprep.subr.mxu0 0.0
    %2177 = vmatpush1.msra.mxu0 0.0
    %2178 = vmatprep.subr.mxu0 0.0
    %2179 = vmatpush1.msra.mxu0 0.0
    %2180 = vmatprep.subr.mxu0 0.0
    %2181 = vmatpush1.msra.mxu0 0.0
    %2182 = vmatprep.subr.mxu0 0.0
    %2183 = vmatpush1.msra.mxu0 0.0
    %2184 = vmatprep.subr.mxu0 0.0
    %2185 = vmatpush1.msra.mxu0 0.0
    %2186 = vmatprep.subr.mxu0 0.0
    %2187 = vmatpush1.msra.mxu0 0.0
    %2188 = vmatprep.subr.mxu0 0.0
    %2189 = vmatpush1.msra.mxu0 0.0
    %2190 = vmatprep.subr.mxu0 0.0
    %2191 = vmatpush1.msra.mxu0 0.0
    %2192 = vmatprep.subr.mxu0 0.0
    %2193 = vmatpush1.msra.mxu0 0.0
    %2194 = vmatprep.subr.mxu0 0.0
    %2195 = vmatpush1.msra.mxu0 0.0
    %2196 = vmatprep.subr.mxu0 0.0
    %2197 = vmatpush1.msra.mxu0 0.0
    %2198 = vmatprep.subr.mxu0 0.0
    %2199 = vmatpush1.msra.mxu0 0.0
    %2200 = vmatprep.subr.mxu0 0.0
    %2201 = vmatpush1.msra.mxu0 0.0
    %2202 = vmatprep.subr.mxu0 0.0
    %2203 = vmatpush1.msra.mxu0 0.0
    %2204 = vmatprep.subr.mxu0 0.0
    %2205 = vmatpush1.msra.mxu0 0.0
    %2206 = vmatprep.subr.mxu0 0.0
    %2207 = vmatpush1.msra.mxu0 0.0
    %2208 = vmatprep.subr.mxu0 0.0
    %2209 = vmatpush1.msra.mxu0 0.0
    %2210 = vmatprep.subr.mxu0 0.0
    %2211 = vmatpush1.msra.mxu0 0.0
    %2212 = vmatprep.subr.mxu0 0.0
    %2213 = vmatpush1.msra.mxu0 0.0
    %2214 = vmatprep.mubr.f32.mxu0 0.0
    %v2215 = vand.u32 %v2061, 4294901760
    %2216 = vmatmul.mubr.f32.gmra.mrb[0].mxu0 %v2215
    %v2217 = vpop.f32.mrb[0].mxu0
    %v2218 = vadd.f32 %v2137, %v2217
    %v2219 = vpop.f32.mrb[0].mxu0
    %2220 = vdwg.mxu0
    %2221 = vmatprep.subr.mxu0 0.0
    %v2222 = vand.u32 %v74, 4294901760
    %v2223 = vsub.f32 %v74, %v2222
    %2224 = vmatpush1.msra.mxu0 %v2223
    %2225 = vmatprep.subr.mxu0 0.0
    %v2226 = vand.u32 %v75, 4294901760
    %v2227 = vsub.f32 %v75, %v2226
    %2228 = vmatpush1.msra.mxu0 %v2227
    %2229 = vmatprep.subr.mxu0 0.0
    %2230 = vmatpush1.msra.mxu0 0.0
    %2231 = vmatprep.subr.mxu0 0.0
    %2232 = vmatpush1.msra.mxu0 0.0
    %2233 = vmatprep.subr.mxu0 0.0
    %2234 = vmatpush1.msra.mxu0 0.0
    %2235 = vmatprep.subr.mxu0 0.0
    %2236 = vmatpush1.msra.mxu0 0.0
    %2237 = vmatprep.subr.mxu0 0.0
    %2238 = vmatpush1.msra.mxu0 0.0
    %2239 = vmatprep.subr.mxu0 0.0
    %2240 = vmatpush1.msra.mxu0 0.0
    %2241 = vmatprep.subr.mxu0 0.0
    %2242 = vmatpush1.msra.mxu0 0.0
    %2243 = vmatprep.subr.mxu0 0.0
    %2244 = vmatpush1.msra.mxu0 0.0
    %2245 = vmatprep.subr.mxu0 0.0
    %2246 = vmatpush1.msra.mxu0 0.0
    %2247 = vmatprep.subr.mxu0 0.0
    %2248 = vmatpush1.msra.mxu0 0.0
    %2249 = vmatprep.subr.mxu0 0.0
    %2250 = vmatpush1.msra.mxu0 0.0
    %2251 = vmatprep.subr.mxu0 0.0
    %2252 = vmatpush1.msra.mxu0 0.0
    %2253 = vmatprep.subr.mxu0 0.0
    %2254 = vmatpush1.msra.mxu0 0.0
    %2255 = vmatprep.subr.mxu0 0.0
    %2256 = vmatpush1.msra.mxu0 0.0
    %2257 = vmatprep.subr.mxu0 0.0
    %2258 = vmatpush1.msra.mxu0 0.0
    %2259 = vmatprep.subr.mxu0 0.0
    %2260 = vmatpush1.msra.mxu0 0.0
    %2261 = vmatprep.subr.mxu0 0.0
    %2262 = vmatpush1.msra.mxu0 0.0
    %2263 = vmatprep.subr.mxu0 0.0
    %2264 = vmatpush1.msra.mxu0 0.0
    %2265 = vmatprep.subr.mxu0 0.0
    %2266 = vmatpush1.msra.mxu0 0.0
    %2267 = vmatprep.subr.mxu0 0.0
    %2268 = vmatpush1.msra.mxu0 0.0
    %2269 = vmatprep.subr.mxu0 0.0
    %2270 = vmatpush1.msra.mxu0 0.0
    %2271 = vmatprep.subr.mxu0 0.0
    %2272 = vmatpush1.msra.mxu0 0.0
    %2273 = vmatprep.subr.mxu0 0.0
    %2274 = vmatpush1.msra.mxu0 0.0
    %2275 = vmatprep.subr.mxu0 0.0
    %2276 = vmatpush1.msra.mxu0 0.0
    %2277 = vmatprep.subr.mxu0 0.0
    %2278 = vmatpush1.msra.mxu0 0.0
    %2279 = vmatprep.subr.mxu0 0.0
    %2280 = vmatpush1.msra.mxu0 0.0
    %2281 = vmatprep.subr.mxu0 0.0
    %2282 = vmatpush1.msra.mxu0 0.0
    %2283 = vmatprep.subr.mxu0 0.0
    %2284 = vmatpush1.msra.mxu0 0.0
    %2285 = vmatprep.subr.mxu0 0.0
    %2286 = vmatpush1.msra.mxu0 0.0
    %2287 = vmatprep.subr.mxu0 0.0
    %2288 = vmatpush1.msra.mxu0 0.0
    %2289 = vmatprep.mubr.f32.mxu0 0.0
    %v2290 = vand.u32 %v2061, 4294901760
    %v2291 = vsub.f32 %v2061, %v2290
    %2292 = vmatmul.mubr.f32.gmra.mrb[0].mxu0 %v2291
    %v2293 = vpop.f32.mrb[0].mxu0
    %v2294 = vadd.f32 %v2218, %v2293
    %v2295 = vpop.f32.mrb[0].mxu0
    %2296 = vdwg.mxu0
    %2297 = vmatprep.subr.mxu0 0.0
    %v2298 = vand.u32 %v74, 4294901760
    %2299 = vmatpush1.msra.mxu0 %v2298
    %2300 = vmatprep.subr.mxu0 0.0
    %v2301 = vand.u32 %v75, 4294901760
    %2302 = vmatpush1.msra.mxu0 %v2301
    %2303 = vmatprep.subr.mxu0 0.0
    %2304 = vmatpush1.msra.mxu0 0.0
    %2305 = vmatprep.subr.mxu0 0.0
    %2306 = vmatpush1.msra.mxu0 0.0
    %2307 = vmatprep.subr.mxu0 0.0
    %2308 = vmatpush1.msra.mxu0 0.0
    %2309 = vmatprep.subr.mxu0 0.0
    %2310 = vmatpush1.msra.mxu0 0.0
    %2311 = vmatprep.subr.mxu0 0.0
    %2312 = vmatpush1.msra.mxu0 0.0
    %2313 = vmatprep.subr.mxu0 0.0
    %2314 = vmatpush1.msra.mxu0 0.0
    %2315 = vmatprep.subr.mxu0 0.0
    %2316 = vmatpush1.msra.mxu0 0.0
    %2317 = vmatprep.subr.mxu0 0.0
    %2318 = vmatpush1.msra.mxu0 0.0
    %2319 = vmatprep.subr.mxu0 0.0
    %2320 = vmatpush1.msra.mxu0 0.0
    %2321 = vmatprep.subr.mxu0 0.0
    %2322 = vmatpush1.msra.mxu0 0.0
    %2323 = vmatprep.subr.mxu0 0.0
    %2324 = vmatpush1.msra.mxu0 0.0
    %2325 = vmatprep.subr.mxu0 0.0
    %2326 = vmatpush1.msra.mxu0 0.0
    %2327 = vmatprep.subr.mxu0 0.0
    %2328 = vmatpush1.msra.mxu0 0.0
    %2329 = vmatprep.subr.mxu0 0.0
    %2330 = vmatpush1.msra.mxu0 0.0
    %2331 = vmatprep.subr.mxu0 0.0
    %2332 = vmatpush1.msra.mxu0 0.0
    %2333 = vmatprep.subr.mxu0 0.0
    %2334 = vmatpush1.msra.mxu0 0.0
    %2335 = vmatprep.subr.mxu0 0.0
    %2336 = vmatpush1.msra.mxu0 0.0
    %2337 = vmatprep.subr.mxu0 0.0
    %2338 = vmatpush1.msra.mxu0 0.0
    %2339 = vmatprep.subr.mxu0 0.0
    %2340 = vmatpush1.msra.mxu0 0.0
    %2341 = vmatprep.subr.mxu0 0.0
    %2342 = vmatpush1.msra.mxu0 0.0
    %2343 = vmatprep.subr.mxu0 0.0
    %2344 = vmatpush1.msra.mxu0 0.0
    %2345 = vmatprep.subr.mxu0 0.0
    %2346 = vmatpush1.msra.mxu0 0.0
    %2347 = vmatprep.subr.mxu0 0.0
    %2348 = vmatpush1.msra.mxu0 0.0
    %2349 = vmatprep.subr.mxu0 0.0
    %2350 = vmatpush1.msra.mxu0 0.0
    %2351 = vmatprep.subr.mxu0 0.0
    %2352 = vmatpush1.msra.mxu0 0.0
    %2353 = vmatprep.subr.mxu0 0.0
    %2354 = vmatpush1.msra.mxu0 0.0
    %2355 = vmatprep.subr.mxu0 0.0
    %2356 = vmatpush1.msra.mxu0 0.0
    %2357 = vmatprep.subr.mxu0 0.0
    %2358 = vmatpush1.msra.mxu0 0.0
    %2359 = vmatprep.subr.mxu0 0.0
    %2360 = vmatpush1.msra.mxu0 0.0
    %2361 = vmatprep.subr.mxu0 0.0
    %2362 = vmatpush1.msra.mxu0 0.0
    %2363 = vmatprep.mubr.f32.mxu0 0.0
    %v2364 = vand.u32 %v2061, 4294901760
    %v2365 = vsub.f32 %v2061, %v2364
    %v2366 = vand.u32 %v2365, 4294901760
    %2367 = vmatmul.mubr.f32.gmra.mrb[0].mxu0 %v2366
    %v2368 = vpop.f32.mrb[0].mxu0
    %v2369 = vadd.f32 %v2294, %v2368
    %v2370 = vpop.f32.mrb[0].mxu0
    %2371 = vdwg.mxu0
    %2372 = vmatprep.subr.mxu0 0.0
    %v2373 = vand.u32 %v74, 4294901760
    %v2374 = vsub.f32 %v74, %v2373
    %v2375 = vand.u32 %v2374, 4294901760
    %2376 = vmatpush1.msra.mxu0 %v2375
    %2377 = vmatprep.subr.mxu0 0.0
    %v2378 = vand.u32 %v75, 4294901760
    %v2379 = vsub.f32 %v75, %v2378
    %v2380 = vand.u32 %v2379, 4294901760
    %2381 = vmatpush1.msra.mxu0 %v2380
    %2382 = vmatprep.subr.mxu0 0.0
    %2383 = vmatpush1.msra.mxu0 0.0
    %2384 = vmatprep.subr.mxu0 0.0
    %2385 = vmatpush1.msra.mxu0 0.0
    %2386 = vmatprep.subr.mxu0 0.0
    %2387 = vmatpush1.msra.mxu0 0.0
    %2388 = vmatprep.subr.mxu0 0.0
    %2389 = vmatpush1.msra.mxu0 0.0
    %2390 = vmatprep.subr.mxu0 0.0
    %2391 = vmatpush1.msra.mxu0 0.0
    %2392 = vmatprep.subr.mxu0 0.0
    %2393 = vmatpush1.msra.mxu0 0.0
    %2394 = vmatprep.subr.mxu0 0.0
    %2395 = vmatpush1.msra.mxu0 0.0
    %2396 = vmatprep.subr.mxu0 0.0
    %2397 = vmatpush1.msra.mxu0 0.0
    %2398 = vmatprep.subr.mxu0 0.0
    %2399 = vmatpush1.msra.mxu0 0.0
    %2400 = vmatprep.subr.mxu0 0.0
    %2401 = vmatpush1.msra.mxu0 0.0
    %2402 = vmatprep.subr.mxu0 0.0
    %2403 = vmatpush1.msra.mxu0 0.0
    %2404 = vmatprep.subr.mxu0 0.0
    %2405 = vmatpush1.msra.mxu0 0.0
    %2406 = vmatprep.subr.mxu0 0.0
    %2407 = vmatpush1.msra.mxu0 0.0
    %2408 = vmatprep.subr.mxu0 0.0
    %2409 = vmatpush1.msra.mxu0 0.0
    %2410 = vmatprep.subr.mxu0 0.0
    %2411 = vmatpush1.msra.mxu0 0.0
    %2412 = vmatprep.subr.mxu0 0.0
    %2413 = vmatpush1.msra.mxu0 0.0
    %2414 = vmatprep.subr.mxu0 0.0
    %2415 = vmatpush1.msra.mxu0 0.0
    %2416 = vmatprep.subr.mxu0 0.0
    %2417 = vmatpush1.msra.mxu0 0.0
    %2418 = vmatprep.subr.mxu0 0.0
    %2419 = vmatpush1.msra.mxu0 0.0
    %2420 = vmatprep.subr.mxu0 0.0
    %2421 = vmatpush1.msra.mxu0 0.0
    %2422 = vmatprep.subr.mxu0 0.0
    %2423 = vmatpush1.msra.mxu0 0.0
    %2424 = vmatprep.subr.mxu0 0.0
    %2425 = vmatpush1.msra.mxu0 0.0
    %2426 = vmatprep.subr.mxu0 0.0
    %2427 = vmatpush1.msra.mxu0 0.0
    %2428 = vmatprep.subr.mxu0 0.0
    %2429 = vmatpush1.msra.mxu0 0.0
    %2430 = vmatprep.subr.mxu0 0.0
    %2431 = vmatpush1.msra.mxu0 0.0
    %2432 = vmatprep.subr.mxu0 0.0
    %2433 = vmatpush1.msra.mxu0 0.0
    %2434 = vmatprep.subr.mxu0 0.0
    %2435 = vmatpush1.msra.mxu0 0.0
    %2436 = vmatprep.subr.mxu0 0.0
    %2437 = vmatpush1.msra.mxu0 0.0
    %2438 = vmatprep.subr.mxu0 0.0
    %2439 = vmatpush1.msra.mxu0 0.0
    %2440 = vmatprep.subr.mxu0 0.0
    %2441 = vmatpush1.msra.mxu0 0.0
    %2442 = vmatprep.mubr.f32.mxu0 0.0
    %v2443 = vand.u32 %v2061, 4294901760
    %2444 = vmatmul.mubr.f32.gmra.mrb[0].mxu0 %v2443
    %v2445 = vpop.f32.mrb[0].mxu0
    %v2446 = vadd.f32 %v2369, %v2445
    %v2447 = vpop.f32.mrb[0].mxu0
    %2448 = vdwg.mxu0
    %2449 = vmatprep.subr.mxu0 0.0
    %v2450 = vand.u32 %v74, 4294901760
    %2451 = vmatpush1.msra.mxu0 %v2450
    %2452 = vmatprep.subr.mxu0 0.0
    %v2453 = vand.u32 %v75, 4294901760
    %2454 = vmatpush1.msra.mxu0 %v2453
    %2455 = vmatprep.subr.mxu0 0.0
    %2456 = vmatpush1.msra.mxu0 0.0
    %2457 = vmatprep.subr.mxu0 0.0
    %2458 = vmatpush1.msra.mxu0 0.0
    %2459 = vmatprep.subr.mxu0 0.0
    %2460 = vmatpush1.msra.mxu0 0.0
    %2461 = vmatprep.subr.mxu0 0.0
    %2462 = vmatpush1.msra.mxu0 0.0
    %2463 = vmatprep.subr.mxu0 0.0
    %2464 = vmatpush1.msra.mxu0 0.0
    %2465 = vmatprep.subr.mxu0 0.0
    %2466 = vmatpush1.msra.mxu0 0.0
    %2467 = vmatprep.subr.mxu0 0.0
    %2468 = vmatpush1.msra.mxu0 0.0
    %2469 = vmatprep.subr.mxu0 0.0
    %2470 = vmatpush1.msra.mxu0 0.0
    %2471 = vmatprep.subr.mxu0 0.0
    %2472 = vmatpush1.msra.mxu0 0.0
    %2473 = vmatprep.subr.mxu0 0.0
    %2474 = vmatpush1.msra.mxu0 0.0
    %2475 = vmatprep.subr.mxu0 0.0
    %2476 = vmatpush1.msra.mxu0 0.0
    %2477 = vmatprep.subr.mxu0 0.0
    %2478 = vmatpush1.msra.mxu0 0.0
    %2479 = vmatprep.subr.mxu0 0.0
    %2480 = vmatpush1.msra.mxu0 0.0
    %2481 = vmatprep.subr.mxu0 0.0
    %2482 = vmatpush1.msra.mxu0 0.0
    %2483 = vmatprep.subr.mxu0 0.0
    %2484 = vmatpush1.msra.mxu0 0.0
    %2485 = vmatprep.subr.mxu0 0.0
    %2486 = vmatpush1.msra.mxu0 0.0
    %2487 = vmatprep.subr.mxu0 0.0
    %2488 = vmatpush1.msra.mxu0 0.0
    %2489 = vmatprep.subr.mxu0 0.0
    %2490 = vmatpush1.msra.mxu0 0.0
    %2491 = vmatprep.subr.mxu0 0.0
    %2492 = vmatpush1.msra.mxu0 0.0
    %2493 = vmatprep.subr.mxu0 0.0
    %2494 = vmatpush1.msra.mxu0 0.0
    %2495 = vmatprep.subr.mxu0 0.0
    %2496 = vmatpush1.msra.mxu0 0.0
    %2497 = vmatprep.subr.mxu0 0.0
    %2498 = vmatpush1.msra.mxu0 0.0
    %2499 = vmatprep.subr.mxu0 0.0
    %2500 = vmatpush1.msra.mxu0 0.0
    %2501 = vmatprep.subr.mxu0 0.0
    %2502 = vmatpush1.msra.mxu0 0.0
    %2503 = vmatprep.subr.mxu0 0.0
    %2504 = vmatpush1.msra.mxu0 0.0
    %2505 = vmatprep.subr.mxu0 0.0
    %2506 = vmatpush1.msra.mxu0 0.0
    %2507 = vmatprep.subr.mxu0 0.0
    %2508 = vmatpush1.msra.mxu0 0.0
    %2509 = vmatprep.subr.mxu0 0.0
    %2510 = vmatpush1.msra.mxu0 0.0
    %2511 = vmatprep.subr.mxu0 0.0
    %2512 = vmatpush1.msra.mxu0 0.0
    %2513 = vmatprep.subr.mxu0 0.0
    %2514 = vmatpush1.msra.mxu0 0.0
    %2515 = vmatprep.mubr.f32.mxu0 0.0
    %v2516 = vand.u32 %v2061, 4294901760
    %2517 = vmatmul.mubr.f32.gmra.mrb[0].mxu0 %v2516
    %v2518 = vpop.f32.mrb[0].mxu0
    %v2519 = vadd.f32 %v2446, %v2518
    %v2520 = vpop.f32.mrb[0].mxu0
    %2521 = vdwg.mxu0
    %v2522 = vsel %vm1599, %v1597, 0
    %2524 = vmatprep.subr.mxu0 0.0
    %v2525 = vand.u32 %v76, 4294901760
    %2526 = vmatpush1.msra.mxu0 %v2525
    %2527 = vmatprep.subr.mxu0 0.0
    %v2528 = vand.u32 %v77, 4294901760
    %2529 = vmatpush1.msra.mxu0 %v2528
    %2530 = vmatprep.subr.mxu0 0.0
    %2531 = vmatpush1.msra.mxu0 0.0
    %2532 = vmatprep.subr.mxu0 0.0
    %2533 = vmatpush1.msra.mxu0 0.0
    %2534 = vmatprep.subr.mxu0 0.0
    %2535 = vmatpush1.msra.mxu0 0.0
    %2536 = vmatprep.subr.mxu0 0.0
    %2537 = vmatpush1.msra.mxu0 0.0
    %2538 = vmatprep.subr.mxu0 0.0
    %2539 = vmatpush1.msra.mxu0 0.0
    %2540 = vmatprep.subr.mxu0 0.0
    %2541 = vmatpush1.msra.mxu0 0.0
    %2542 = vmatprep.subr.mxu0 0.0
    %2543 = vmatpush1.msra.mxu0 0.0
    %2544 = vmatprep.subr.mxu0 0.0
    %2545 = vmatpush1.msra.mxu0 0.0
    %2546 = vmatprep.subr.mxu0 0.0
    %2547 = vmatpush1.msra.mxu0 0.0
    %2548 = vmatprep.subr.mxu0 0.0
    %2549 = vmatpush1.msra.mxu0 0.0
    %2550 = vmatprep.subr.mxu0 0.0
    %2551 = vmatpush1.msra.mxu0 0.0
    %2552 = vmatprep.subr.mxu0 0.0
    %2553 = vmatpush1.msra.mxu0 0.0
    %2554 = vmatprep.subr.mxu0 0.0
    %2555 = vmatpush1.msra.mxu0 0.0
    %2556 = vmatprep.subr.mxu0 0.0
    %2557 = vmatpush1.msra.mxu0 0.0
    %2558 = vmatprep.subr.mxu0 0.0
    %2559 = vmatpush1.msra.mxu0 0.0
    %2560 = vmatprep.subr.mxu0 0.0
    %2561 = vmatpush1.msra.mxu0 0.0
    %2562 = vmatprep.subr.mxu0 0.0
    %2563 = vmatpush1.msra.mxu0 0.0
    %2564 = vmatprep.subr.mxu0 0.0
    %2565 = vmatpush1.msra.mxu0 0.0
    %2566 = vmatprep.subr.mxu0 0.0
    %2567 = vmatpush1.msra.mxu0 0.0
    %2568 = vmatprep.subr.mxu0 0.0
    %2569 = vmatpush1.msra.mxu0 0.0
    %2570 = vmatprep.subr.mxu0 0.0
    %2571 = vmatpush1.msra.mxu0 0.0
    %2572 = vmatprep.subr.mxu0 0.0
    %2573 = vmatpush1.msra.mxu0 0.0
    %2574 = vmatprep.subr.mxu0 0.0
    %2575 = vmatpush1.msra.mxu0 0.0
    %2576 = vmatprep.subr.mxu0 0.0
    %2577 = vmatpush1.msra.mxu0 0.0
    %2578 = vmatprep.subr.mxu0 0.0
    %2579 = vmatpush1.msra.mxu0 0.0
    %2580 = vmatprep.subr.mxu0 0.0
    %2581 = vmatpush1.msra.mxu0 0.0
    %2582 = vmatprep.subr.mxu0 0.0
    %2583 = vmatpush1.msra.mxu0 0.0
    %2584 = vmatprep.subr.mxu0 0.0
    %2585 = vmatpush1.msra.mxu0 0.0
    %2586 = vmatprep.subr.mxu0 0.0
    %2587 = vmatpush1.msra.mxu0 0.0
    %2588 = vmatprep.subr.mxu0 0.0
    %2589 = vmatpush1.msra.mxu0 0.0
    %2590 = vmatprep.mubr.f32.mxu0 0.0
    %v2591 = vand.u32 %v2522, 4294901760
    %v2592 = vsub.f32 %v2522, %v2591
    %v2593 = vand.u32 %v2592, 4294901760
    %v2594 = vsub.f32 %v2592, %v2593
    %v2595 = vand.u32 %v2594, 4294901760
    %2596 = vmatmul.mubr.f32.gmra.mrb[0].mxu0 %v2595
    %v2597 = vpop.f32.mrb[0].mxu0
    %v2598 = vadd.f32 0.0, %v2597
    %v2599 = vpop.f32.mrb[0].mxu0
    %2600 = vdwg.mxu0
    %2601 = vmatprep.subr.mxu0 0.0
    %v2602 = vand.u32 %v76, 4294901760
    %v2603 = vsub.f32 %v76, %v2602
    %v2604 = vand.u32 %v2603, 4294901760
    %v2605 = vsub.f32 %v2603, %v2604
    %v2606 = vand.u32 %v2605, 4294901760
    %2607 = vmatpush1.msra.mxu0 %v2606
    %2608 = vmatprep.subr.mxu0 0.0
    %v2609 = vand.u32 %v77, 4294901760
    %v2610 = vsub.f32 %v77, %v2609
    %v2611 = vand.u32 %v2610, 4294901760
    %v2612 = vsub.f32 %v2610, %v2611
    %v2613 = vand.u32 %v2612, 4294901760
    %2614 = vmatpush1.msra.mxu0 %v2613
    %2615 = vmatprep.subr.mxu0 0.0
    %2616 = vmatpush1.msra.mxu0 0.0
    %2617 = vmatprep.subr.mxu0 0.0
    %2618 = vmatpush1.msra.mxu0 0.0
    %2619 = vmatprep.subr.mxu0 0.0
    %2620 = vmatpush1.msra.mxu0 0.0
    %2621 = vmatprep.subr.mxu0 0.0
    %2622 = vmatpush1.msra.mxu0 0.0
    %2623 = vmatprep.subr.mxu0 0.0
    %2624 = vmatpush1.msra.mxu0 0.0
    %2625 = vmatprep.subr.mxu0 0.0
    %2626 = vmatpush1.msra.mxu0 0.0
    %2627 = vmatprep.subr.mxu0 0.0
    %2628 = vmatpush1.msra.mxu0 0.0
    %2629 = vmatprep.subr.mxu0 0.0
    %2630 = vmatpush1.msra.mxu0 0.0
    %2631 = vmatprep.subr.mxu0 0.0
    %2632 = vmatpush1.msra.mxu0 0.0
    %2633 = vmatprep.subr.mxu0 0.0
    %2634 = vmatpush1.msra.mxu0 0.0
    %2635 = vmatprep.subr.mxu0 0.0
    %2636 = vmatpush1.msra.mxu0 0.0
    %2637 = vmatprep.subr.mxu0 0.0
    %2638 = vmatpush1.msra.mxu0 0.0
    %2639 = vmatprep.subr.mxu0 0.0
    %2640 = vmatpush1.msra.mxu0 0.0
    %2641 = vmatprep.subr.mxu0 0.0
    %2642 = vmatpush1.msra.mxu0 0.0
    %2643 = vmatprep.subr.mxu0 0.0
    %2644 = vmatpush1.msra.mxu0 0.0
    %2645 = vmatprep.subr.mxu0 0.0
    %2646 = vmatpush1.msra.mxu0 0.0
    %2647 = vmatprep.subr.mxu0 0.0
    %2648 = vmatpush1.msra.mxu0 0.0
    %2649 = vmatprep.subr.mxu0 0.0
    %2650 = vmatpush1.msra.mxu0 0.0
    %2651 = vmatprep.subr.mxu0 0.0
    %2652 = vmatpush1.msra.mxu0 0.0
    %2653 = vmatprep.subr.mxu0 0.0
    %2654 = vmatpush1.msra.mxu0 0.0
    %2655 = vmatprep.subr.mxu0 0.0
    %2656 = vmatpush1.msra.mxu0 0.0
    %2657 = vmatprep.subr.mxu0 0.0
    %2658 = vmatpush1.msra.mxu0 0.0
    %2659 = vmatprep.subr.mxu0 0.0
    %2660 = vmatpush1.msra.mxu0 0.0
    %2661 = vmatprep.subr.mxu0 0.0
    %2662 = vmatpush1.msra.mxu0 0.0
    %2663 = vmatprep.subr.mxu0 0.0
    %2664 = vmatpush1.msra.mxu0 0.0
    %2665 = vmatprep.subr.mxu0 0.0
    %2666 = vmatpush1.msra.mxu0 0.0
    %2667 = vmatprep.subr.mxu0 0.0
    %2668 = vmatpush1.msra.mxu0 0.0
    %2669 = vmatprep.subr.mxu0 0.0
    %2670 = vmatpush1.msra.mxu0 0.0
    %2671 = vmatprep.subr.mxu0 0.0
    %2672 = vmatpush1.msra.mxu0 0.0
    %2673 = vmatprep.subr.mxu0 0.0
    %2674 = vmatpush1.msra.mxu0 0.0
    %2675 = vmatprep.mubr.f32.mxu0 0.0
    %v2676 = vand.u32 %v2522, 4294901760
    %2677 = vmatmul.mubr.f32.gmra.mrb[0].mxu0 %v2676
    %v2678 = vpop.f32.mrb[0].mxu0
    %v2679 = vadd.f32 %v2598, %v2678
    %v2680 = vpop.f32.mrb[0].mxu0
    %2681 = vdwg.mxu0
    %2682 = vmatprep.subr.mxu0 0.0
    %v2683 = vand.u32 %v76, 4294901760
    %v2684 = vsub.f32 %v76, %v2683
    %2685 = vmatpush1.msra.mxu0 %v2684
    %2686 = vmatprep.subr.mxu0 0.0
    %v2687 = vand.u32 %v77, 4294901760
    %v2688 = vsub.f32 %v77, %v2687
    %2689 = vmatpush1.msra.mxu0 %v2688
    %2690 = vmatprep.subr.mxu0 0.0
    %2691 = vmatpush1.msra.mxu0 0.0
    %2692 = vmatprep.subr.mxu0 0.0
    %2693 = vmatpush1.msra.mxu0 0.0
    %2694 = vmatprep.subr.mxu0 0.0
    %2695 = vmatpush1.msra.mxu0 0.0
    %2696 = vmatprep.subr.mxu0 0.0
    %2697 = vmatpush1.msra.mxu0 0.0
    %2698 = vmatprep.subr.mxu0 0.0
    %2699 = vmatpush1.msra.mxu0 0.0
    %2700 = vmatprep.subr.mxu0 0.0
    %2701 = vmatpush1.msra.mxu0 0.0
    %2702 = vmatprep.subr.mxu0 0.0
    %2703 = vmatpush1.msra.mxu0 0.0
    %2704 = vmatprep.subr.mxu0 0.0
    %2705 = vmatpush1.msra.mxu0 0.0
    %2706 = vmatprep.subr.mxu0 0.0
    %2707 = vmatpush1.msra.mxu0 0.0
    %2708 = vmatprep.subr.mxu0 0.0
    %2709 = vmatpush1.msra.mxu0 0.0
    %2710 = vmatprep.subr.mxu0 0.0
    %2711 = vmatpush1.msra.mxu0 0.0
    %2712 = vmatprep.subr.mxu0 0.0
    %2713 = vmatpush1.msra.mxu0 0.0
    %2714 = vmatprep.subr.mxu0 0.0
    %2715 = vmatpush1.msra.mxu0 0.0
    %2716 = vmatprep.subr.mxu0 0.0
    %2717 = vmatpush1.msra.mxu0 0.0
    %2718 = vmatprep.subr.mxu0 0.0
    %2719 = vmatpush1.msra.mxu0 0.0
    %2720 = vmatprep.subr.mxu0 0.0
    %2721 = vmatpush1.msra.mxu0 0.0
    %2722 = vmatprep.subr.mxu0 0.0
    %2723 = vmatpush1.msra.mxu0 0.0
    %2724 = vmatprep.subr.mxu0 0.0
    %2725 = vmatpush1.msra.mxu0 0.0
    %2726 = vmatprep.subr.mxu0 0.0
    %2727 = vmatpush1.msra.mxu0 0.0
    %2728 = vmatprep.subr.mxu0 0.0
    %2729 = vmatpush1.msra.mxu0 0.0
    %2730 = vmatprep.subr.mxu0 0.0
    %2731 = vmatpush1.msra.mxu0 0.0
    %2732 = vmatprep.subr.mxu0 0.0
    %2733 = vmatpush1.msra.mxu0 0.0
    %2734 = vmatprep.subr.mxu0 0.0
    %2735 = vmatpush1.msra.mxu0 0.0
    %2736 = vmatprep.subr.mxu0 0.0
    %2737 = vmatpush1.msra.mxu0 0.0
    %2738 = vmatprep.subr.mxu0 0.0
    %2739 = vmatpush1.msra.mxu0 0.0
    %2740 = vmatprep.subr.mxu0 0.0
    %2741 = vmatpush1.msra.mxu0 0.0
    %2742 = vmatprep.subr.mxu0 0.0
    %2743 = vmatpush1.msra.mxu0 0.0
    %2744 = vmatprep.subr.mxu0 0.0
    %2745 = vmatpush1.msra.mxu0 0.0
    %2746 = vmatprep.subr.mxu0 0.0
    %2747 = vmatpush1.msra.mxu0 0.0
    %2748 = vmatprep.subr.mxu0 0.0
    %2749 = vmatpush1.msra.mxu0 0.0
    %2750 = vmatprep.mubr.f32.mxu0 0.0
    %v2751 = vand.u32 %v2522, 4294901760
    %v2752 = vsub.f32 %v2522, %v2751
    %2753 = vmatmul.mubr.f32.gmra.mrb[0].mxu0 %v2752
    %v2754 = vpop.f32.mrb[0].mxu0
    %v2755 = vadd.f32 %v2679, %v2754
    %v2756 = vpop.f32.mrb[0].mxu0
    %2757 = vdwg.mxu0
    %2758 = vmatprep.subr.mxu0 0.0
    %v2759 = vand.u32 %v76, 4294901760
    %2760 = vmatpush1.msra.mxu0 %v2759
    %2761 = vmatprep.subr.mxu0 0.0
    %v2762 = vand.u32 %v77, 4294901760
    %2763 = vmatpush1.msra.mxu0 %v2762
    %2764 = vmatprep.subr.mxu0 0.0
    %2765 = vmatpush1.msra.mxu0 0.0
    %2766 = vmatprep.subr.mxu0 0.0
    %2767 = vmatpush1.msra.mxu0 0.0
    %2768 = vmatprep.subr.mxu0 0.0
    %2769 = vmatpush1.msra.mxu0 0.0
    %2770 = vmatprep.subr.mxu0 0.0
    %2771 = vmatpush1.msra.mxu0 0.0
    %2772 = vmatprep.subr.mxu0 0.0
    %2773 = vmatpush1.msra.mxu0 0.0
    %2774 = vmatprep.subr.mxu0 0.0
    %2775 = vmatpush1.msra.mxu0 0.0
    %2776 = vmatprep.subr.mxu0 0.0
    %2777 = vmatpush1.msra.mxu0 0.0
    %2778 = vmatprep.subr.mxu0 0.0
    %2779 = vmatpush1.msra.mxu0 0.0
    %2780 = vmatprep.subr.mxu0 0.0
    %2781 = vmatpush1.msra.mxu0 0.0
    %2782 = vmatprep.subr.mxu0 0.0
    %2783 = vmatpush1.msra.mxu0 0.0
    %2784 = vmatprep.subr.mxu0 0.0
    %2785 = vmatpush1.msra.mxu0 0.0
    %2786 = vmatprep.subr.mxu0 0.0
    %2787 = vmatpush1.msra.mxu0 0.0
    %2788 = vmatprep.subr.mxu0 0.0
    %2789 = vmatpush1.msra.mxu0 0.0
    %2790 = vmatprep.subr.mxu0 0.0
    %2791 = vmatpush1.msra.mxu0 0.0
    %2792 = vmatprep.subr.mxu0 0.0
    %2793 = vmatpush1.msra.mxu0 0.0
    %2794 = vmatprep.subr.mxu0 0.0
    %2795 = vmatpush1.msra.mxu0 0.0
    %2796 = vmatprep.subr.mxu0 0.0
    %2797 = vmatpush1.msra.mxu0 0.0
    %2798 = vmatprep.subr.mxu0 0.0
    %2799 = vmatpush1.msra.mxu0 0.0
    %2800 = vmatprep.subr.mxu0 0.0
    %2801 = vmatpush1.msra.mxu0 0.0
    %2802 = vmatprep.subr.mxu0 0.0
    %2803 = vmatpush1.msra.mxu0 0.0
    %2804 = vmatprep.subr.mxu0 0.0
    %2805 = vmatpush1.msra.mxu0 0.0
    %2806 = vmatprep.subr.mxu0 0.0
    %2807 = vmatpush1.msra.mxu0 0.0
    %2808 = vmatprep.subr.mxu0 0.0
    %2809 = vmatpush1.msra.mxu0 0.0
    %2810 = vmatprep.subr.mxu0 0.0
    %2811 = vmatpush1.msra.mxu0 0.0
    %2812 = vmatprep.subr.mxu0 0.0
    %2813 = vmatpush1.msra.mxu0 0.0
    %2814 = vmatprep.subr.mxu0 0.0
    %2815 = vmatpush1.msra.mxu0 0.0
    %2816 = vmatprep.subr.mxu0 0.0
    %2817 = vmatpush1.msra.mxu0 0.0
    %2818 = vmatprep.subr.mxu0 0.0
    %2819 = vmatpush1.msra.mxu0 0.0
    %2820 = vmatprep.subr.mxu0 0.0
    %2821 = vmatpush1.msra.mxu0 0.0
    %2822 = vmatprep.subr.mxu0 0.0
    %2823 = vmatpush1.msra.mxu0 0.0
    %2824 = vmatprep.mubr.f32.mxu0 0.0
    %v2825 = vand.u32 %v2522, 4294901760
    %v2826 = vsub.f32 %v2522, %v2825
    %v2827 = vand.u32 %v2826, 4294901760
    %2828 = vmatmul.mubr.f32.gmra.mrb[0].mxu0 %v2827
    %v2829 = vpop.f32.mrb[0].mxu0
    %v2830 = vadd.f32 %v2755, %v2829
    %v2831 = vpop.f32.mrb[0].mxu0
    %2832 = vdwg.mxu0
    %2833 = vmatprep.subr.mxu0 0.0
    %v2834 = vand.u32 %v76, 4294901760
    %v2835 = vsub.f32 %v76, %v2834
    %v2836 = vand.u32 %v2835, 4294901760
    %2837 = vmatpush1.msra.mxu0 %v2836
    %2838 = vmatprep.subr.mxu0 0.0
    %v2839 = vand.u32 %v77, 4294901760
    %v2840 = vsub.f32 %v77, %v2839
    %v2841 = vand.u32 %v2840, 4294901760
    %2842 = vmatpush1.msra.mxu0 %v2841
    %2843 = vmatprep.subr.mxu0 0.0
    %2844 = vmatpush1.msra.mxu0 0.0
    %2845 = vmatprep.subr.mxu0 0.0
    %2846 = vmatpush1.msra.mxu0 0.0
    %2847 = vmatprep.subr.mxu0 0.0
    %2848 = vmatpush1.msra.mxu0 0.0
    %2849 = vmatprep.subr.mxu0 0.0
    %2850 = vmatpush1.msra.mxu0 0.0
    %2851 = vmatprep.subr.mxu0 0.0
    %2852 = vmatpush1.msra.mxu0 0.0
    %2853 = vmatprep.subr.mxu0 0.0
    %2854 = vmatpush1.msra.mxu0 0.0
    %2855 = vmatprep.subr.mxu0 0.0
    %2856 = vmatpush1.msra.mxu0 0.0
    %2857 = vmatprep.subr.mxu0 0.0
    %2858 = vmatpush1.msra.mxu0 0.0
    %2859 = vmatprep.subr.mxu0 0.0
    %2860 = vmatpush1.msra.mxu0 0.0
    %2861 = vmatprep.subr.mxu0 0.0
    %2862 = vmatpush1.msra.mxu0 0.0
    %2863 = vmatprep.subr.mxu0 0.0
    %2864 = vmatpush1.msra.mxu0 0.0
    %2865 = vmatprep.subr.mxu0 0.0
    %2866 = vmatpush1.msra.mxu0 0.0
    %2867 = vmatprep.subr.mxu0 0.0
    %2868 = vmatpush1.msra.mxu0 0.0
    %2869 = vmatprep.subr.mxu0 0.0
    %2870 = vmatpush1.msra.mxu0 0.0
    %2871 = vmatprep.subr.mxu0 0.0
    %2872 = vmatpush1.msra.mxu0 0.0
    %2873 = vmatprep.subr.mxu0 0.0
    %2874 = vmatpush1.msra.mxu0 0.0
    %2875 = vmatprep.subr.mxu0 0.0
    %2876 = vmatpush1.msra.mxu0 0.0
    %2877 = vmatprep.subr.mxu0 0.0
    %2878 = vmatpush1.msra.mxu0 0.0
    %2879 = vmatprep.subr.mxu0 0.0
    %2880 = vmatpush1.msra.mxu0 0.0
    %2881 = vmatprep.subr.mxu0 0.0
    %2882 = vmatpush1.msra.mxu0 0.0
    %2883 = vmatprep.subr.mxu0 0.0
    %2884 = vmatpush1.msra.mxu0 0.0
    %2885 = vmatprep.subr.mxu0 0.0
    %2886 = vmatpush1.msra.mxu0 0.0
    %2887 = vmatprep.subr.mxu0 0.0
    %2888 = vmatpush1.msra.mxu0 0.0
    %2889 = vmatprep.subr.mxu0 0.0
    %2890 = vmatpush1.msra.mxu0 0.0
    %2891 = vmatprep.subr.mxu0 0.0
    %2892 = vmatpush1.msra.mxu0 0.0
    %2893 = vmatprep.subr.mxu0 0.0
    %2894 = vmatpush1.msra.mxu0 0.0
    %2895 = vmatprep.subr.mxu0 0.0
    %2896 = vmatpush1.msra.mxu0 0.0
    %2897 = vmatprep.subr.mxu0 0.0
    %2898 = vmatpush1.msra.mxu0 0.0
    %2899 = vmatprep.subr.mxu0 0.0
    %2900 = vmatpush1.msra.mxu0 0.0
    %2901 = vmatprep.subr.mxu0 0.0
    %2902 = vmatpush1.msra.mxu0 0.0
    %2903 = vmatprep.mubr.f32.mxu0 0.0
    %v2904 = vand.u32 %v2522, 4294901760
    %2905 = vmatmul.mubr.f32.gmra.mrb[0].mxu0 %v2904
    %v2906 = vpop.f32.mrb[0].mxu0
    %v2907 = vadd.f32 %v2830, %v2906
    %v2908 = vpop.f32.mrb[0].mxu0
    %2909 = vdwg.mxu0
    %2910 = vmatprep.subr.mxu0 0.0
    %v2911 = vand.u32 %v76, 4294901760
    %2912 = vmatpush1.msra.mxu0 %v2911
    %2913 = vmatprep.subr.mxu0 0.0
    %v2914 = vand.u32 %v77, 4294901760
    %2915 = vmatpush1.msra.mxu0 %v2914
    %2916 = vmatprep.subr.mxu0 0.0
    %2917 = vmatpush1.msra.mxu0 0.0
    %2918 = vmatprep.subr.mxu0 0.0
    %2919 = vmatpush1.msra.mxu0 0.0
    %2920 = vmatprep.subr.mxu0 0.0
    %2921 = vmatpush1.msra.mxu0 0.0
    %2922 = vmatprep.subr.mxu0 0.0
    %2923 = vmatpush1.msra.mxu0 0.0
    %2924 = vmatprep.subr.mxu0 0.0
    %2925 = vmatpush1.msra.mxu0 0.0
    %2926 = vmatprep.subr.mxu0 0.0
    %2927 = vmatpush1.msra.mxu0 0.0
    %2928 = vmatprep.subr.mxu0 0.0
    %2929 = vmatpush1.msra.mxu0 0.0
    %2930 = vmatprep.subr.mxu0 0.0
    %2931 = vmatpush1.msra.mxu0 0.0
    %2932 = vmatprep.subr.mxu0 0.0
    %2933 = vmatpush1.msra.mxu0 0.0
    %2934 = vmatprep.subr.mxu0 0.0
    %2935 = vmatpush1.msra.mxu0 0.0
    %2936 = vmatprep.subr.mxu0 0.0
    %2937 = vmatpush1.msra.mxu0 0.0
    %2938 = vmatprep.subr.mxu0 0.0
    %2939 = vmatpush1.msra.mxu0 0.0
    %2940 = vmatprep.subr.mxu0 0.0
    %2941 = vmatpush1.msra.mxu0 0.0
    %2942 = vmatprep.subr.mxu0 0.0
    %2943 = vmatpush1.msra.mxu0 0.0
    %2944 = vmatprep.subr.mxu0 0.0
    %2945 = vmatpush1.msra.mxu0 0.0
    %2946 = vmatprep.subr.mxu0 0.0
    %2947 = vmatpush1.msra.mxu0 0.0
    %2948 = vmatprep.subr.mxu0 0.0
    %2949 = vmatpush1.msra.mxu0 0.0
    %2950 = vmatprep.subr.mxu0 0.0
    %2951 = vmatpush1.msra.mxu0 0.0
    %2952 = vmatprep.subr.mxu0 0.0
    %2953 = vmatpush1.msra.mxu0 0.0
    %2954 = vmatprep.subr.mxu0 0.0
    %2955 = vmatpush1.msra.mxu0 0.0
    %2956 = vmatprep.subr.mxu0 0.0
    %2957 = vmatpush1.msra.mxu0 0.0
    %2958 = vmatprep.subr.mxu0 0.0
    %2959 = vmatpush1.msra.mxu0 0.0
    %2960 = vmatprep.subr.mxu0 0.0
    %2961 = vmatpush1.msra.mxu0 0.0
    %2962 = vmatprep.subr.mxu0 0.0
    %2963 = vmatpush1.msra.mxu0 0.0
    %2964 = vmatprep.subr.mxu0 0.0
    %2965 = vmatpush1.msra.mxu0 0.0
    %2966 = vmatprep.subr.mxu0 0.0
    %2967 = vmatpush1.msra.mxu0 0.0
    %2968 = vmatprep.subr.mxu0 0.0
    %2969 = vmatpush1.msra.mxu0 0.0
    %2970 = vmatprep.subr.mxu0 0.0
    %2971 = vmatpush1.msra.mxu0 0.0
    %2972 = vmatprep.subr.mxu0 0.0
    %2973 = vmatpush1.msra.mxu0 0.0
    %2974 = vmatprep.subr.mxu0 0.0
    %2975 = vmatpush1.msra.mxu0 0.0
    %2976 = vmatprep.mubr.f32.mxu0 0.0
    %v2977 = vand.u32 %v2522, 4294901760
    %2978 = vmatmul.mubr.f32.gmra.mrb[0].mxu0 %v2977
    %v2979 = vpop.f32.mrb[0].mxu0
    %v2980 = vadd.f32 %v2907, %v2979
    %v2981 = vpop.f32.mrb[0].mxu0
    %2982 = vdwg.mxu0
    %v2983 = vsel %vm1599, %v1598, 0
    %2985 = vmatprep.subr.mxu0 0.0
    %v2986 = vand.u32 %v78, 4294901760
    %2987 = vmatpush1.msra.mxu0 %v2986
    %2988 = vmatprep.subr.mxu0 0.0
    %v2989 = vand.u32 %v79, 4294901760
    %2990 = vmatpush1.msra.mxu0 %v2989
    %2991 = vmatprep.subr.mxu0 0.0
    %2992 = vmatpush1.msra.mxu0 0.0
    %2993 = vmatprep.subr.mxu0 0.0
    %2994 = vmatpush1.msra.mxu0 0.0
    %2995 = vmatprep.subr.mxu0 0.0
    %2996 = vmatpush1.msra.mxu0 0.0
    %2997 = vmatprep.subr.mxu0 0.0
    %2998 = vmatpush1.msra.mxu0 0.0
    %2999 = vmatprep.subr.mxu0 0.0
    %3000 = vmatpush1.msra.mxu0 0.0
    %3001 = vmatprep.subr.mxu0 0.0
    %3002 = vmatpush1.msra.mxu0 0.0
    %3003 = vmatprep.subr.mxu0 0.0
    %3004 = vmatpush1.msra.mxu0 0.0
    %3005 = vmatprep.subr.mxu0 0.0
    %3006 = vmatpush1.msra.mxu0 0.0
    %3007 = vmatprep.subr.mxu0 0.0
    %3008 = vmatpush1.msra.mxu0 0.0
    %3009 = vmatprep.subr.mxu0 0.0
    %3010 = vmatpush1.msra.mxu0 0.0
    %3011 = vmatprep.subr.mxu0 0.0
    %3012 = vmatpush1.msra.mxu0 0.0
    %3013 = vmatprep.subr.mxu0 0.0
    %3014 = vmatpush1.msra.mxu0 0.0
    %3015 = vmatprep.subr.mxu0 0.0
    %3016 = vmatpush1.msra.mxu0 0.0
    %3017 = vmatprep.subr.mxu0 0.0
    %3018 = vmatpush1.msra.mxu0 0.0
    %3019 = vmatprep.subr.mxu0 0.0
    %3020 = vmatpush1.msra.mxu0 0.0
    %3021 = vmatprep.subr.mxu0 0.0
    %3022 = vmatpush1.msra.mxu0 0.0
    %3023 = vmatprep.subr.mxu0 0.0
    %3024 = vmatpush1.msra.mxu0 0.0
    %3025 = vmatprep.subr.mxu0 0.0
    %3026 = vmatpush1.msra.mxu0 0.0
    %3027 = vmatprep.subr.mxu0 0.0
    %3028 = vmatpush1.msra.mxu0 0.0
    %3029 = vmatprep.subr.mxu0 0.0
    %3030 = vmatpush1.msra.mxu0 0.0
    %3031 = vmatprep.subr.mxu0 0.0
    %3032 = vmatpush1.msra.mxu0 0.0
    %3033 = vmatprep.subr.mxu0 0.0
    %3034 = vmatpush1.msra.mxu0 0.0
    %3035 = vmatprep.subr.mxu0 0.0
    %3036 = vmatpush1.msra.mxu0 0.0
    %3037 = vmatprep.subr.mxu0 0.0
    %3038 = vmatpush1.msra.mxu0 0.0
    %3039 = vmatprep.subr.mxu0 0.0
    %3040 = vmatpush1.msra.mxu0 0.0
    %3041 = vmatprep.subr.mxu0 0.0
    %3042 = vmatpush1.msra.mxu0 0.0
    %3043 = vmatprep.subr.mxu0 0.0
    %3044 = vmatpush1.msra.mxu0 0.0
    %3045 = vmatprep.subr.mxu0 0.0
    %3046 = vmatpush1.msra.mxu0 0.0
    %3047 = vmatprep.subr.mxu0 0.0
    %3048 = vmatpush1.msra.mxu0 0.0
    %3049 = vmatprep.subr.mxu0 0.0
    %3050 = vmatpush1.msra.mxu0 0.0
    %3051 = vmatprep.mubr.f32.mxu0 0.0
    %v3052 = vand.u32 %v2983, 4294901760
    %v3053 = vsub.f32 %v2983, %v3052
    %v3054 = vand.u32 %v3053, 4294901760
    %v3055 = vsub.f32 %v3053, %v3054
    %v3056 = vand.u32 %v3055, 4294901760
    %3057 = vmatmul.mubr.f32.gmra.mrb[0].mxu0 %v3056
    %v3058 = vpop.f32.mrb[0].mxu0
    %v3059 = vadd.f32 0.0, %v3058
    %v3060 = vpop.f32.mrb[0].mxu0
    %3061 = vdwg.mxu0
    %3062 = vmatprep.subr.mxu0 0.0
    %v3063 = vand.u32 %v78, 4294901760
    %v3064 = vsub.f32 %v78, %v3063
    %v3065 = vand.u32 %v3064, 4294901760
    %v3066 = vsub.f32 %v3064, %v3065
    %v3067 = vand.u32 %v3066, 4294901760
    %3068 = vmatpush1.msra.mxu0 %v3067
    %3069 = vmatprep.subr.mxu0 0.0
    %v3070 = vand.u32 %v79, 4294901760
    %v3071 = vsub.f32 %v79, %v3070
    %v3072 = vand.u32 %v3071, 4294901760
    %v3073 = vsub.f32 %v3071, %v3072
    %v3074 = vand.u32 %v3073, 4294901760
    %3075 = vmatpush1.msra.mxu0 %v3074
    %3076 = vmatprep.subr.mxu0 0.0
    %3077 = vmatpush1.msra.mxu0 0.0
    %3078 = vmatprep.subr.mxu0 0.0
    %3079 = vmatpush1.msra.mxu0 0.0
    %3080 = vmatprep.subr.mxu0 0.0
    %3081 = vmatpush1.msra.mxu0 0.0
    %3082 = vmatprep.subr.mxu0 0.0
    %3083 = vmatpush1.msra.mxu0 0.0
    %3084 = vmatprep.subr.mxu0 0.0
    %3085 = vmatpush1.msra.mxu0 0.0
    %3086 = vmatprep.subr.mxu0 0.0
    %3087 = vmatpush1.msra.mxu0 0.0
    %3088 = vmatprep.subr.mxu0 0.0
    %3089 = vmatpush1.msra.mxu0 0.0
    %3090 = vmatprep.subr.mxu0 0.0
    %3091 = vmatpush1.msra.mxu0 0.0
    %3092 = vmatprep.subr.mxu0 0.0
    %3093 = vmatpush1.msra.mxu0 0.0
    %3094 = vmatprep.subr.mxu0 0.0
    %3095 = vmatpush1.msra.mxu0 0.0
    %3096 = vmatprep.subr.mxu0 0.0
    %3097 = vmatpush1.msra.mxu0 0.0
    %3098 = vmatprep.subr.mxu0 0.0
    %3099 = vmatpush1.msra.mxu0 0.0
    %3100 = vmatprep.subr.mxu0 0.0
    %3101 = vmatpush1.msra.mxu0 0.0
    %3102 = vmatprep.subr.mxu0 0.0
    %3103 = vmatpush1.msra.mxu0 0.0
    %3104 = vmatprep.subr.mxu0 0.0
    %3105 = vmatpush1.msra.mxu0 0.0
    %3106 = vmatprep.subr.mxu0 0.0
    %3107 = vmatpush1.msra.mxu0 0.0
    %3108 = vmatprep.subr.mxu0 0.0
    %3109 = vmatpush1.msra.mxu0 0.0
    %3110 = vmatprep.subr.mxu0 0.0
    %3111 = vmatpush1.msra.mxu0 0.0
    %3112 = vmatprep.subr.mxu0 0.0
    %3113 = vmatpush1.msra.mxu0 0.0
    %3114 = vmatprep.subr.mxu0 0.0
    %3115 = vmatpush1.msra.mxu0 0.0
    %3116 = vmatprep.subr.mxu0 0.0
    %3117 = vmatpush1.msra.mxu0 0.0
    %3118 = vmatprep.subr.mxu0 0.0
    %3119 = vmatpush1.msra.mxu0 0.0
    %3120 = vmatprep.subr.mxu0 0.0
    %3121 = vmatpush1.msra.mxu0 0.0
    %3122 = vmatprep.subr.mxu0 0.0
    %3123 = vmatpush1.msra.mxu0 0.0
    %3124 = vmatprep.subr.mxu0 0.0
    %3125 = vmatpush1.msra.mxu0 0.0
    %3126 = vmatprep.subr.mxu0 0.0
    %3127 = vmatpush1.msra.mxu0 0.0
    %3128 = vmatprep.subr.mxu0 0.0
    %3129 = vmatpush1.msra.mxu0 0.0
    %3130 = vmatprep.subr.mxu0 0.0
    %3131 = vmatpush1.msra.mxu0 0.0
    %3132 = vmatprep.subr.mxu0 0.0
    %3133 = vmatpush1.msra.mxu0 0.0
    %3134 = vmatprep.subr.mxu0 0.0
    %3135 = vmatpush1.msra.mxu0 0.0
    %3136 = vmatprep.mubr.f32.mxu0 0.0
    %v3137 = vand.u32 %v2983, 4294901760
    %3138 = vmatmul.mubr.f32.gmra.mrb[0].mxu0 %v3137
    %v3139 = vpop.f32.mrb[0].mxu0
    %v3140 = vadd.f32 %v3059, %v3139
    %v3141 = vpop.f32.mrb[0].mxu0
    %3142 = vdwg.mxu0
    %3143 = vmatprep.subr.mxu0 0.0
    %v3144 = vand.u32 %v78, 4294901760
    %v3145 = vsub.f32 %v78, %v3144
    %3146 = vmatpush1.msra.mxu0 %v3145
    %3147 = vmatprep.subr.mxu0 0.0
    %v3148 = vand.u32 %v79, 4294901760
    %v3149 = vsub.f32 %v79, %v3148
    %3150 = vmatpush1.msra.mxu0 %v3149
    %3151 = vmatprep.subr.mxu0 0.0
    %3152 = vmatpush1.msra.mxu0 0.0
    %3153 = vmatprep.subr.mxu0 0.0
    %3154 = vmatpush1.msra.mxu0 0.0
    %3155 = vmatprep.subr.mxu0 0.0
    %3156 = vmatpush1.msra.mxu0 0.0
    %3157 = vmatprep.subr.mxu0 0.0
    %3158 = vmatpush1.msra.mxu0 0.0
    %3159 = vmatprep.subr.mxu0 0.0
    %3160 = vmatpush1.msra.mxu0 0.0
    %3161 = vmatprep.subr.mxu0 0.0
    %3162 = vmatpush1.msra.mxu0 0.0
    %3163 = vmatprep.subr.mxu0 0.0
    %3164 = vmatpush1.msra.mxu0 0.0
    %3165 = vmatprep.subr.mxu0 0.0
    %3166 = vmatpush1.msra.mxu0 0.0
    %3167 = vmatprep.subr.mxu0 0.0
    %3168 = vmatpush1.msra.mxu0 0.0
    %3169 = vmatprep.subr.mxu0 0.0
    %3170 = vmatpush1.msra.mxu0 0.0
    %3171 = vmatprep.subr.mxu0 0.0
    %3172 = vmatpush1.msra.mxu0 0.0
    %3173 = vmatprep.subr.mxu0 0.0
    %3174 = vmatpush1.msra.mxu0 0.0
    %3175 = vmatprep.subr.mxu0 0.0
    %3176 = vmatpush1.msra.mxu0 0.0
    %3177 = vmatprep.subr.mxu0 0.0
    %3178 = vmatpush1.msra.mxu0 0.0
    %3179 = vmatprep.subr.mxu0 0.0
    %3180 = vmatpush1.msra.mxu0 0.0
    %3181 = vmatprep.subr.mxu0 0.0
    %3182 = vmatpush1.msra.mxu0 0.0
    %3183 = vmatprep.subr.mxu0 0.0
    %3184 = vmatpush1.msra.mxu0 0.0
    %3185 = vmatprep.subr.mxu0 0.0
    %3186 = vmatpush1.msra.mxu0 0.0
    %3187 = vmatprep.subr.mxu0 0.0
    %3188 = vmatpush1.msra.mxu0 0.0
    %3189 = vmatprep.subr.mxu0 0.0
    %3190 = vmatpush1.msra.mxu0 0.0
    %3191 = vmatprep.subr.mxu0 0.0
    %3192 = vmatpush1.msra.mxu0 0.0
    %3193 = vmatprep.subr.mxu0 0.0
    %3194 = vmatpush1.msra.mxu0 0.0
    %3195 = vmatprep.subr.mxu0 0.0
    %3196 = vmatpush1.msra.mxu0 0.0
    %3197 = vmatprep.subr.mxu0 0.0
    %3198 = vmatpush1.msra.mxu0 0.0
    %3199 = vmatprep.subr.mxu0 0.0
    %3200 = vmatpush1.msra.mxu0 0.0
    %3201 = vmatprep.subr.mxu0 0.0
    %3202 = vmatpush1.msra.mxu0 0.0
    %3203 = vmatprep.subr.mxu0 0.0
    %3204 = vmatpush1.msra.mxu0 0.0
    %3205 = vmatprep.subr.mxu0 0.0
    %3206 = vmatpush1.msra.mxu0 0.0
    %3207 = vmatprep.subr.mxu0 0.0
    %3208 = vmatpush1.msra.mxu0 0.0
    %3209 = vmatprep.subr.mxu0 0.0
    %3210 = vmatpush1.msra.mxu0 0.0
    %3211 = vmatprep.mubr.f32.mxu0 0.0
    %v3212 = vand.u32 %v2983, 4294901760
    %v3213 = vsub.f32 %v2983, %v3212
    %3214 = vmatmul.mubr.f32.gmra.mrb[0].mxu0 %v3213
    %v3215 = vpop.f32.mrb[0].mxu0
    %v3216 = vadd.f32 %v3140, %v3215
    %v3217 = vpop.f32.mrb[0].mxu0
    %3218 = vdwg.mxu0
    %3219 = vmatprep.subr.mxu0 0.0
    %v3220 = vand.u32 %v78, 4294901760
    %3221 = vmatpush1.msra.mxu0 %v3220
    %3222 = vmatprep.subr.mxu0 0.0
    %v3223 = vand.u32 %v79, 4294901760
    %3224 = vmatpush1.msra.mxu0 %v3223
    %3225 = vmatprep.subr.mxu0 0.0
    %3226 = vmatpush1.msra.mxu0 0.0
    %3227 = vmatprep.subr.mxu0 0.0
    %3228 = vmatpush1.msra.mxu0 0.0
    %3229 = vmatprep.subr.mxu0 0.0
    %3230 = vmatpush1.msra.mxu0 0.0
    %3231 = vmatprep.subr.mxu0 0.0
    %3232 = vmatpush1.msra.mxu0 0.0
    %3233 = vmatprep.subr.mxu0 0.0
    %3234 = vmatpush1.msra.mxu0 0.0
    %3235 = vmatprep.subr.mxu0 0.0
    %3236 = vmatpush1.msra.mxu0 0.0
    %3237 = vmatprep.subr.mxu0 0.0
    %3238 = vmatpush1.msra.mxu0 0.0
    %3239 = vmatprep.subr.mxu0 0.0
    %3240 = vmatpush1.msra.mxu0 0.0
    %3241 = vmatprep.subr.mxu0 0.0
    %3242 = vmatpush1.msra.mxu0 0.0
    %3243 = vmatprep.subr.mxu0 0.0
    %3244 = vmatpush1.msra.mxu0 0.0
    %3245 = vmatprep.subr.mxu0 0.0
    %3246 = vmatpush1.msra.mxu0 0.0
    %3247 = vmatprep.subr.mxu0 0.0
    %3248 = vmatpush1.msra.mxu0 0.0
    %3249 = vmatprep.subr.mxu0 0.0
    %3250 = vmatpush1.msra.mxu0 0.0
    %3251 = vmatprep.subr.mxu0 0.0
    %3252 = vmatpush1.msra.mxu0 0.0
    %3253 = vmatprep.subr.mxu0 0.0
    %3254 = vmatpush1.msra.mxu0 0.0
    %3255 = vmatprep.subr.mxu0 0.0
    %3256 = vmatpush1.msra.mxu0 0.0
    %3257 = vmatprep.subr.mxu0 0.0
    %3258 = vmatpush1.msra.mxu0 0.0
    %3259 = vmatprep.subr.mxu0 0.0
    %3260 = vmatpush1.msra.mxu0 0.0
    %3261 = vmatprep.subr.mxu0 0.0
    %3262 = vmatpush1.msra.mxu0 0.0
    %3263 = vmatprep.subr.mxu0 0.0
    %3264 = vmatpush1.msra.mxu0 0.0
    %3265 = vmatprep.subr.mxu0 0.0
    %3266 = vmatpush1.msra.mxu0 0.0
    %3267 = vmatprep.subr.mxu0 0.0
    %3268 = vmatpush1.msra.mxu0 0.0
    %3269 = vmatprep.subr.mxu0 0.0
    %3270 = vmatpush1.msra.mxu0 0.0
    %3271 = vmatprep.subr.mxu0 0.0
    %3272 = vmatpush1.msra.mxu0 0.0
    %3273 = vmatprep.subr.mxu0 0.0
    %3274 = vmatpush1.msra.mxu0 0.0
    %3275 = vmatprep.subr.mxu0 0.0
    %3276 = vmatpush1.msra.mxu0 0.0
    %3277 = vmatprep.subr.mxu0 0.0
    %3278 = vmatpush1.msra.mxu0 0.0
    %3279 = vmatprep.subr.mxu0 0.0
    %3280 = vmatpush1.msra.mxu0 0.0
    %3281 = vmatprep.subr.mxu0 0.0
    %3282 = vmatpush1.msra.mxu0 0.0
    %3283 = vmatprep.subr.mxu0 0.0
    %3284 = vmatpush1.msra.mxu0 0.0
    %3285 = vmatprep.mubr.f32.mxu0 0.0
    %v3286 = vand.u32 %v2983, 4294901760
    %v3287 = vsub.f32 %v2983, %v3286
    %v3288 = vand.u32 %v3287, 4294901760
    %3289 = vmatmul.mubr.f32.gmra.mrb[0].mxu0 %v3288
    %v3290 = vpop.f32.mrb[0].mxu0
    %v3291 = vadd.f32 %v3216, %v3290
    %v3292 = vpop.f32.mrb[0].mxu0
    %3293 = vdwg.mxu0
    %3294 = vmatprep.subr.mxu0 0.0
    %v3295 = vand.u32 %v78, 4294901760
    %v3296 = vsub.f32 %v78, %v3295
    %v3297 = vand.u32 %v3296, 4294901760
    %3298 = vmatpush1.msra.mxu0 %v3297
    %3299 = vmatprep.subr.mxu0 0.0
    %v3300 = vand.u32 %v79, 4294901760
    %v3301 = vsub.f32 %v79, %v3300
    %v3302 = vand.u32 %v3301, 4294901760
    %3303 = vmatpush1.msra.mxu0 %v3302
    %3304 = vmatprep.subr.mxu0 0.0
    %3305 = vmatpush1.msra.mxu0 0.0
    %3306 = vmatprep.subr.mxu0 0.0
    %3307 = vmatpush1.msra.mxu0 0.0
    %3308 = vmatprep.subr.mxu0 0.0
    %3309 = vmatpush1.msra.mxu0 0.0
    %3310 = vmatprep.subr.mxu0 0.0
    %3311 = vmatpush1.msra.mxu0 0.0
    %3312 = vmatprep.subr.mxu0 0.0
    %3313 = vmatpush1.msra.mxu0 0.0
    %3314 = vmatprep.subr.mxu0 0.0
    %3315 = vmatpush1.msra.mxu0 0.0
    %3316 = vmatprep.subr.mxu0 0.0
    %3317 = vmatpush1.msra.mxu0 0.0
    %3318 = vmatprep.subr.mxu0 0.0
    %3319 = vmatpush1.msra.mxu0 0.0
    %3320 = vmatprep.subr.mxu0 0.0
    %3321 = vmatpush1.msra.mxu0 0.0
    %3322 = vmatprep.subr.mxu0 0.0
    %3323 = vmatpush1.msra.mxu0 0.0
    %3324 = vmatprep.subr.mxu0 0.0
    %3325 = vmatpush1.msra.mxu0 0.0
    %3326 = vmatprep.subr.mxu0 0.0
    %3327 = vmatpush1.msra.mxu0 0.0
    %3328 = vmatprep.subr.mxu0 0.0
    %3329 = vmatpush1.msra.mxu0 0.0
    %3330 = vmatprep.subr.mxu0 0.0
    %3331 = vmatpush1.msra.mxu0 0.0
    %3332 = vmatprep.subr.mxu0 0.0
    %3333 = vmatpush1.msra.mxu0 0.0
    %3334 = vmatprep.subr.mxu0 0.0
    %3335 = vmatpush1.msra.mxu0 0.0
    %3336 = vmatprep.subr.mxu0 0.0
    %3337 = vmatpush1.msra.mxu0 0.0
    %3338 = vmatprep.subr.mxu0 0.0
    %3339 = vmatpush1.msra.mxu0 0.0
    %3340 = vmatprep.subr.mxu0 0.0
    %3341 = vmatpush1.msra.mxu0 0.0
    %3342 = vmatprep.subr.mxu0 0.0
    %3343 = vmatpush1.msra.mxu0 0.0
    %3344 = vmatprep.subr.mxu0 0.0
    %3345 = vmatpush1.msra.mxu0 0.0
    %3346 = vmatprep.subr.mxu0 0.0
    %3347 = vmatpush1.msra.mxu0 0.0
    %3348 = vmatprep.subr.mxu0 0.0
    %3349 = vmatpush1.msra.mxu0 0.0
    %3350 = vmatprep.subr.mxu0 0.0
    %3351 = vmatpush1.msra.mxu0 0.0
    %3352 = vmatprep.subr.mxu0 0.0
    %3353 = vmatpush1.msra.mxu0 0.0
    %3354 = vmatprep.subr.mxu0 0.0
    %3355 = vmatpush1.msra.mxu0 0.0
    %3356 = vmatprep.subr.mxu0 0.0
    %3357 = vmatpush1.msra.mxu0 0.0
    %3358 = vmatprep.subr.mxu0 0.0
    %3359 = vmatpush1.msra.mxu0 0.0
    %3360 = vmatprep.subr.mxu0 0.0
    %3361 = vmatpush1.msra.mxu0 0.0
    %3362 = vmatprep.subr.mxu0 0.0
    %3363 = vmatpush1.msra.mxu0 0.0
    %3364 = vmatprep.mubr.f32.mxu0 0.0
    %v3365 = vand.u32 %v2983, 4294901760
    %3366 = vmatmul.mubr.f32.gmra.mrb[0].mxu0 %v3365
    %v3367 = vpop.f32.mrb[0].mxu0
    %v3368 = vadd.f32 %v3291, %v3367
    %v3369 = vpop.f32.mrb[0].mxu0
    %3370 = vdwg.mxu0
    %3371 = vmatprep.subr.mxu0 0.0
    %v3372 = vand.u32 %v78, 4294901760
    %3373 = vmatpush1.msra.mxu0 %v3372
    %3374 = vmatprep.subr.mxu0 0.0
    %v3375 = vand.u32 %v79, 4294901760
    %3376 = vmatpush1.msra.mxu0 %v3375
    %3377 = vmatprep.subr.mxu0 0.0
    %3378 = vmatpush1.msra.mxu0 0.0
    %3379 = vmatprep.subr.mxu0 0.0
    %3380 = vmatpush1.msra.mxu0 0.0
    %3381 = vmatprep.subr.mxu0 0.0
    %3382 = vmatpush1.msra.mxu0 0.0
    %3383 = vmatprep.subr.mxu0 0.0
    %3384 = vmatpush1.msra.mxu0 0.0
    %3385 = vmatprep.subr.mxu0 0.0
    %3386 = vmatpush1.msra.mxu0 0.0
    %3387 = vmatprep.subr.mxu0 0.0
    %3388 = vmatpush1.msra.mxu0 0.0
    %3389 = vmatprep.subr.mxu0 0.0
    %3390 = vmatpush1.msra.mxu0 0.0
    %3391 = vmatprep.subr.mxu0 0.0
    %3392 = vmatpush1.msra.mxu0 0.0
    %3393 = vmatprep.subr.mxu0 0.0
    %3394 = vmatpush1.msra.mxu0 0.0
    %3395 = vmatprep.subr.mxu0 0.0
    %3396 = vmatpush1.msra.mxu0 0.0
    %3397 = vmatprep.subr.mxu0 0.0
    %3398 = vmatpush1.msra.mxu0 0.0
    %3399 = vmatprep.subr.mxu0 0.0
    %3400 = vmatpush1.msra.mxu0 0.0
    %3401 = vmatprep.subr.mxu0 0.0
    %3402 = vmatpush1.msra.mxu0 0.0
    %3403 = vmatprep.subr.mxu0 0.0
    %3404 = vmatpush1.msra.mxu0 0.0
    %3405 = vmatprep.subr.mxu0 0.0
    %3406 = vmatpush1.msra.mxu0 0.0
    %3407 = vmatprep.subr.mxu0 0.0
    %3408 = vmatpush1.msra.mxu0 0.0
    %3409 = vmatprep.subr.mxu0 0.0
    %3410 = vmatpush1.msra.mxu0 0.0
    %3411 = vmatprep.subr.mxu0 0.0
    %3412 = vmatpush1.msra.mxu0 0.0
    %3413 = vmatprep.subr.mxu0 0.0
    %3414 = vmatpush1.msra.mxu0 0.0
    %3415 = vmatprep.subr.mxu0 0.0
    %3416 = vmatpush1.msra.mxu0 0.0
    %3417 = vmatprep.subr.mxu0 0.0
    %3418 = vmatpush1.msra.mxu0 0.0
    %3419 = vmatprep.subr.mxu0 0.0
    %3420 = vmatpush1.msra.mxu0 0.0
    %3421 = vmatprep.subr.mxu0 0.0
    %3422 = vmatpush1.msra.mxu0 0.0
    %3423 = vmatprep.subr.mxu0 0.0
    %3424 = vmatpush1.msra.mxu0 0.0
    %3425 = vmatprep.subr.mxu0 0.0
    %3426 = vmatpush1.msra.mxu0 0.0
    %3427 = vmatprep.subr.mxu0 0.0
    %3428 = vmatpush1.msra.mxu0 0.0
    %3429 = vmatprep.subr.mxu0 0.0
    %3430 = vmatpush1.msra.mxu0 0.0
    %3431 = vmatprep.subr.mxu0 0.0
    %3432 = vmatpush1.msra.mxu0 0.0
    %3433 = vmatprep.subr.mxu0 0.0
    %3434 = vmatpush1.msra.mxu0 0.0
    %3435 = vmatprep.subr.mxu0 0.0
    %3436 = vmatpush1.msra.mxu0 0.0
    %3437 = vmatprep.mubr.f32.mxu0 0.0
    %v3438 = vand.u32 %v2983, 4294901760
    %3439 = vmatmul.mubr.f32.gmra.mrb[0].mxu0 %v3438
    %v3440 = vpop.f32.mrb[0].mxu0
    %v3441 = vadd.f32 %v3368, %v3440
    %v3442 = vpop.f32.mrb[0].mxu0
    %3443 = vdwg.mxu0
    %v3448 = vrot.slane %v2519, 7
    %v3449 = vsel %vm1554, %v3448, %v2058
    %v3450 = vrot.slane %v2980, 6
    %v3451 = vsel %vm1556, %v3450, %v3449
    %v3452 = vrot.slane %v3441, 5
    %v3453 = vsel %vm1558, %v3452, %v3451
    %vm3455 = vcmask 257024
    %3456 = vst.msk [vmem:[#allocation9] sm:$0xf] %vm3455, %v3453
    %3457 = vst.msk [vmem:[#allocation10] sm:$0xf] %vm1562, %v1573
    // Predicated region
    $region42: #{tpu_custom_call.1} parent=1 // pred_check
      _
    $region43: #{tpu_custom_call.1} parent=1 // pred_check_branch
      %3459 = sbr.rel (0) target = $region45
    $region44: #{tpu_custom_call.1} parent=1 // pred_region
      %s3461 = ssub.s32 64, 64
      %3462 = vsyncadd [#allocation5], %s3461
      %s3464 = sshll.u32 [#allocation9], 4
      %s3465 = int_to_ptr.vmem [resolvable:$true] %s3464
      %3467 = dma.vmem_to_hbm [thread:$0]  %s3465, 64, %s7, [#allocation5]
    $region45: #{tpu_custom_call.1} parent=1 // pred_fallthru
      _
    // Predicated region
    $region46: #{tpu_custom_call.1} parent=1 // pred_check
      _
    $region47: #{tpu_custom_call.1} parent=1 // pred_check_branch
      %3469 = sbr.rel (0) target = $region49
    $region48: #{tpu_custom_call.1} parent=1 // pred_region
      %s3471 = ssub.s32 64, 64
      %3472 = vsyncadd [#allocation11], %s3471
      %s3474 = sshll.u32 [#allocation10], 4
      %s3475 = int_to_ptr.vmem [resolvable:$true] %s3474
      %3477 = dma.vmem_to_hbm [thread:$0]  %s3475, 64, %s8, [#allocation11]
    $region49: #{tpu_custom_call.1} parent=1 // pred_fallthru
      _
    // Predicated region
    $region50: #{tpu_custom_call.1} parent=1 // pred_check
      _
    $region51: #{tpu_custom_call.1} parent=1 // pred_check_branch
      %3479 = sbr.rel (0) target = $region53
    $region52: #{tpu_custom_call.1} parent=1 // pred_region
      %3480 = dma.done [#allocation5], 64
    $region53: #{tpu_custom_call.1} parent=1 // pred_fallthru
      _
    // Predicated region
    $region54: #{tpu_custom_call.1} parent=1 // pred_check
      _
    $region55: #{tpu_custom_call.1} parent=1 // pred_check_branch
      %3482 = sbr.rel (0) target = $region57
    $region56: #{tpu_custom_call.1} parent=1 // pred_region
      %3483 = dma.done [#allocation11], 64
    $region57: #{tpu_custom_call.1} parent=1 // pred_fallthru
      _
    %3484 = vsyncpa [#allocation4], 1
    %3485 = vsyncpa [#allocation7], 1
    %3486 = vsyncpa [#allocation5], 1
    %3487 = vsyncpa [#allocation11], 1

</llo_original>
